<compile_context>
chip_gen: v7x
topology: tpu7x:2x2x1
jax: 0.10.0
libtpu: 0.0.40
codegen_flags: <defaults>
</compile_context>

<pallas_src>
import functools
import math

import jax
import jax.numpy as jnp
from jax import lax
from jax.experimental import pallas as pl
from jax.experimental.pallas import tpu as pltpu


def _layer_norm(x, gamma, beta, eps):
    u = jnp.mean(x, axis=-1, keepdims=True)
    xc = x - u
    s = jnp.mean(xc * xc, axis=-1, keepdims=True)
    return xc * lax.rsqrt(s + eps) * gamma + beta


def _gelu_tanh(x):
    c = math.sqrt(2.0 / math.pi)
    return 0.5 * x * (1.0 + jnp.tanh(c * (x + 0.044715 * x * x * x)))


def _vmem_limit_bytes():
    """Per-generation VMEM budget: capacity minus headroom, capped at 100 MiB."""
    cap = 128 * 1024 * 1024
    try:
        info = pltpu.get_tpu_info()
        cap = int(getattr(info, "vmem_capacity_bytes", cap))
    except Exception:
        pass
    return max(32 * 1024 * 1024, min(cap - 16 * 1024 * 1024, 100 * 1024 * 1024))


def _gelu_dtype():
    """bf16 VALU/EUP exists on v6e/v7x; keep f32 elementwise on v5e (and unknown)."""
    try:
        kind = jax.devices()[0].device_kind.lower()
    except Exception:
        return jnp.float32
    if "v6" in kind or "v7" in kind:
        return jnp.bfloat16
    return jnp.float32


def _bert_layer_kernel(x_ref, mask_ref, wqkv_ref, bqkv_ref,
                       wo_ref, bo_ref, g1_ref, b1_ref,
                       wi_ref, bi_ref, wo2_ref, bo2_ref, g2_ref, b2_ref,
                       out_ref, ctx_ref, *, num_heads, head_size, ln_eps,
                       ffn_chunk, gelu_dtype):
    # Per grid point (one batch element):
    #   x_ref    : (1, S, H)              mask_ref : (1, 1, S) f32
    #   wqkv_ref : (H, 3H) bf16           bqkv_ref : (1, 3H) f32 (q part scaled)
    #   wo_ref   : (H, H) bf16            wi_ref   : (H, I) bf16
    #   wo2_ref  : (I, H) bf16            biases / LN params : (1, *) f32
    #   out_ref  : (1, S, H)              ctx_ref  : (S, H) f32 VMEM scratch
    H = num_heads * head_size
    S = x_ref.shape[1]

    x_in = x_ref[0]                                    # (S, H), caller dtype
    x_f32 = x_in.astype(jnp.float32)                   # residual path
    x_bf = x_in.astype(jnp.bfloat16)                   # MXU operand

    # ---- fused QKV projection: one big MXU matmul, f32 accumulation -------
    qkv = (jnp.dot(x_bf, wqkv_ref[...], preferred_element_type=jnp.float32)
           + bqkv_ref[...]).astype(jnp.bfloat16)       # (S, 3H) bf16, cast once

    mask = mask_ref[0]                                 # (1, S), bcast over rows

    # ---- per-head attention (scale already folded into Wq/bq) -------------
    for h in range(num_heads):
        lo = h * head_size
        hi = lo + head_size
        q = qkv[:, lo:hi]                              # (S, Dh) bf16
        k = qkv[:, H + lo:H + hi]                      # (S, Dh) bf16
        v = qkv[:, 2 * H + lo:2 * H + hi]              # (S, Dh) bf16

        # q @ k^T without materializing k.T (contract dim 1 with dim 1).
        scores = lax.dot_general(q, k, (((1,), (1,)), ((), ())),
                                 preferred_element_type=jnp.float32)  # (S, S)
        scores = scores + mask

        m = jnp.max(scores, axis=-1, keepdims=True)
        e = jnp.exp(scores - m)
        probs = e * pl.reciprocal(jnp.sum(e, axis=-1, keepdims=True),
                                  approx=True)
        ctx_ref[:, lo:hi] = jnp.dot(probs.astype(jnp.bfloat16), v,
                                    preferred_element_type=jnp.float32)

    # ---- BertSelfOutput: dense + residual + LayerNorm ----------------------
    attn = jnp.dot(ctx_ref[...].astype(jnp.bfloat16), wo_ref[...],
                   preferred_element_type=jnp.float32) + bo_ref[...]
    attn = _layer_norm(attn + x_f32, g1_ref[...], b1_ref[...], ln_eps)  # (S,H) f32

    # ---- BertIntermediate + BertOutput, chunked over S rows ----------------
    def ffn_block(a):
        # a: (chunk, H) f32
        inter = jnp.dot(a.astype(jnp.bfloat16), wi_ref[...],
                        preferred_element_type=jnp.float32) + bi_ref[...]
        inter = _gelu_tanh(inter.astype(gelu_dtype)).astype(jnp.bfloat16)
        o = jnp.dot(inter, wo2_ref[...],
                    preferred_element_type=jnp.float32) + bo2_ref[...]
        return _layer_norm(o + a, g2_ref[...], b2_ref[...],
                           ln_eps).astype(out_ref.dtype)

    num_chunks = S // ffn_chunk
    if num_chunks == 1:
        out_ref[0] = ffn_block(attn)
    else:
        # Stage attn in the scratch slab (ctx_ref is dead now) and stream the
        # FFN in row chunks so the (S, I) intermediate never materializes.
        ctx_ref[...] = attn

        @pl.loop(0, num_chunks)
        def _(c):
            start = pl.multiple_of(c * ffn_chunk, ffn_chunk)
            a = ctx_ref[pl.ds(start, ffn_chunk), :]
            out_ref[0, pl.ds(start, ffn_chunk), :] = ffn_block(a)


def bert_layer(hidden_states, attention_mask, params, *, num_heads, head_size,
               ln_eps=1e-5, ffn_chunk_rows=256):
    """hidden_states: [B, S, H] (f32 or bf16); attention_mask: [B, 1, 1, S] additive."""
    B, S, H = hidden_states.shape
    nH, Dh = num_heads, head_size
    assert H == nH * Dh
    I = params["wi"].shape[0]              # intermediate size
    act_dtype = hidden_states.dtype

    scale = 1.0 / math.sqrt(Dh)

    # nn.Linear stores weight as (out, in); y = x @ W.T + b.  Pre-transpose so
    # the kernel does plain row-major matmuls, fuse Q/K/V into a single (H,3H)
    # operand, and fold 1/sqrt(Dh) into the query weights/bias once.
    wqkv = jnp.concatenate(
        [params["wq"].T * scale, params["wk"].T, params["wv"].T],
        axis=1).astype(jnp.bfloat16)                               # (H, 3H)
    bqkv = jnp.concatenate(
        [params["bq"] * scale, params["bk"], params["bv"]]
    ).reshape(1, 3 * H).astype(jnp.float32)

    wo = params["wo"].T.astype(jnp.bfloat16)       # (H, H)
    wi = params["wi"].T.astype(jnp.bfloat16)       # (H, I)
    wo2 = params["wo2"].T.astype(jnp.bfloat16)     # (I, H)

    bo = params["bo"].reshape(1, H).astype(jnp.float32)
    bi = params["bi"].reshape(1, I).astype(jnp.float32)
    bo2 = params["bo2"].reshape(1, H).astype(jnp.float32)
    g1 = params["ln1_gamma"].reshape(1, H).astype(jnp.float32)
    b1 = params["ln1_beta"].reshape(1, H).astype(jnp.float32)
    g2 = params["ln2_gamma"].reshape(1, H).astype(jnp.float32)
    b2 = params["ln2_beta"].reshape(1, H).astype(jnp.float32)

    mask = attention_mask.reshape(B, 1, S).astype(jnp.float32)

    # FFN row-chunk: largest divisor of S that is <= ffn_chunk_rows.
    ffn_chunk = S
    if S > ffn_chunk_rows:
        for c in range(ffn_chunk_rows, 0, -1):
            if S % c == 0:
                ffn_chunk = c
                break

    kernel = functools.partial(_bert_layer_kernel, num_heads=nH,
                               head_size=Dh, ln_eps=ln_eps,
                               ffn_chunk=ffn_chunk, gelu_dtype=_gelu_dtype())

    def batch_block(shape):
        return pl.BlockSpec(shape, lambda b: (b,) + (0,) * (len(shape) - 1))

    def resident(shape, single_buffer):
        # Constant block index across the grid -> single DMA, stays in VMEM.
        if single_buffer:
            return pl.BlockSpec(shape, lambda b: (0,) * len(shape),
                                pipeline_mode=pl.Buffered(1))
        return pl.BlockSpec(shape, lambda b: (0,) * len(shape))

    # Advisory cost so XLA schedules surrounding layers around this call.
    itemsize = jnp.dtype(act_dtype).itemsize
    flops = int(B * (2 * S * H * (4 * H + 2 * I) + 4 * S * S * H))
    transcendentals = int(B * S * (nH * S + I))
    weight_bytes = int(sum(int(a.size) * jnp.dtype(a.dtype).itemsize
                           for a in (wqkv, bqkv, wo, bo, g1, b1,
                                     wi, bi, wo2, bo2, g2, b2)))
    bytes_accessed = int(2 * B * S * H * itemsize + B * S * 4 + weight_bytes)
    cost = pl.CostEstimate(flops=flops, transcendentals=transcendentals,
                           bytes_accessed=bytes_accessed)

    def call(single_buffer_weights):
        in_specs = [
            batch_block((1, S, H)),                          # x
            batch_block((1, 1, S)),                          # additive mask
            resident((H, 3 * H), single_buffer_weights),     # fused QKV weight
            resident((1, 3 * H), single_buffer_weights),     # fused QKV bias
            resident((H, H), single_buffer_weights),         # self-output weight
            resident((1, H), single_buffer_weights),         # self-output bias
            resident((1, H), single_buffer_weights),         # LN1 gamma
            resident((1, H), single_buffer_weights),         # LN1 beta
            resident((H, I), single_buffer_weights),         # intermediate weight
            resident((1, I), single_buffer_weights),         # intermediate bias
            resident((I, H), single_buffer_weights),         # output weight
            resident((1, H), single_buffer_weights),         # output bias
            resident((1, H), single_buffer_weights),         # LN2 gamma
            resident((1, H), single_buffer_weights),         # LN2 beta
        ]
        return pl.pallas_call(
            kernel,
            out_shape=jax.ShapeDtypeStruct((B, S, H), act_dtype),
            grid=(B,),
            in_specs=in_specs,
            out_specs=batch_block((1, S, H)),                # lane-dense slab
            scratch_shapes=[pltpu.VMEM((S, H), jnp.float32)],
            compiler_params=pltpu.CompilerParams(
                dimension_semantics=("parallel",),
                vmem_limit_bytes=_vmem_limit_bytes()),
            cost_estimate=cost,
        )(hidden_states, mask, wqkv, bqkv, wo, bo, g1, b1,
          wi, bi, wo2, bo2, g2, b2)

    try:
        return call(True)           # single-buffered resident weights
    except Exception:
        return call(False)          # fallback: default double-buffering


def _reference(hidden_states, attention_mask, params, *, num_heads, head_size,
               ln_eps=1e-5):
    """Pure-JAX f32 BertLayer forward (same math as the PyTorch module,
    GELU = tanh approximation, eval-mode dropout)."""
    B, S, H = hidden_states.shape
    nH, Dh = num_heads, head_size

    def lin(x, w, b):
        return x @ w.T + b

    def split_heads(x):
        return x.reshape(B, S, nH, Dh).transpose(0, 2, 1, 3)

    q = split_heads(lin(hidden_states, params["wq"], params["bq"]))
    k = split_heads(lin(hidden_states, params["wk"], params["bk"]))
    v = split_heads(lin(hidden_states, params["wv"], params["bv"]))
    scores = jnp.einsum("bhqd,bhkd->bhqk", q / math.sqrt(Dh), k)
    scores = scores + attention_mask
    probs = jax.nn.softmax(scores, axis=-1)
    ctx = jnp.einsum("bhqk,bhkd->bhqd", probs, v)
    ctx = ctx.transpose(0, 2, 1, 3).reshape(B, S, H)

    attn = _layer_norm(lin(ctx, params["wo"], params["bo"]) + hidden_states,
                       params["ln1_gamma"], params["ln1_beta"], ln_eps)
    inter = _gelu_tanh(lin(attn, params["wi"], params["bi"]))
    out = _layer_norm(lin(inter, params["wo2"], params["bo2"]) + attn,
                      params["ln2_gamma"], params["ln2_beta"], ln_eps)
    return out


if __name__ == "__main__":
    # small config: batch=2, seq=8, hidden=32, heads=4, head_size=8, ffn=128
    B, S, H, nH = 2, 8, 32, 4
    Dh = H // nH
    I = 4 * H

    key = jax.random.PRNGKey(0)
    ks = jax.random.split(key, 18)
    hidden_states = jax.random.normal(ks[0], (B, S, H), dtype=jnp.float32)

    # BERT-style additive mask [B, 1, 1, S]: 0 for attend, -10000 for masked.
    keep = (jax.random.uniform(ks[1], (B, 1, 1, S)) > 0.2).astype(jnp.float32)
    attention_mask = (1.0 - keep) * -10000.0

    def w(k, shape):
        return 0.05 * jax.random.normal(k, shape, dtype=jnp.float32)

    params = {
        "wq": w(ks[2], (H, H)), "bq": w(ks[3], (H,)),
        "wk": w(ks[4], (H, H)), "bk": w(ks[5], (H,)),
        "wv": w(ks[6], (H, H)), "bv": w(ks[7], (H,)),
        "wo": w(ks[8], (H, H)), "bo": w(ks[9], (H,)),
        "ln1_gamma": 1.0 + w(ks[10], (H,)), "ln1_beta": w(ks[11], (H,)),
        "wi": w(ks[12], (I, H)), "bi": w(ks[13], (I,)),
        "wo2": w(ks[14], (H, I)), "bo2": w(ks[15], (H,)),
        "ln2_gamma": 1.0 + w(ks[16], (H,)), "ln2_beta": w(ks[17], (H,)),
    }

    out = bert_layer(hidden_states, attention_mask, params,
                     num_heads=nH, head_size=Dh)
    out = jax.block_until_ready(out)

    ref = _reference(hidden_states, attention_mask, params,
                     num_heads=nH, head_size=Dh)
    assert out.shape == (B, S, H)
    # bf16 MXU operands, bf16 GELU (v6e/v7x) and approx reciprocal -> loosened
    # tolerance vs the f32 reference.
    err = float(jnp.max(jnp.abs(out.astype(jnp.float32) - ref)))
    assert jnp.allclose(out.astype(jnp.float32), ref, atol=5e-2, rtol=5e-2), (
        f"mismatch vs reference (max abs diff {err})")

    print("KERNEL_OK")
</pallas_src>

<mosaic_0001>
module attributes {stable_mosaic.version = 11 : i64} {
  func.func @_bert_layer_kernel(%arg0: i32, %arg1: memref<1x8x32xf32, #tpu.memory_space<vmem>>, %arg2: memref<1x1x8xf32, #tpu.memory_space<vmem>>, %arg3: memref<32x96xbf16, #tpu.memory_space<vmem>>, %arg4: memref<1x96xf32, #tpu.memory_space<vmem>>, %arg5: memref<32x32xbf16, #tpu.memory_space<vmem>>, %arg6: memref<1x32xf32, #tpu.memory_space<vmem>>, %arg7: memref<1x32xf32, #tpu.memory_space<vmem>>, %arg8: memref<1x32xf32, #tpu.memory_space<vmem>>, %arg9: memref<32x128xbf16, #tpu.memory_space<vmem>>, %arg10: memref<1x128xf32, #tpu.memory_space<vmem>>, %arg11: memref<128x32xbf16, #tpu.memory_space<vmem>>, %arg12: memref<1x32xf32, #tpu.memory_space<vmem>>, %arg13: memref<1x32xf32, #tpu.memory_space<vmem>>, %arg14: memref<1x32xf32, #tpu.memory_space<vmem>>, %arg15: memref<1x8x32xf32, #tpu.memory_space<vmem>>, %arg16: memref<8x32xf32, #tpu.memory_space<vmem>>) attributes {dimension_semantics = [#tpu.dimension_semantics<parallel>], iteration_bounds = array<i64: 2>, scalar_prefetch = 0 : i64, scratch_operands = 1 : i64, tpu.core_type = #tpu.core_type<tc>, window_params = [{transform_indices = @transform_0, window_bounds = array<i64: 1, 8, 32>}, {transform_indices = @transform_1, window_bounds = array<i64: 1, 1, 8>}, {pipeline_mode = #tpu.pipeline_mode<synchronous>, transform_indices = @transform_2, window_bounds = array<i64: 32, 96>}, {pipeline_mode = #tpu.pipeline_mode<synchronous>, transform_indices = @transform_3, window_bounds = array<i64: 1, 96>}, {pipeline_mode = #tpu.pipeline_mode<synchronous>, transform_indices = @transform_4, window_bounds = array<i64: 32, 32>}, {pipeline_mode = #tpu.pipeline_mode<synchronous>, transform_indices = @transform_5, window_bounds = array<i64: 1, 32>}, {pipeline_mode = #tpu.pipeline_mode<synchronous>, transform_indices = @transform_6, window_bounds = array<i64: 1, 32>}, {pipeline_mode = #tpu.pipeline_mode<synchronous>, transform_indices = @transform_7, window_bounds = array<i64: 1, 32>}, {pipeline_mode = #tpu.pipeline_mode<synchronous>, transform_indices = @transform_8, window_bounds = array<i64: 32, 128>}, {pipeline_mode = #tpu.pipeline_mode<synchronous>, transform_indices = @transform_9, window_bounds = array<i64: 1, 128>}, {pipeline_mode = #tpu.pipeline_mode<synchronous>, transform_indices = @transform_10, window_bounds = array<i64: 128, 32>}, {pipeline_mode = #tpu.pipeline_mode<synchronous>, transform_indices = @transform_11, window_bounds = array<i64: 1, 32>}, {pipeline_mode = #tpu.pipeline_mode<synchronous>, transform_indices = @transform_12, window_bounds = array<i64: 1, 32>}, {pipeline_mode = #tpu.pipeline_mode<synchronous>, transform_indices = @transform_13, window_bounds = array<i64: 1, 32>}, {transform_indices = @transform_14, window_bounds = array<i64: 1, 8, 32>}]} {
    %c0 = arith.constant 0 : index
    %c0_0 = arith.constant 0 : index
    %c0_1 = arith.constant 0 : index
    %0 = vector.load %arg1[%c0, %c0_0, %c0_1] : memref<1x8x32xf32, #tpu.memory_space<vmem>>, vector<1x8x32xf32>
    %1 = vector.shape_cast %0 : vector<1x8x32xf32> to vector<8x32xf32>
    %2 = arith.truncf %1 : vector<8x32xf32> to vector<8x32xbf16>
    %c0_2 = arith.constant 0 : index
    %c0_3 = arith.constant 0 : index
    %3 = vector.load %arg3[%c0_2, %c0_3] : memref<32x96xbf16, #tpu.memory_space<vmem>>, vector<32x96xbf16>
    %cst = arith.constant dense<0.000000e+00> : vector<8x96xf32>
    %4 = tpu.matmul %2, %3, %cst {dimension_numbers = #tpu.dot_dimension_numbers<[1], [0], [0], [1], [0, 0, 1, 1], [], []>} : vector<8x32xbf16>, vector<32x96xbf16>, vector<8x96xf32> -> vector<8x96xf32>
    %c0_4 = arith.constant 0 : index
    %c0_5 = arith.constant 0 : index
    %5 = vector.load %arg4[%c0_4, %c0_5] : memref<1x96xf32, #tpu.memory_space<vmem>>, vector<1x96xf32>
    %6 = vector.broadcast %5 : vector<1x96xf32> to vector<8x96xf32>
    %7 = arith.addf %4, %6 : vector<8x96xf32>
    %8 = arith.truncf %7 : vector<8x96xf32> to vector<8x96xbf16>
    %c0_6 = arith.constant 0 : index
    %c0_7 = arith.constant 0 : index
    %c0_8 = arith.constant 0 : index
    %9 = vector.load %arg2[%c0_6, %c0_7, %c0_8] : memref<1x1x8xf32, #tpu.memory_space<vmem>>, vector<1x1x8xf32>
    %10 = vector.shape_cast %9 : vector<1x1x8xf32> to vector<1x8xf32>
    %11 = vector.extract_strided_slice %8 {offsets = [0, 0], sizes = [8, 8], strides = [1, 1]} : vector<8x96xbf16> to vector<8x8xbf16>
    %12 = vector.extract_strided_slice %8 {offsets = [0, 32], sizes = [8, 8], strides = [1, 1]} : vector<8x96xbf16> to vector<8x8xbf16>
    %13 = vector.extract_strided_slice %8 {offsets = [0, 64], sizes = [8, 8], strides = [1, 1]} : vector<8x96xbf16> to vector<8x8xbf16>
    %cst_9 = arith.constant dense<0.000000e+00> : vector<8x8xf32>
    %14 = tpu.matmul %11, %12, %cst_9 {dimension_numbers = #tpu.dot_dimension_numbers<[1], [1], [0], [0], [0, 0, 1, 0], [], []>} : vector<8x8xbf16>, vector<8x8xbf16>, vector<8x8xf32> -> vector<8x8xf32>
    %15 = vector.broadcast %10 : vector<1x8xf32> to vector<8x8xf32>
    %16 = arith.addf %14, %15 : vector<8x8xf32>
    %cst_10 = arith.constant dense<0xFF800000> : vector<8xf32>
    %17 = vector.multi_reduction <maximumf>, %16, %cst_10 [1] : vector<8x8xf32> to vector<8xf32>
    %18 = vector.shape_cast %17 : vector<8xf32> to vector<8x1xf32>
    %19 = vector.broadcast %18 : vector<8x1xf32> to vector<8x8xf32>
    %20 = arith.subf %16, %19 : vector<8x8xf32>
    %21 = math.exp %20 : vector<8x8xf32>
    %cst_11 = arith.constant dense<0.000000e+00> : vector<8xf32>
    %22 = vector.multi_reduction <add>, %21, %cst_11 [1] : vector<8x8xf32> to vector<8xf32>
    %23 = vector.shape_cast %22 : vector<8xf32> to vector<8x1xf32>
    %24 = tpu.reciprocal %23 {approx = true} : vector<8x1xf32> -> vector<8x1xf32>
    %25 = vector.broadcast %24 : vector<8x1xf32> to vector<8x8xf32>
    %26 = arith.mulf %21, %25 : vector<8x8xf32>
    %27 = arith.truncf %26 : vector<8x8xf32> to vector<8x8xbf16>
    %cst_12 = arith.constant dense<0.000000e+00> : vector<8x8xf32>
    %28 = tpu.matmul %27, %13, %cst_12 {dimension_numbers = #tpu.dot_dimension_numbers<[1], [0], [0], [1], [0, 0, 1, 1], [], []>} : vector<8x8xbf16>, vector<8x8xbf16>, vector<8x8xf32> -> vector<8x8xf32>
    %c0_13 = arith.constant 0 : index
    %c0_14 = arith.constant 0 : index
    %29 = vector.load %arg16[%c0_13, %c0_14] : memref<8x32xf32, #tpu.memory_space<vmem>>, vector<8x8xf32>
    tpu.vector_store %arg16[%c0_13, %c0_14], %28 {strides = array<i32>} : memref<8x32xf32, #tpu.memory_space<vmem>>, vector<8x8xf32>,
    %30 = vector.extract_strided_slice %8 {offsets = [0, 8], sizes = [8, 8], strides = [1, 1]} : vector<8x96xbf16> to vector<8x8xbf16>
    %31 = vector.extract_strided_slice %8 {offsets = [0, 40], sizes = [8, 8], strides = [1, 1]} : vector<8x96xbf16> to vector<8x8xbf16>
    %32 = vector.extract_strided_slice %8 {offsets = [0, 72], sizes = [8, 8], strides = [1, 1]} : vector<8x96xbf16> to vector<8x8xbf16>
    %cst_15 = arith.constant dense<0.000000e+00> : vector<8x8xf32>
    %33 = tpu.matmul %30, %31, %cst_15 {dimension_numbers = #tpu.dot_dimension_numbers<[1], [1], [0], [0], [0, 0, 1, 0], [], []>} : vector<8x8xbf16>, vector<8x8xbf16>, vector<8x8xf32> -> vector<8x8xf32>
    %34 = vector.broadcast %10 : vector<1x8xf32> to vector<8x8xf32>
    %35 = arith.addf %33, %34 : vector<8x8xf32>
    %cst_16 = arith.constant dense<0xFF800000> : vector<8xf32>
    %36 = vector.multi_reduction <maximumf>, %35, %cst_16 [1] : vector<8x8xf32> to vector<8xf32>
    %37 = vector.shape_cast %36 : vector<8xf32> to vector<8x1xf32>
    %38 = vector.broadcast %37 : vector<8x1xf32> to vector<8x8xf32>
    %39 = arith.subf %35, %38 : vector<8x8xf32>
    %40 = math.exp %39 : vector<8x8xf32>
    %cst_17 = arith.constant dense<0.000000e+00> : vector<8xf32>
    %41 = vector.multi_reduction <add>, %40, %cst_17 [1] : vector<8x8xf32> to vector<8xf32>
    %42 = vector.shape_cast %41 : vector<8xf32> to vector<8x1xf32>
    %43 = tpu.reciprocal %42 {approx = true} : vector<8x1xf32> -> vector<8x1xf32>
    %44 = vector.broadcast %43 : vector<8x1xf32> to vector<8x8xf32>
    %45 = arith.mulf %40, %44 : vector<8x8xf32>
    %46 = arith.truncf %45 : vector<8x8xf32> to vector<8x8xbf16>
    %cst_18 = arith.constant dense<0.000000e+00> : vector<8x8xf32>
    %47 = tpu.matmul %46, %32, %cst_18 {dimension_numbers = #tpu.dot_dimension_numbers<[1], [0], [0], [1], [0, 0, 1, 1], [], []>} : vector<8x8xbf16>, vector<8x8xbf16>, vector<8x8xf32> -> vector<8x8xf32>
    %c0_19 = arith.constant 0 : index
    %c8 = arith.constant 8 : index
    %48 = vector.load %arg16[%c0_19, %c8] : memref<8x32xf32, #tpu.memory_space<vmem>>, vector<8x8xf32>
    tpu.vector_store %arg16[%c0_19, %c8], %47 {strides = array<i32>} : memref<8x32xf32, #tpu.memory_space<vmem>>, vector<8x8xf32>,
    %49 = vector.extract_strided_slice %8 {offsets = [0, 16], sizes = [8, 8], strides = [1, 1]} : vector<8x96xbf16> to vector<8x8xbf16>
    %50 = vector.extract_strided_slice %8 {offsets = [0, 48], sizes = [8, 8], strides = [1, 1]} : vector<8x96xbf16> to vector<8x8xbf16>
    %51 = vector.extract_strided_slice %8 {offsets = [0, 80], sizes = [8, 8], strides = [1, 1]} : vector<8x96xbf16> to vector<8x8xbf16>
    %cst_20 = arith.constant dense<0.000000e+00> : vector<8x8xf32>
    %52 = tpu.matmul %49, %50, %cst_20 {dimension_numbers = #tpu.dot_dimension_numbers<[1], [1], [0], [0], [0, 0, 1, 0], [], []>} : vector<8x8xbf16>, vector<8x8xbf16>, vector<8x8xf32> -> vector<8x8xf32>
    %53 = vector.broadcast %10 : vector<1x8xf32> to vector<8x8xf32>
    %54 = arith.addf %52, %53 : vector<8x8xf32>
    %cst_21 = arith.constant dense<0xFF800000> : vector<8xf32>
    %55 = vector.multi_reduction <maximumf>, %54, %cst_21 [1] : vector<8x8xf32> to vector<8xf32>
    %56 = vector.shape_cast %55 : vector<8xf32> to vector<8x1xf32>
    %57 = vector.broadcast %56 : vector<8x1xf32> to vector<8x8xf32>
    %58 = arith.subf %54, %57 : vector<8x8xf32>
    %59 = math.exp %58 : vector<8x8xf32>
    %cst_22 = arith.constant dense<0.000000e+00> : vector<8xf32>
    %60 = vector.multi_reduction <add>, %59, %cst_22 [1] : vector<8x8xf32> to vector<8xf32>
    %61 = vector.shape_cast %60 : vector<8xf32> to vector<8x1xf32>
    %62 = tpu.reciprocal %61 {approx = true} : vector<8x1xf32> -> vector<8x1xf32>
    %63 = vector.broadcast %62 : vector<8x1xf32> to vector<8x8xf32>
    %64 = arith.mulf %59, %63 : vector<8x8xf32>
    %65 = arith.truncf %64 : vector<8x8xf32> to vector<8x8xbf16>
    %cst_23 = arith.constant dense<0.000000e+00> : vector<8x8xf32>
    %66 = tpu.matmul %65, %51, %cst_23 {dimension_numbers = #tpu.dot_dimension_numbers<[1], [0], [0], [1], [0, 0, 1, 1], [], []>} : vector<8x8xbf16>, vector<8x8xbf16>, vector<8x8xf32> -> vector<8x8xf32>
    %c0_24 = arith.constant 0 : index
    %c16 = arith.constant 16 : index
    %67 = vector.load %arg16[%c0_24, %c16] : memref<8x32xf32, #tpu.memory_space<vmem>>, vector<8x8xf32>
    tpu.vector_store %arg16[%c0_24, %c16], %66 {strides = array<i32>} : memref<8x32xf32, #tpu.memory_space<vmem>>, vector<8x8xf32>,
    %68 = vector.extract_strided_slice %8 {offsets = [0, 24], sizes = [8, 8], strides = [1, 1]} : vector<8x96xbf16> to vector<8x8xbf16>
    %69 = vector.extract_strided_slice %8 {offsets = [0, 56], sizes = [8, 8], strides = [1, 1]} : vector<8x96xbf16> to vector<8x8xbf16>
    %70 = vector.extract_strided_slice %8 {offsets = [0, 88], sizes = [8, 8], strides = [1, 1]} : vector<8x96xbf16> to vector<8x8xbf16>
    %cst_25 = arith.constant dense<0.000000e+00> : vector<8x8xf32>
    %71 = tpu.matmul %68, %69, %cst_25 {dimension_numbers = #tpu.dot_dimension_numbers<[1], [1], [0], [0], [0, 0, 1, 0], [], []>} : vector<8x8xbf16>, vector<8x8xbf16>, vector<8x8xf32> -> vector<8x8xf32>
    %72 = vector.broadcast %10 : vector<1x8xf32> to vector<8x8xf32>
    %73 = arith.addf %71, %72 : vector<8x8xf32>
    %cst_26 = arith.constant dense<0xFF800000> : vector<8xf32>
    %74 = vector.multi_reduction <maximumf>, %73, %cst_26 [1] : vector<8x8xf32> to vector<8xf32>
    %75 = vector.shape_cast %74 : vector<8xf32> to vector<8x1xf32>
    %76 = vector.broadcast %75 : vector<8x1xf32> to vector<8x8xf32>
    %77 = arith.subf %73, %76 : vector<8x8xf32>
    %78 = math.exp %77 : vector<8x8xf32>
    %cst_27 = arith.constant dense<0.000000e+00> : vector<8xf32>
    %79 = vector.multi_reduction <add>, %78, %cst_27 [1] : vector<8x8xf32> to vector<8xf32>
    %80 = vector.shape_cast %79 : vector<8xf32> to vector<8x1xf32>
    %81 = tpu.reciprocal %80 {approx = true} : vector<8x1xf32> -> vector<8x1xf32>
    %82 = vector.broadcast %81 : vector<8x1xf32> to vector<8x8xf32>
    %83 = arith.mulf %78, %82 : vector<8x8xf32>
    %84 = arith.truncf %83 : vector<8x8xf32> to vector<8x8xbf16>
    %cst_28 = arith.constant dense<0.000000e+00> : vector<8x8xf32>
    %85 = tpu.matmul %84, %70, %cst_28 {dimension_numbers = #tpu.dot_dimension_numbers<[1], [0], [0], [1], [0, 0, 1, 1], [], []>} : vector<8x8xbf16>, vector<8x8xbf16>, vector<8x8xf32> -> vector<8x8xf32>
    %c0_29 = arith.constant 0 : index
    %c24 = arith.constant 24 : index
    %86 = vector.load %arg16[%c0_29, %c24] : memref<8x32xf32, #tpu.memory_space<vmem>>, vector<8x8xf32>
    tpu.vector_store %arg16[%c0_29, %c24], %85 {strides = array<i32>} : memref<8x32xf32, #tpu.memory_space<vmem>>, vector<8x8xf32>,
    %c0_30 = arith.constant 0 : index
    %c0_31 = arith.constant 0 : index
    %87 = vector.load %arg16[%c0_30, %c0_31] : memref<8x32xf32, #tpu.memory_space<vmem>>, vector<8x32xf32>
    %88 = arith.truncf %87 : vector<8x32xf32> to vector<8x32xbf16>
    %c0_32 = arith.constant 0 : index
    %c0_33 = arith.constant 0 : index
    %89 = vector.load %arg5[%c0_32, %c0_33] : memref<32x32xbf16, #tpu.memory_space<vmem>>, vector<32x32xbf16>
    %cst_34 = arith.constant dense<0.000000e+00> : vector<8x32xf32>
    %90 = tpu.matmul %88, %89, %cst_34 {dimension_numbers = #tpu.dot_dimension_numbers<[1], [0], [0], [1], [0, 0, 1, 1], [], []>} : vector<8x32xbf16>, vector<32x32xbf16>, vector<8x32xf32> -> vector<8x32xf32>
    %c0_35 = arith.constant 0 : index
    %c0_36 = arith.constant 0 : index
    %91 = vector.load %arg6[%c0_35, %c0_36] : memref<1x32xf32, #tpu.memory_space<vmem>>, vector<1x32xf32>
    %92 = vector.broadcast %91 : vector<1x32xf32> to vector<8x32xf32>
    %93 = arith.addf %90, %92 : vector<8x32xf32>
    %94 = arith.addf %93, %1 : vector<8x32xf32>
    %c0_37 = arith.constant 0 : index
    %c0_38 = arith.constant 0 : index
    %95 = vector.load %arg7[%c0_37, %c0_38] : memref<1x32xf32, #tpu.memory_space<vmem>>, vector<1x32xf32>
    %c0_39 = arith.constant 0 : index
    %c0_40 = arith.constant 0 : index
    %96 = vector.load %arg8[%c0_39, %c0_40] : memref<1x32xf32, #tpu.memory_space<vmem>>, vector<1x32xf32>
    %cst_41 = arith.constant dense<0.000000e+00> : vector<8xf32>
    %97 = vector.multi_reduction <add>, %94, %cst_41 [1] : vector<8x32xf32> to vector<8xf32>
    %98 = vector.shape_cast %97 : vector<8xf32> to vector<8x1xf32>
    %cst_42 = arith.constant 3.200000e+01 : f32
    %99 = vector.broadcast %cst_42 : f32 to vector<8x1xf32>
    %100 = arith.divf %98, %99 : vector<8x1xf32>
    %101 = vector.broadcast %100 : vector<8x1xf32> to vector<8x32xf32>
    %102 = arith.subf %94, %101 : vector<8x32xf32>
    %103 = arith.mulf %102, %102 : vector<8x32xf32>
    %cst_43 = arith.constant dense<0.000000e+00> : vector<8xf32>
    %104 = vector.multi_reduction <add>, %103, %cst_43 [1] : vector<8x32xf32> to vector<8xf32>
    %105 = vector.shape_cast %104 : vector<8xf32> to vector<8x1xf32>
    %cst_44 = arith.constant 3.200000e+01 : f32
    %106 = vector.broadcast %cst_44 : f32 to vector<8x1xf32>
    %107 = arith.divf %105, %106 : vector<8x1xf32>
    %cst_45 = arith.constant 9.99999974E-6 : f32
    %108 = vector.broadcast %cst_45 : f32 to vector<8x1xf32>
    %109 = arith.addf %107, %108 : vector<8x1xf32>
    %110 = math.rsqrt %109 : vector<8x1xf32>
    %111 = vector.broadcast %110 : vector<8x1xf32> to vector<8x32xf32>
    %112 = arith.mulf %102, %111 : vector<8x32xf32>
    %113 = vector.broadcast %95 : vector<1x32xf32> to vector<8x32xf32>
    %114 = arith.mulf %112, %113 : vector<8x32xf32>
    %115 = vector.broadcast %96 : vector<1x32xf32> to vector<8x32xf32>
    %116 = arith.addf %114, %115 : vector<8x32xf32>
    %117 = arith.truncf %116 : vector<8x32xf32> to vector<8x32xbf16>
    %c0_46 = arith.constant 0 : index
    %c0_47 = arith.constant 0 : index
    %118 = vector.load %arg9[%c0_46, %c0_47] : memref<32x128xbf16, #tpu.memory_space<vmem>>, vector<32x128xbf16>
    %cst_48 = arith.constant dense<0.000000e+00> : vector<8x128xf32>
    %119 = tpu.matmul %117, %118, %cst_48 {dimension_numbers = #tpu.dot_dimension_numbers<[1], [0], [0], [1], [0, 0, 1, 1], [], []>} : vector<8x32xbf16>, vector<32x128xbf16>, vector<8x128xf32> -> vector<8x128xf32>
    %c0_49 = arith.constant 0 : index
    %c0_50 = arith.constant 0 : index
    %120 = vector.load %arg10[%c0_49, %c0_50] : memref<1x128xf32, #tpu.memory_space<vmem>>, vector<1x128xf32>
    %121 = vector.broadcast %120 : vector<1x128xf32> to vector<8x128xf32>
    %122 = arith.addf %119, %121 : vector<8x128xf32>
    %cst_51 = arith.constant 5.000000e-01 : f32
    %123 = vector.broadcast %cst_51 : f32 to vector<8x128xf32>
    %124 = arith.mulf %123, %122 : vector<8x128xf32>
    %cst_52 = arith.constant 4.471500e-02 : f32
    %125 = vector.broadcast %cst_52 : f32 to vector<8x128xf32>
    %126 = arith.mulf %125, %122 : vector<8x128xf32>
    %127 = arith.mulf %126, %122 : vector<8x128xf32>
    %128 = arith.mulf %127, %122 : vector<8x128xf32>
    %129 = arith.addf %122, %128 : vector<8x128xf32>
    %cst_53 = arith.constant 0.797884583 : f32
    %130 = vector.broadcast %cst_53 : f32 to vector<8x128xf32>
    %131 = arith.mulf %130, %129 : vector<8x128xf32>
    %132 = math.tanh %131 : vector<8x128xf32>
    %cst_54 = arith.constant 1.000000e+00 : f32
    %133 = vector.broadcast %cst_54 : f32 to vector<8x128xf32>
    %134 = arith.addf %133, %132 : vector<8x128xf32>
    %135 = arith.mulf %124, %134 : vector<8x128xf32>
    %136 = arith.truncf %135 : vector<8x128xf32> to vector<8x128xbf16>
    %c0_55 = arith.constant 0 : index
    %c0_56 = arith.constant 0 : index
    %137 = vector.load %arg11[%c0_55, %c0_56] : memref<128x32xbf16, #tpu.memory_space<vmem>>, vector<128x32xbf16>
    %cst_57 = arith.constant dense<0.000000e+00> : vector<8x32xf32>
    %138 = tpu.matmul %136, %137, %cst_57 {dimension_numbers = #tpu.dot_dimension_numbers<[1], [0], [0], [1], [0, 0, 1, 1], [], []>} : vector<8x128xbf16>, vector<128x32xbf16>, vector<8x32xf32> -> vector<8x32xf32>
    %c0_58 = arith.constant 0 : index
    %c0_59 = arith.constant 0 : index
    %139 = vector.load %arg12[%c0_58, %c0_59] : memref<1x32xf32, #tpu.memory_space<vmem>>, vector<1x32xf32>
    %140 = vector.broadcast %139 : vector<1x32xf32> to vector<8x32xf32>
    %141 = arith.addf %138, %140 : vector<8x32xf32>
    %142 = arith.addf %141, %116 : vector<8x32xf32>
    %c0_60 = arith.constant 0 : index
    %c0_61 = arith.constant 0 : index
    %143 = vector.load %arg13[%c0_60, %c0_61] : memref<1x32xf32, #tpu.memory_space<vmem>>, vector<1x32xf32>
    %c0_62 = arith.constant 0 : index
    %c0_63 = arith.constant 0 : index
    %144 = vector.load %arg14[%c0_62, %c0_63] : memref<1x32xf32, #tpu.memory_space<vmem>>, vector<1x32xf32>
    %cst_64 = arith.constant dense<0.000000e+00> : vector<8xf32>
    %145 = vector.multi_reduction <add>, %142, %cst_64 [1] : vector<8x32xf32> to vector<8xf32>
    %146 = vector.shape_cast %145 : vector<8xf32> to vector<8x1xf32>
    %cst_65 = arith.constant 3.200000e+01 : f32
    %147 = vector.broadcast %cst_65 : f32 to vector<8x1xf32>
    %148 = arith.divf %146, %147 : vector<8x1xf32>
    %149 = vector.broadcast %148 : vector<8x1xf32> to vector<8x32xf32>
    %150 = arith.subf %142, %149 : vector<8x32xf32>
    %151 = arith.mulf %150, %150 : vector<8x32xf32>
    %cst_66 = arith.constant dense<0.000000e+00> : vector<8xf32>
    %152 = vector.multi_reduction <add>, %151, %cst_66 [1] : vector<8x32xf32> to vector<8xf32>
    %153 = vector.shape_cast %152 : vector<8xf32> to vector<8x1xf32>
    %cst_67 = arith.constant 3.200000e+01 : f32
    %154 = vector.broadcast %cst_67 : f32 to vector<8x1xf32>
    %155 = arith.divf %153, %154 : vector<8x1xf32>
    %cst_68 = arith.constant 9.99999974E-6 : f32
    %156 = vector.broadcast %cst_68 : f32 to vector<8x1xf32>
    %157 = arith.addf %155, %156 : vector<8x1xf32>
    %158 = math.rsqrt %157 : vector<8x1xf32>
    %159 = vector.broadcast %158 : vector<8x1xf32> to vector<8x32xf32>
    %160 = arith.mulf %150, %159 : vector<8x32xf32>
    %161 = vector.broadcast %143 : vector<1x32xf32> to vector<8x32xf32>
    %162 = arith.mulf %160, %161 : vector<8x32xf32>
    %163 = vector.broadcast %144 : vector<1x32xf32> to vector<8x32xf32>
    %164 = arith.addf %162, %163 : vector<8x32xf32>
    %c0_69 = arith.constant 0 : index
    %c0_70 = arith.constant 0 : index
    %c0_71 = arith.constant 0 : index
    %165 = vector.load %arg15[%c0_69, %c0_70, %c0_71] : memref<1x8x32xf32, #tpu.memory_space<vmem>>, vector<1x8x32xf32>
    %166 = vector.shape_cast %165 : vector<1x8x32xf32> to vector<8x32xf32>
    %167 = vector.shape_cast %164 : vector<8x32xf32> to vector<1x8x32xf32>
    tpu.vector_store %arg15[%c0_69, %c0_70, %c0_71], %167 {strides = array<i32>} : memref<1x8x32xf32, #tpu.memory_space<vmem>>, vector<1x8x32xf32>,
    return
  }
  func.func @transform_0(%arg0: i32) -> (i32, i32, i32) {
    %c0_i32 = arith.constant 0 : i32
    %c0_i32_0 = arith.constant 0 : i32
    %c0_i32_1 = arith.constant 0 : i32
    return %arg0, %c0_i32, %c0_i32_0 : i32, i32, i32
  }
  func.func @transform_1(%arg0: i32) -> (i32, i32, i32) {
    %c0_i32 = arith.constant 0 : i32
    %c0_i32_0 = arith.constant 0 : i32
    %c0_i32_1 = arith.constant 0 : i32
    return %arg0, %c0_i32, %c0_i32_0 : i32, i32, i32
  }
  func.func @transform_2(%arg0: i32) -> (i32, i32) {
    %c0_i32 = arith.constant 0 : i32
    %c0_i32_0 = arith.constant 0 : i32
    %c0_i32_1 = arith.constant 0 : i32
    return %c0_i32, %c0_i32_0 : i32, i32
  }
  func.func @transform_3(%arg0: i32) -> (i32, i32) {
    %c0_i32 = arith.constant 0 : i32
    %c0_i32_0 = arith.constant 0 : i32
    %c0_i32_1 = arith.constant 0 : i32
    return %c0_i32, %c0_i32_0 : i32, i32
  }
  func.func @transform_4(%arg0: i32) -> (i32, i32) {
    %c0_i32 = arith.constant 0 : i32
    %c0_i32_0 = arith.constant 0 : i32
    %c0_i32_1 = arith.constant 0 : i32
    return %c0_i32, %c0_i32_0 : i32, i32
  }
  func.func @transform_5(%arg0: i32) -> (i32, i32) {
    %c0_i32 = arith.constant 0 : i32
    %c0_i32_0 = arith.constant 0 : i32
    %c0_i32_1 = arith.constant 0 : i32
    return %c0_i32, %c0_i32_0 : i32, i32
  }
  func.func @transform_6(%arg0: i32) -> (i32, i32) {
    %c0_i32 = arith.constant 0 : i32
    %c0_i32_0 = arith.constant 0 : i32
    %c0_i32_1 = arith.constant 0 : i32
    return %c0_i32, %c0_i32_0 : i32, i32
  }
  func.func @transform_7(%arg0: i32) -> (i32, i32) {
    %c0_i32 = arith.constant 0 : i32
    %c0_i32_0 = arith.constant 0 : i32
    %c0_i32_1 = arith.constant 0 : i32
    return %c0_i32, %c0_i32_0 : i32, i32
  }
  func.func @transform_8(%arg0: i32) -> (i32, i32) {
    %c0_i32 = arith.constant 0 : i32
    %c0_i32_0 = arith.constant 0 : i32
    %c0_i32_1 = arith.constant 0 : i32
    return %c0_i32, %c0_i32_0 : i32, i32
  }
  func.func @transform_9(%arg0: i32) -> (i32, i32) {
    %c0_i32 = arith.constant 0 : i32
    %c0_i32_0 = arith.constant 0 : i32
    %c0_i32_1 = arith.constant 0 : i32
    return %c0_i32, %c0_i32_0 : i32, i32
  }
  func.func @transform_10(%arg0: i32) -> (i32, i32) {
    %c0_i32 = arith.constant 0 : i32
    %c0_i32_0 = arith.constant 0 : i32
    %c0_i32_1 = arith.constant 0 : i32
    return %c0_i32, %c0_i32_0 : i32, i32
  }
  func.func @transform_11(%arg0: i32) -> (i32, i32) {
    %c0_i32 = arith.constant 0 : i32
    %c0_i32_0 = arith.constant 0 : i32
    %c0_i32_1 = arith.constant 0 : i32
    return %c0_i32, %c0_i32_0 : i32, i32
  }
  func.func @transform_12(%arg0: i32) -> (i32, i32) {
    %c0_i32 = arith.constant 0 : i32
    %c0_i32_0 = arith.constant 0 : i32
    %c0_i32_1 = arith.constant 0 : i32
    return %c0_i32, %c0_i32_0 : i32, i32
  }
  func.func @transform_13(%arg0: i32) -> (i32, i32) {
    %c0_i32 = arith.constant 0 : i32
    %c0_i32_0 = arith.constant 0 : i32
    %c0_i32_1 = arith.constant 0 : i32
    return %c0_i32, %c0_i32_0 : i32, i32
  }
  func.func @transform_14(%arg0: i32) -> (i32, i32, i32) {
    %c0_i32 = arith.constant 0 : i32
    %c0_i32_0 = arith.constant 0 : i32
    %c0_i32_1 = arith.constant 0 : i32
    return %arg0, %c0_i32, %c0_i32_0 : i32, i32, i32
  }
}

module attributes {stable_mosaic.version = 11 : i64} {
  func.func @_bert_layer_kernel(%arg0: i32, %arg1: memref<1x8x32xf32, #tpu.memory_space<vmem>>, %arg2: memref<1x1x8xf32, #tpu.memory_space<vmem>>, %arg3: memref<32x96xbf16, #tpu.memory_space<vmem>>, %arg4: memref<1x96xf32, #tpu.memory_space<vmem>>, %arg5: memref<32x32xbf16, #tpu.memory_space<vmem>>, %arg6: memref<1x32xf32, #tpu.memory_space<vmem>>, %arg7: memref<1x32xf32, #tpu.memory_space<vmem>>, %arg8: memref<1x32xf32, #tpu.memory_space<vmem>>, %arg9: memref<32x128xbf16, #tpu.memory_space<vmem>>, %arg10: memref<1x128xf32, #tpu.memory_space<vmem>>, %arg11: memref<128x32xbf16, #tpu.memory_space<vmem>>, %arg12: memref<1x32xf32, #tpu.memory_space<vmem>>, %arg13: memref<1x32xf32, #tpu.memory_space<vmem>>, %arg14: memref<1x32xf32, #tpu.memory_space<vmem>>, %arg15: memref<1x8x32xf32, #tpu.memory_space<vmem>>, %arg16: memref<8x32xf32, #tpu.memory_space<vmem>>) attributes {dimension_semantics = [#tpu.dimension_semantics<parallel>], iteration_bounds = array<i64: 2>, scalar_prefetch = 0 : i64, scratch_operands = 1 : i64, tpu.core_type = #tpu.core_type<tc>, window_params = [{transform_indices = @transform_0, window_bounds = array<i64: 1, 8, 32>}, {transform_indices = @transform_1, window_bounds = array<i64: 1, 1, 8>}, {pipeline_mode = #tpu.pipeline_mode<synchronous>, transform_indices = @transform_2, window_bounds = array<i64: 32, 96>}, {pipeline_mode = #tpu.pipeline_mode<synchronous>, transform_indices = @transform_3, window_bounds = array<i64: 1, 96>}, {pipeline_mode = #tpu.pipeline_mode<synchronous>, transform_indices = @transform_4, window_bounds = array<i64: 32, 32>}, {pipeline_mode = #tpu.pipeline_mode<synchronous>, transform_indices = @transform_5, window_bounds = array<i64: 1, 32>}, {pipeline_mode = #tpu.pipeline_mode<synchronous>, transform_indices = @transform_6, window_bounds = array<i64: 1, 32>}, {pipeline_mode = #tpu.pipeline_mode<synchronous>, transform_indices = @transform_7, window_bounds = array<i64: 1, 32>}, {pipeline_mode = #tpu.pipeline_mode<synchronous>, transform_indices = @transform_8, window_bounds = array<i64: 32, 128>}, {pipeline_mode = #tpu.pipeline_mode<synchronous>, transform_indices = @transform_9, window_bounds = array<i64: 1, 128>}, {pipeline_mode = #tpu.pipeline_mode<synchronous>, transform_indices = @transform_10, window_bounds = array<i64: 128, 32>}, {pipeline_mode = #tpu.pipeline_mode<synchronous>, transform_indices = @transform_11, window_bounds = array<i64: 1, 32>}, {pipeline_mode = #tpu.pipeline_mode<synchronous>, transform_indices = @transform_12, window_bounds = array<i64: 1, 32>}, {pipeline_mode = #tpu.pipeline_mode<synchronous>, transform_indices = @transform_13, window_bounds = array<i64: 1, 32>}, {transform_indices = @transform_14, window_bounds = array<i64: 1, 8, 32>}]} {
    %c0 = arith.constant 0 : index
    %c0_0 = arith.constant 0 : index
    %c0_1 = arith.constant 0 : index
    %0 = vector.load %arg1[%c0, %c0_0, %c0_1] : memref<1x8x32xf32, #tpu.memory_space<vmem>>, vector<1x8x32xf32>
    %1 = vector.shape_cast %0 : vector<1x8x32xf32> to vector<8x32xf32>
    %2 = arith.truncf %1 : vector<8x32xf32> to vector<8x32xbf16>
    %c0_2 = arith.constant 0 : index
    %c0_3 = arith.constant 0 : index
    %3 = vector.load %arg3[%c0_2, %c0_3] : memref<32x96xbf16, #tpu.memory_space<vmem>>, vector<32x96xbf16>
    %cst = arith.constant dense<0.000000e+00> : vector<8x96xf32>
    %4 = tpu.matmul %2, %3, %cst {dimension_numbers = #tpu.dot_dimension_numbers<[1], [0], [0], [1], [0, 0, 1, 1], [], []>} : vector<8x32xbf16>, vector<32x96xbf16>, vector<8x96xf32> -> vector<8x96xf32>
    %c0_4 = arith.constant 0 : index
    %c0_5 = arith.constant 0 : index
    %5 = vector.load %arg4[%c0_4, %c0_5] : memref<1x96xf32, #tpu.memory_space<vmem>>, vector<1x96xf32>
    %6 = vector.broadcast %5 : vector<1x96xf32> to vector<8x96xf32>
    %7 = arith.addf %4, %6 : vector<8x96xf32>
    %8 = arith.truncf %7 : vector<8x96xf32> to vector<8x96xbf16>
    %c0_6 = arith.constant 0 : index
    %c0_7 = arith.constant 0 : index
    %c0_8 = arith.constant 0 : index
    %9 = vector.load %arg2[%c0_6, %c0_7, %c0_8] : memref<1x1x8xf32, #tpu.memory_space<vmem>>, vector<1x1x8xf32>
    %10 = vector.shape_cast %9 : vector<1x1x8xf32> to vector<1x8xf32>
    %11 = vector.extract_strided_slice %8 {offsets = [0, 0], sizes = [8, 8], strides = [1, 1]} : vector<8x96xbf16> to vector<8x8xbf16>
    %12 = vector.extract_strided_slice %8 {offsets = [0, 32], sizes = [8, 8], strides = [1, 1]} : vector<8x96xbf16> to vector<8x8xbf16>
    %13 = vector.extract_strided_slice %8 {offsets = [0, 64], sizes = [8, 8], strides = [1, 1]} : vector<8x96xbf16> to vector<8x8xbf16>
    %cst_9 = arith.constant dense<0.000000e+00> : vector<8x8xf32>
    %14 = tpu.matmul %11, %12, %cst_9 {dimension_numbers = #tpu.dot_dimension_numbers<[1], [1], [0], [0], [0, 0, 1, 0], [], []>} : vector<8x8xbf16>, vector<8x8xbf16>, vector<8x8xf32> -> vector<8x8xf32>
    %15 = vector.broadcast %10 : vector<1x8xf32> to vector<8x8xf32>
    %16 = arith.addf %14, %15 : vector<8x8xf32>
    %cst_10 = arith.constant dense<0xFF800000> : vector<8xf32>
    %17 = vector.multi_reduction <maximumf>, %16, %cst_10 [1] : vector<8x8xf32> to vector<8xf32>
    %18 = vector.shape_cast %17 : vector<8xf32> to vector<8x1xf32>
    %19 = vector.broadcast %18 : vector<8x1xf32> to vector<8x8xf32>
    %20 = arith.subf %16, %19 : vector<8x8xf32>
    %21 = math.exp %20 : vector<8x8xf32>
    %cst_11 = arith.constant dense<0.000000e+00> : vector<8xf32>
    %22 = vector.multi_reduction <add>, %21, %cst_11 [1] : vector<8x8xf32> to vector<8xf32>
    %23 = vector.shape_cast %22 : vector<8xf32> to vector<8x1xf32>
    %24 = tpu.reciprocal %23 {approx = true} : vector<8x1xf32> -> vector<8x1xf32>
    %25 = vector.broadcast %24 : vector<8x1xf32> to vector<8x8xf32>
    %26 = arith.mulf %21, %25 : vector<8x8xf32>
    %27 = arith.truncf %26 : vector<8x8xf32> to vector<8x8xbf16>
    %cst_12 = arith.constant dense<0.000000e+00> : vector<8x8xf32>
    %28 = tpu.matmul %27, %13, %cst_12 {dimension_numbers = #tpu.dot_dimension_numbers<[1], [0], [0], [1], [0, 0, 1, 1], [], []>} : vector<8x8xbf16>, vector<8x8xbf16>, vector<8x8xf32> -> vector<8x8xf32>
    %c0_13 = arith.constant 0 : index
    %c0_14 = arith.constant 0 : index
    %29 = vector.load %arg16[%c0_13, %c0_14] : memref<8x32xf32, #tpu.memory_space<vmem>>, vector<8x8xf32>
    tpu.vector_store %arg16[%c0_13, %c0_14], %28 {strides = array<i32>} : memref<8x32xf32, #tpu.memory_space<vmem>>, vector<8x8xf32>,
    %30 = vector.extract_strided_slice %8 {offsets = [0, 8], sizes = [8, 8], strides = [1, 1]} : vector<8x96xbf16> to vector<8x8xbf16>
    %31 = vector.extract_strided_slice %8 {offsets = [0, 40], sizes = [8, 8], strides = [1, 1]} : vector<8x96xbf16> to vector<8x8xbf16>
    %32 = vector.extract_strided_slice %8 {offsets = [0, 72], sizes = [8, 8], strides = [1, 1]} : vector<8x96xbf16> to vector<8x8xbf16>
    %cst_15 = arith.constant dense<0.000000e+00> : vector<8x8xf32>
    %33 = tpu.matmul %30, %31, %cst_15 {dimension_numbers = #tpu.dot_dimension_numbers<[1], [1], [0], [0], [0, 0, 1, 0], [], []>} : vector<8x8xbf16>, vector<8x8xbf16>, vector<8x8xf32> -> vector<8x8xf32>
    %34 = vector.broadcast %10 : vector<1x8xf32> to vector<8x8xf32>
    %35 = arith.addf %33, %34 : vector<8x8xf32>
    %cst_16 = arith.constant dense<0xFF800000> : vector<8xf32>
    %36 = vector.multi_reduction <maximumf>, %35, %cst_16 [1] : vector<8x8xf32> to vector<8xf32>
    %37 = vector.shape_cast %36 : vector<8xf32> to vector<8x1xf32>
    %38 = vector.broadcast %37 : vector<8x1xf32> to vector<8x8xf32>
    %39 = arith.subf %35, %38 : vector<8x8xf32>
    %40 = math.exp %39 : vector<8x8xf32>
    %cst_17 = arith.constant dense<0.000000e+00> : vector<8xf32>
    %41 = vector.multi_reduction <add>, %40, %cst_17 [1] : vector<8x8xf32> to vector<8xf32>
    %42 = vector.shape_cast %41 : vector<8xf32> to vector<8x1xf32>
    %43 = tpu.reciprocal %42 {approx = true} : vector<8x1xf32> -> vector<8x1xf32>
    %44 = vector.broadcast %43 : vector<8x1xf32> to vector<8x8xf32>
    %45 = arith.mulf %40, %44 : vector<8x8xf32>
    %46 = arith.truncf %45 : vector<8x8xf32> to vector<8x8xbf16>
    %cst_18 = arith.constant dense<0.000000e+00> : vector<8x8xf32>
    %47 = tpu.matmul %46, %32, %cst_18 {dimension_numbers = #tpu.dot_dimension_numbers<[1], [0], [0], [1], [0, 0, 1, 1], [], []>} : vector<8x8xbf16>, vector<8x8xbf16>, vector<8x8xf32> -> vector<8x8xf32>
    %c0_19 = arith.constant 0 : index
    %c8 = arith.constant 8 : index
    %48 = vector.load %arg16[%c0_19, %c8] : memref<8x32xf32, #tpu.memory_space<vmem>>, vector<8x8xf32>
    tpu.vector_store %arg16[%c0_19, %c8], %47 {strides = array<i32>} : memref<8x32xf32, #tpu.memory_space<vmem>>, vector<8x8xf32>,
    %49 = vector.extract_strided_slice %8 {offsets = [0, 16], sizes = [8, 8], strides = [1, 1]} : vector<8x96xbf16> to vector<8x8xbf16>
    %50 = vector.extract_strided_slice %8 {offsets = [0, 48], sizes = [8, 8], strides = [1, 1]} : vector<8x96xbf16> to vector<8x8xbf16>
    %51 = vector.extract_strided_slice %8 {offsets = [0, 80], sizes = [8, 8], strides = [1, 1]} : vector<8x96xbf16> to vector<8x8xbf16>
    %cst_20 = arith.constant dense<0.000000e+00> : vector<8x8xf32>
    %52 = tpu.matmul %49, %50, %cst_20 {dimension_numbers = #tpu.dot_dimension_numbers<[1], [1], [0], [0], [0, 0, 1, 0], [], []>} : vector<8x8xbf16>, vector<8x8xbf16>, vector<8x8xf32> -> vector<8x8xf32>
    %53 = vector.broadcast %10 : vector<1x8xf32> to vector<8x8xf32>
    %54 = arith.addf %52, %53 : vector<8x8xf32>
    %cst_21 = arith.constant dense<0xFF800000> : vector<8xf32>
    %55 = vector.multi_reduction <maximumf>, %54, %cst_21 [1] : vector<8x8xf32> to vector<8xf32>
    %56 = vector.shape_cast %55 : vector<8xf32> to vector<8x1xf32>
    %57 = vector.broadcast %56 : vector<8x1xf32> to vector<8x8xf32>
    %58 = arith.subf %54, %57 : vector<8x8xf32>
    %59 = math.exp %58 : vector<8x8xf32>
    %cst_22 = arith.constant dense<0.000000e+00> : vector<8xf32>
    %60 = vector.multi_reduction <add>, %59, %cst_22 [1] : vector<8x8xf32> to vector<8xf32>
    %61 = vector.shape_cast %60 : vector<8xf32> to vector<8x1xf32>
    %62 = tpu.reciprocal %61 {approx = true} : vector<8x1xf32> -> vector<8x1xf32>
    %63 = vector.broadcast %62 : vector<8x1xf32> to vector<8x8xf32>
    %64 = arith.mulf %59, %63 : vector<8x8xf32>
    %65 = arith.truncf %64 : vector<8x8xf32> to vector<8x8xbf16>
    %cst_23 = arith.constant dense<0.000000e+00> : vector<8x8xf32>
    %66 = tpu.matmul %65, %51, %cst_23 {dimension_numbers = #tpu.dot_dimension_numbers<[1], [0], [0], [1], [0, 0, 1, 1], [], []>} : vector<8x8xbf16>, vector<8x8xbf16>, vector<8x8xf32> -> vector<8x8xf32>
    %c0_24 = arith.constant 0 : index
    %c16 = arith.constant 16 : index
    %67 = vector.load %arg16[%c0_24, %c16] : memref<8x32xf32, #tpu.memory_space<vmem>>, vector<8x8xf32>
    tpu.vector_store %arg16[%c0_24, %c16], %66 {strides = array<i32>} : memref<8x32xf32, #tpu.memory_space<vmem>>, vector<8x8xf32>,
    %68 = vector.extract_strided_slice %8 {offsets = [0, 24], sizes = [8, 8], strides = [1, 1]} : vector<8x96xbf16> to vector<8x8xbf16>
    %69 = vector.extract_strided_slice %8 {offsets = [0, 56], sizes = [8, 8], strides = [1, 1]} : vector<8x96xbf16> to vector<8x8xbf16>
    %70 = vector.extract_strided_slice %8 {offsets = [0, 88], sizes = [8, 8], strides = [1, 1]} : vector<8x96xbf16> to vector<8x8xbf16>
    %cst_25 = arith.constant dense<0.000000e+00> : vector<8x8xf32>
    %71 = tpu.matmul %68, %69, %cst_25 {dimension_numbers = #tpu.dot_dimension_numbers<[1], [1], [0], [0], [0, 0, 1, 0], [], []>} : vector<8x8xbf16>, vector<8x8xbf16>, vector<8x8xf32> -> vector<8x8xf32>
    %72 = vector.broadcast %10 : vector<1x8xf32> to vector<8x8xf32>
    %73 = arith.addf %71, %72 : vector<8x8xf32>
    %cst_26 = arith.constant dense<0xFF800000> : vector<8xf32>
    %74 = vector.multi_reduction <maximumf>, %73, %cst_26 [1] : vector<8x8xf32> to vector<8xf32>
    %75 = vector.shape_cast %74 : vector<8xf32> to vector<8x1xf32>
    %76 = vector.broadcast %75 : vector<8x1xf32> to vector<8x8xf32>
    %77 = arith.subf %73, %76 : vector<8x8xf32>
    %78 = math.exp %77 : vector<8x8xf32>
    %cst_27 = arith.constant dense<0.000000e+00> : vector<8xf32>
    %79 = vector.multi_reduction <add>, %78, %cst_27 [1] : vector<8x8xf32> to vector<8xf32>
    %80 = vector.shape_cast %79 : vector<8xf32> to vector<8x1xf32>
    %81 = tpu.reciprocal %80 {approx = true} : vector<8x1xf32> -> vector<8x1xf32>
    %82 = vector.broadcast %81 : vector<8x1xf32> to vector<8x8xf32>
    %83 = arith.mulf %78, %82 : vector<8x8xf32>
    %84 = arith.truncf %83 : vector<8x8xf32> to vector<8x8xbf16>
    %cst_28 = arith.constant dense<0.000000e+00> : vector<8x8xf32>
    %85 = tpu.matmul %84, %70, %cst_28 {dimension_numbers = #tpu.dot_dimension_numbers<[1], [0], [0], [1], [0, 0, 1, 1], [], []>} : vector<8x8xbf16>, vector<8x8xbf16>, vector<8x8xf32> -> vector<8x8xf32>
    %c0_29 = arith.constant 0 : index
    %c24 = arith.constant 24 : index
    %86 = vector.load %arg16[%c0_29, %c24] : memref<8x32xf32, #tpu.memory_space<vmem>>, vector<8x8xf32>
    tpu.vector_store %arg16[%c0_29, %c24], %85 {strides = array<i32>} : memref<8x32xf32, #tpu.memory_space<vmem>>, vector<8x8xf32>,
    %c0_30 = arith.constant 0 : index
    %c0_31 = arith.constant 0 : index
    %87 = vector.load %arg16[%c0_30, %c0_31] : memref<8x32xf32, #tpu.memory_space<vmem>>, vector<8x32xf32>
    %88 = arith.truncf %87 : vector<8x32xf32> to vector<8x32xbf16>
    %c0_32 = arith.constant 0 : index
    %c0_33 = arith.constant 0 : index
    %89 = vector.load %arg5[%c0_32, %c0_33] : memref<32x32xbf16, #tpu.memory_space<vmem>>, vector<32x32xbf16>
    %cst_34 = arith.constant dense<0.000000e+00> : vector<8x32xf32>
    %90 = tpu.matmul %88, %89, %cst_34 {dimension_numbers = #tpu.dot_dimension_numbers<[1], [0], [0], [1], [0, 0, 1, 1], [], []>} : vector<8x32xbf16>, vector<32x32xbf16>, vector<8x32xf32> -> vector<8x32xf32>
    %c0_35 = arith.constant 0 : index
    %c0_36 = arith.constant 0 : index
    %91 = vector.load %arg6[%c0_35, %c0_36] : memref<1x32xf32, #tpu.memory_space<vmem>>, vector<1x32xf32>
    %92 = vector.broadcast %91 : vector<1x32xf32> to vector<8x32xf32>
    %93 = arith.addf %90, %92 : vector<8x32xf32>
    %94 = arith.addf %93, %1 : vector<8x32xf32>
    %c0_37 = arith.constant 0 : index
    %c0_38 = arith.constant 0 : index
    %95 = vector.load %arg7[%c0_37, %c0_38] : memref<1x32xf32, #tpu.memory_space<vmem>>, vector<1x32xf32>
    %c0_39 = arith.constant 0 : index
    %c0_40 = arith.constant 0 : index
    %96 = vector.load %arg8[%c0_39, %c0_40] : memref<1x32xf32, #tpu.memory_space<vmem>>, vector<1x32xf32>
    %cst_41 = arith.constant dense<0.000000e+00> : vector<8xf32>
    %97 = vector.multi_reduction <add>, %94, %cst_41 [1] : vector<8x32xf32> to vector<8xf32>
    %98 = vector.shape_cast %97 : vector<8xf32> to vector<8x1xf32>
    %cst_42 = arith.constant 3.200000e+01 : f32
    %99 = vector.broadcast %cst_42 : f32 to vector<8x1xf32>
    %100 = arith.divf %98, %99 : vector<8x1xf32>
    %101 = vector.broadcast %100 : vector<8x1xf32> to vector<8x32xf32>
    %102 = arith.subf %94, %101 : vector<8x32xf32>
    %103 = arith.mulf %102, %102 : vector<8x32xf32>
    %cst_43 = arith.constant dense<0.000000e+00> : vector<8xf32>
    %104 = vector.multi_reduction <add>, %103, %cst_43 [1] : vector<8x32xf32> to vector<8xf32>
    %105 = vector.shape_cast %104 : vector<8xf32> to vector<8x1xf32>
    %cst_44 = arith.constant 3.200000e+01 : f32
    %106 = vector.broadcast %cst_44 : f32 to vector<8x1xf32>
    %107 = arith.divf %105, %106 : vector<8x1xf32>
    %cst_45 = arith.constant 9.99999974E-6 : f32
    %108 = vector.broadcast %cst_45 : f32 to vector<8x1xf32>
    %109 = arith.addf %107, %108 : vector<8x1xf32>
    %110 = math.rsqrt %109 : vector<8x1xf32>
    %111 = vector.broadcast %110 : vector<8x1xf32> to vector<8x32xf32>
    %112 = arith.mulf %102, %111 : vector<8x32xf32>
    %113 = vector.broadcast %95 : vector<1x32xf32> to vector<8x32xf32>
    %114 = arith.mulf %112, %113 : vector<8x32xf32>
    %115 = vector.broadcast %96 : vector<1x32xf32> to vector<8x32xf32>
    %116 = arith.addf %114, %115 : vector<8x32xf32>
    %117 = arith.truncf %116 : vector<8x32xf32> to vector<8x32xbf16>
    %c0_46 = arith.constant 0 : index
    %c0_47 = arith.constant 0 : index
    %118 = vector.load %arg9[%c0_46, %c0_47] : memref<32x128xbf16, #tpu.memory_space<vmem>>, vector<32x128xbf16>
    %cst_48 = arith.constant dense<0.000000e+00> : vector<8x128xf32>
    %119 = tpu.matmul %117, %118, %cst_48 {dimension_numbers = #tpu.dot_dimension_numbers<[1], [0], [0], [1], [0, 0, 1, 1], [], []>} : vector<8x32xbf16>, vector<32x128xbf16>, vector<8x128xf32> -> vector<8x128xf32>
    %c0_49 = arith.constant 0 : index
    %c0_50 = arith.constant 0 : index
    %120 = vector.load %arg10[%c0_49, %c0_50] : memref<1x128xf32, #tpu.memory_space<vmem>>, vector<1x128xf32>
    %121 = vector.broadcast %120 : vector<1x128xf32> to vector<8x128xf32>
    %122 = arith.addf %119, %121 : vector<8x128xf32>
    %cst_51 = arith.constant 5.000000e-01 : f32
    %123 = vector.broadcast %cst_51 : f32 to vector<8x128xf32>
    %124 = arith.mulf %123, %122 : vector<8x128xf32>
    %cst_52 = arith.constant 4.471500e-02 : f32
    %125 = vector.broadcast %cst_52 : f32 to vector<8x128xf32>
    %126 = arith.mulf %125, %122 : vector<8x128xf32>
    %127 = arith.mulf %126, %122 : vector<8x128xf32>
    %128 = arith.mulf %127, %122 : vector<8x128xf32>
    %129 = arith.addf %122, %128 : vector<8x128xf32>
    %cst_53 = arith.constant 0.797884583 : f32
    %130 = vector.broadcast %cst_53 : f32 to vector<8x128xf32>
    %131 = arith.mulf %130, %129 : vector<8x128xf32>
    %132 = math.tanh %131 : vector<8x128xf32>
    %cst_54 = arith.constant 1.000000e+00 : f32
    %133 = vector.broadcast %cst_54 : f32 to vector<8x128xf32>
    %134 = arith.addf %133, %132 : vector<8x128xf32>
    %135 = arith.mulf %124, %134 : vector<8x128xf32>
    %136 = arith.truncf %135 : vector<8x128xf32> to vector<8x128xbf16>
    %c0_55 = arith.constant 0 : index
    %c0_56 = arith.constant 0 : index
    %137 = vector.load %arg11[%c0_55, %c0_56] : memref<128x32xbf16, #tpu.memory_space<vmem>>, vector<128x32xbf16>
    %cst_57 = arith.constant dense<0.000000e+00> : vector<8x32xf32>
    %138 = tpu.matmul %136, %137, %cst_57 {dimension_numbers = #tpu.dot_dimension_numbers<[1], [0], [0], [1], [0, 0, 1, 1], [], []>} : vector<8x128xbf16>, vector<128x32xbf16>, vector<8x32xf32> -> vector<8x32xf32>
    %c0_58 = arith.constant 0 : index
    %c0_59 = arith.constant 0 : index
    %139 = vector.load %arg12[%c0_58, %c0_59] : memref<1x32xf32, #tpu.memory_space<vmem>>, vector<1x32xf32>
    %140 = vector.broadcast %139 : vector<1x32xf32> to vector<8x32xf32>
    %141 = arith.addf %138, %140 : vector<8x32xf32>
    %142 = arith.addf %141, %116 : vector<8x32xf32>
    %c0_60 = arith.constant 0 : index
    %c0_61 = arith.constant 0 : index
    %143 = vector.load %arg13[%c0_60, %c0_61] : memref<1x32xf32, #tpu.memory_space<vmem>>, vector<1x32xf32>
    %c0_62 = arith.constant 0 : index
    %c0_63 = arith.constant 0 : index
    %144 = vector.load %arg14[%c0_62, %c0_63] : memref<1x32xf32, #tpu.memory_space<vmem>>, vector<1x32xf32>
    %cst_64 = arith.constant dense<0.000000e+00> : vector<8xf32>
    %145 = vector.multi_reduction <add>, %142, %cst_64 [1] : vector<8x32xf32> to vector<8xf32>
    %146 = vector.shape_cast %145 : vector<8xf32> to vector<8x1xf32>
    %cst_65 = arith.constant 3.200000e+01 : f32
    %147 = vector.broadcast %cst_65 : f32 to vector<8x1xf32>
    %148 = arith.divf %146, %147 : vector<8x1xf32>
    %149 = vector.broadcast %148 : vector<8x1xf32> to vector<8x32xf32>
    %150 = arith.subf %142, %149 : vector<8x32xf32>
    %151 = arith.mulf %150, %150 : vector<8x32xf32>
    %cst_66 = arith.constant dense<0.000000e+00> : vector<8xf32>
    %152 = vector.multi_reduction <add>, %151, %cst_66 [1] : vector<8x32xf32> to vector<8xf32>
    %153 = vector.shape_cast %152 : vector<8xf32> to vector<8x1xf32>
    %cst_67 = arith.constant 3.200000e+01 : f32
    %154 = vector.broadcast %cst_67 : f32 to vector<8x1xf32>
    %155 = arith.divf %153, %154 : vector<8x1xf32>
    %cst_68 = arith.constant 9.99999974E-6 : f32
    %156 = vector.broadcast %cst_68 : f32 to vector<8x1xf32>
    %157 = arith.addf %155, %156 : vector<8x1xf32>
    %158 = math.rsqrt %157 : vector<8x1xf32>
    %159 = vector.broadcast %158 : vector<8x1xf32> to vector<8x32xf32>
    %160 = arith.mulf %150, %159 : vector<8x32xf32>
    %161 = vector.broadcast %143 : vector<1x32xf32> to vector<8x32xf32>
    %162 = arith.mulf %160, %161 : vector<8x32xf32>
    %163 = vector.broadcast %144 : vector<1x32xf32> to vector<8x32xf32>
    %164 = arith.addf %162, %163 : vector<8x32xf32>
    %c0_69 = arith.constant 0 : index
    %c0_70 = arith.constant 0 : index
    %c0_71 = arith.constant 0 : index
    %165 = vector.load %arg15[%c0_69, %c0_70, %c0_71] : memref<1x8x32xf32, #tpu.memory_space<vmem>>, vector<1x8x32xf32>
    %166 = vector.shape_cast %165 : vector<1x8x32xf32> to vector<8x32xf32>
    %167 = vector.shape_cast %164 : vector<8x32xf32> to vector<1x8x32xf32>
    tpu.vector_store %arg15[%c0_69, %c0_70, %c0_71], %167 {strides = array<i32>} : memref<1x8x32xf32, #tpu.memory_space<vmem>>, vector<1x8x32xf32>,
    return
  }
  func.func @transform_0(%arg0: i32) -> (i32, i32, i32) {
    %c0_i32 = arith.constant 0 : i32
    %c0_i32_0 = arith.constant 0 : i32
    %c0_i32_1 = arith.constant 0 : i32
    return %arg0, %c0_i32, %c0_i32_0 : i32, i32, i32
  }
  func.func @transform_1(%arg0: i32) -> (i32, i32, i32) {
    %c0_i32 = arith.constant 0 : i32
    %c0_i32_0 = arith.constant 0 : i32
    %c0_i32_1 = arith.constant 0 : i32
    return %arg0, %c0_i32, %c0_i32_0 : i32, i32, i32
  }
  func.func @transform_2(%arg0: i32) -> (i32, i32) {
    %c0_i32 = arith.constant 0 : i32
    %c0_i32_0 = arith.constant 0 : i32
    %c0_i32_1 = arith.constant 0 : i32
    return %c0_i32, %c0_i32_0 : i32, i32
  }
  func.func @transform_3(%arg0: i32) -> (i32, i32) {
    %c0_i32 = arith.constant 0 : i32
    %c0_i32_0 = arith.constant 0 : i32
    %c0_i32_1 = arith.constant 0 : i32
    return %c0_i32, %c0_i32_0 : i32, i32
  }
  func.func @transform_4(%arg0: i32) -> (i32, i32) {
    %c0_i32 = arith.constant 0 : i32
    %c0_i32_0 = arith.constant 0 : i32
    %c0_i32_1 = arith.constant 0 : i32
    return %c0_i32, %c0_i32_0 : i32, i32
  }
  func.func @transform_5(%arg0: i32) -> (i32, i32) {
    %c0_i32 = arith.constant 0 : i32
    %c0_i32_0 = arith.constant 0 : i32
    %c0_i32_1 = arith.constant 0 : i32
    return %c0_i32, %c0_i32_0 : i32, i32
  }
  func.func @transform_6(%arg0: i32) -> (i32, i32) {
    %c0_i32 = arith.constant 0 : i32
    %c0_i32_0 = arith.constant 0 : i32
    %c0_i32_1 = arith.constant 0 : i32
    return %c0_i32, %c0_i32_0 : i32, i32
  }
  func.func @transform_7(%arg0: i32) -> (i32, i32) {
    %c0_i32 = arith.constant 0 : i32
    %c0_i32_0 = arith.constant 0 : i32
    %c0_i32_1 = arith.constant 0 : i32
    return %c0_i32, %c0_i32_0 : i32, i32
  }
  func.func @transform_8(%arg0: i32) -> (i32, i32) {
    %c0_i32 = arith.constant 0 : i32
    %c0_i32_0 = arith.constant 0 : i32
    %c0_i32_1 = arith.constant 0 : i32
    return %c0_i32, %c0_i32_0 : i32, i32
  }
  func.func @transform_9(%arg0: i32) -> (i32, i32) {
    %c0_i32 = arith.constant 0 : i32
    %c0_i32_0 = arith.constant 0 : i32
    %c0_i32_1 = arith.constant 0 : i32
    return %c0_i32, %c0_i32_0 : i32, i32
  }
  func.func @transform_10(%arg0: i32) -> (i32, i32) {
    %c0_i32 = arith.constant 0 : i32
    %c0_i32_0 = arith.constant 0 : i32
    %c0_i32_1 = arith.constant 0 : i32
    return %c0_i32, %c0_i32_0 : i32, i32
  }
  func.func @transform_11(%arg0: i32) -> (i32, i32) {
    %c0_i32 = arith.constant 0 : i32
    %c0_i32_0 = arith.constant 0 : i32
    %c0_i32_1 = arith.constant 0 : i32
    return %c0_i32, %c0_i32_0 : i32, i32
  }
  func.func @transform_12(%arg0: i32) -> (i32, i32) {
    %c0_i32 = arith.constant 0 : i32
    %c0_i32_0 = arith.constant 0 : i32
    %c0_i32_1 = arith.constant 0 : i32
    return %c0_i32, %c0_i32_0 : i32, i32
  }
  func.func @transform_13(%arg0: i32) -> (i32, i32) {
    %c0_i32 = arith.constant 0 : i32
    %c0_i32_0 = arith.constant 0 : i32
    %c0_i32_1 = arith.constant 0 : i32
    return %c0_i32, %c0_i32_0 : i32, i32
  }
  func.func @transform_14(%arg0: i32) -> (i32, i32, i32) {
    %c0_i32 = arith.constant 0 : i32
    %c0_i32_0 = arith.constant 0 : i32
    %c0_i32_1 = arith.constant 0 : i32
    return %arg0, %c0_i32, %c0_i32_0 : i32, i32, i32
  }
}

</mosaic_0001>

<llo_original>
// kernel: tpu_custom_call.1
$region0: #{tpu_custom_call.1}
  #allocation0 [shape = 'u32[]', space=smem, size = 0x4, offset = 0x4, fixed_abs, tag = 'smem constant byte address 0x4 - core index']
  #allocation1 [shape = 'u32[144,128]{1,0:T(1,128)}', space=vmem, size = 0x12000, scoped, tag = 'internal scratch']
  #allocation2 [shape = 'f32[8,32]{1,0:T(8,128)}', space=vmem, size = 0x1000, scoped, tag = 'scratch operand']
  %s0 = inlined_call_operand.hbm [shape: f32[2,8,32], index: 0, kind: input, shape index: {}]
  %s1 = inlined_call_operand.hbm [shape: f32[2,1,8], index: 1, kind: input, shape index: {}]
  %s2 = inlined_call_operand.hbm [shape: bf16[32,96], index: 2, kind: input, shape index: {}]
  %s3 = inlined_call_operand.hbm [shape: f32[1,96], index: 3, kind: input, shape index: {}]
  %s4 = inlined_call_operand.hbm [shape: bf16[32,32], index: 4, kind: input, shape index: {}]
  %s5 = inlined_call_operand.hbm [shape: f32[1,32], index: 5, kind: input, shape index: {}]
  %s6 = inlined_call_operand.hbm [shape: f32[1,32], index: 6, kind: input, shape index: {}]
  %s7 = inlined_call_operand.hbm [shape: f32[1,32], index: 7, kind: input, shape index: {}]
  %s8 = inlined_call_operand.hbm [shape: bf16[32,128], index: 8, kind: input, shape index: {}]
  %s9 = inlined_call_operand.hbm [shape: f32[1,128], index: 9, kind: input, shape index: {}]
  %s10 = inlined_call_operand.hbm [shape: bf16[128,32], index: 10, kind: input, shape index: {}]
  %s11 = inlined_call_operand.hbm [shape: f32[1,32], index: 11, kind: input, shape index: {}]
  %s12 = inlined_call_operand.hbm [shape: f32[1,32], index: 12, kind: input, shape index: {}]
  %s13 = inlined_call_operand.hbm [shape: f32[1,32], index: 13, kind: input, shape index: {}]
  %s14 = inlined_call_operand.hbm [shape: f32[2,8,32], index: 14, kind: output, shape index: {}]
  %s15 = sld [smem:[#allocation0]]
  $region145: #{tpu_custom_call.1} parent=0
    _
  %s17 = ssub.s32 1, %s15
  %s18 = scalar_select 0, %s17, %s15
  $region1: #{tpu_custom_call.1} parent=0
    #allocation3 [shape = 'u8[8192]{0}', space=vmem, size = 0x2000, scoped, tag = 'input window, operand 0']
    #allocation4 [shape = 's32[2]{0}', space=sflag, size = 0x8, scoped, tag = 'scoped memory for tpu_custom_call.1']
    #allocation5 [shape = 's32[2]{0}', space=sflag, size = 0x8, scoped, tag = 'scoped memory for tpu_custom_call.1']
    #allocation6 [shape = 'u8[1024]{0}', space=vmem, size = 0x400, scoped, tag = 'input window, operand 1']
    #allocation7 [shape = 's32[2]{0}', space=sflag, size = 0x8, scoped, tag = 'scoped memory for tpu_custom_call.1']
    #allocation8 [shape = 'u8[8192]{0}', space=vmem, size = 0x2000, scoped, tag = 'input window, operand 2, single buffered']
    #allocation9 [shape = 'u8[512]{0}', space=vmem, size = 0x400, scoped, tag = 'input window, operand 3, single buffered']
    #allocation10 [shape = 's32[1]{0}', space=sflag, size = 0x4, scoped, tag = 'scoped memory for tpu_custom_call.1']
    #allocation11 [shape = 'u8[8192]{0}', space=vmem, size = 0x2000, scoped, tag = 'input window, operand 4, single buffered']
    #allocation12 [shape = 'u8[512]{0}', space=vmem, size = 0x400, scoped, tag = 'input window, operand 5, single buffered']
    #allocation13 [shape = 's32[1]{0}', space=sflag, size = 0x4, scoped, tag = 'scoped memory for tpu_custom_call.1']
    #allocation14 [shape = 'u8[512]{0}', space=vmem, size = 0x400, scoped, tag = 'input window, operand 6, single buffered']
    #allocation15 [shape = 'u8[512]{0}', space=vmem, size = 0x400, scoped, tag = 'input window, operand 7, single buffered']
    #allocation16 [shape = 's32[1]{0}', space=sflag, size = 0x4, scoped, tag = 'scoped memory for tpu_custom_call.1']
    #allocation17 [shape = 'u8[8192]{0}', space=vmem, size = 0x2000, scoped, tag = 'input window, operand 8, single buffered']
    #allocation18 [shape = 'u8[512]{0}', space=vmem, size = 0x400, scoped, tag = 'input window, operand 9, single buffered']
    #allocation19 [shape = 's32[1]{0}', space=sflag, size = 0x4, scoped, tag = 'scoped memory for tpu_custom_call.1']
    #allocation20 [shape = 'u8[32768]{0}', space=vmem, size = 0x8000, scoped, tag = 'input window, operand 10, single buffered']
    #allocation21 [shape = 'u8[512]{0}', space=vmem, size = 0x400, scoped, tag = 'input window, operand 11, single buffered']
    #allocation22 [shape = 's32[1]{0}', space=sflag, size = 0x4, scoped, tag = 'scoped memory for tpu_custom_call.1']
    #allocation23 [shape = 'u8[512]{0}', space=vmem, size = 0x400, scoped, tag = 'input window, operand 12, single buffered']
    #allocation24 [shape = 'u8[512]{0}', space=vmem, size = 0x400, scoped, tag = 'input window, operand 13, single buffered']
    #allocation25 [shape = 's32[1]{0}', space=sflag, size = 0x4, scoped, tag = 'scoped memory for tpu_custom_call.1']
    #allocation26 [shape = 'u8[8192]{0}', space=vmem, size = 0x2000, scoped, tag = 'output window, operand 0']
    %19 = vsyncpa [#allocation4], 0
    %s20 = scalar_lea.sflag [#allocation4], 1
    %21 = vsyncpa %s20, 0
    %22 = vsyncpa [#allocation7], 0
    %s23 = scalar_lea.sflag [#allocation7], 1
    %24 = vsyncpa %s23, 0
    %25 = vsyncpa [#allocation10], 0
    %26 = vsyncpa [#allocation13], 0
    %27 = vsyncpa [#allocation16], 0
    %28 = vsyncpa [#allocation19], 0
    %29 = vsyncpa [#allocation22], 0
    %30 = vsyncpa [#allocation25], 0
    %31 = vsyncpa [#allocation5], 0
    %s32 = scalar_lea.sflag [#allocation5], 1
    %33 = vsyncpa %s32, 0
    loop: start=0, step=1, limit=4
    $region2: #{tpu_custom_call.1} parent=1 // loop_pre_header
      _
    $region3: #{tpu_custom_call.1} parent=1 // loop_header
      %s35 = sphi 0, %s39
      %p36 = scmp.ge.s32.totalorder %s35, 4
      %s45 = sphi 0, %s47
      %s48 = sphi 0, %s45
      %s49 = sphi 0, %s48
      %s65 = sphi 0, %s49
      %s71 = sphi 0, %s73
      %s74 = sphi 0, %s71
      %s75 = sphi 0, %s74
      %s91 = sphi 0, %s75
      %s95 = sphi 0, %s95
      %s97 = sphi 0, %s95
      %s98 = sphi 0, %s97
      %s112 = sphi 0, %s98
      %s116 = sphi 0, %s116
      %s118 = sphi 0, %s116
      %s119 = sphi 0, %s118
      %s133 = sphi 0, %s119
      %s137 = sphi 0, %s137
      %s139 = sphi 0, %s137
      %s140 = sphi 0, %s139
      %s154 = sphi 0, %s140
      %s158 = sphi 0, %s158
      %s160 = sphi 0, %s158
      %s161 = sphi 0, %s160
      %s175 = sphi 0, %s161
      %s179 = sphi 0, %s179
      %s181 = sphi 0, %s179
      %s182 = sphi 0, %s181
      %s196 = sphi 0, %s182
      %s200 = sphi 0, %s200
      %s202 = sphi 0, %s200
      %s203 = sphi 0, %s202
      %s217 = sphi 0, %s203
      %s221 = sphi 0, %s221
      %s223 = sphi 0, %s221
      %s224 = sphi 0, %s223
      %s238 = sphi 0, %s224
      %s242 = sphi 0, %s242
      %s244 = sphi 0, %s242
      %s245 = sphi 0, %s244
      %s259 = sphi 0, %s245
      %s263 = sphi 0, %s263
      %s265 = sphi 0, %s263
      %s266 = sphi 0, %s265
      %s280 = sphi 0, %s266
      %s284 = sphi 0, %s284
      %s286 = sphi 0, %s284
      %s287 = sphi 0, %s286
      %s301 = sphi 0, %s287
      %s305 = sphi 0, %s305
      %s307 = sphi 0, %s305
      %s308 = sphi 0, %s307
      %s322 = sphi 0, %s308
      %s326 = sphi 0, %s326
      %s328 = sphi 0, %s326
      %s329 = sphi 0, %s328
      %s343 = sphi 0, %s329
      %s349 = sphi 0, %s351
      %s352 = sphi 0, %s349
      %s353 = sphi 0, %s352
      %s369 = sphi 0, %s353
    $region4: #{tpu_custom_call.1} parent=1 // loop_header_branch
      %38 = sbr.rel (%p36) target = $region8
    $region5: #{tpu_custom_call.1} parent=1 // loop_body
      %s40 = ssub.s32 %s35, 1
      %s41 = ssub.s32 %s35, 2
      %s42 = sadd.s32 %s35, 1
      %s43 = ssub.s32 %s35, %s42
      %p44 = scmp.eq.s32.totalorder %s43, 0
      %s46 = sadd.s32 %s45, 1
      %s47 = scalar_select %p44, %s45, %s46
      %p50 = pneg %p44
      %p51 = scmp.eq.s32.totalorder %s35, 1
      %p52 = por %p50, %p51
      %p53 = scmp.ne.s32.totalorder %s45, %s48
      %p54 = scmp.eq.s32.totalorder %s35, 0
      %p55 = por %p53, %p54
      %p56 = scmp.ne.s32.totalorder %s45, %s48
      %p57 = scmp.eq.s32.totalorder %s40, 1
      %p58 = por %p56, %p57
      %p59 = scmp.ne.s32.totalorder %s48, %s49
      %p60 = scmp.eq.s32.totalorder %s40, 0
      %p61 = por %p59, %p60
      %p62 = scmp.ne.s32.totalorder %s48, %s49
      %p63 = scmp.eq.s32.totalorder %s41, 1
      %p64 = por %p62, %p63
      %p66 = scmp.ne.s32.totalorder %s49, %s65
      %p67 = scmp.eq.s32.totalorder %s41, 0
      %p68 = por %p66, %p67
      %s69 = ssub.s32 %s35, %s42
      %p70 = scmp.eq.s32.totalorder %s69, 0
      %s72 = sadd.s32 %s71, 1
      %s73 = scalar_select %p70, %s71, %s72
      %p76 = pneg %p70
      %p77 = scmp.eq.s32.totalorder %s35, 1
      %p78 = por %p76, %p77
      %p79 = scmp.ne.s32.totalorder %s71, %s74
      %p80 = scmp.eq.s32.totalorder %s35, 0
      %p81 = por %p79, %p80
      %p82 = scmp.ne.s32.totalorder %s71, %s74
      %p83 = scmp.eq.s32.totalorder %s40, 1
      %p84 = por %p82, %p83
      %p85 = scmp.ne.s32.totalorder %s74, %s75
      %p86 = scmp.eq.s32.totalorder %s40, 0
      %p87 = por %p85, %p86
      %p88 = scmp.ne.s32.totalorder %s74, %s75
      %p89 = scmp.eq.s32.totalorder %s41, 1
      %p90 = por %p88, %p89
      %p92 = scmp.ne.s32.totalorder %s75, %s91
      %p93 = scmp.eq.s32.totalorder %s41, 0
      %p94 = por %p92, %p93
      %s96 = sadd.s32 %s95, 1
      %p99 = scmp.eq.s32.totalorder %s35, 1
      %p100 = scmp.ne.s32.totalorder %s95, %s97
      %p101 = scmp.eq.s32.totalorder %s35, 0
      %p102 = por %p100, %p101
      %p103 = scmp.ne.s32.totalorder %s95, %s97
      %p104 = scmp.eq.s32.totalorder %s40, 1
      %p105 = por %p103, %p104
      %p106 = scmp.ne.s32.totalorder %s97, %s98
      %p107 = scmp.eq.s32.totalorder %s40, 0
      %p108 = por %p106, %p107
      %p109 = scmp.ne.s32.totalorder %s97, %s98
      %p110 = scmp.eq.s32.totalorder %s41, 1
      %p111 = por %p109, %p110
      %p113 = scmp.ne.s32.totalorder %s98, %s112
      %p114 = scmp.eq.s32.totalorder %s41, 0
      %p115 = por %p113, %p114
      %s117 = sadd.s32 %s116, 1
      %p120 = scmp.eq.s32.totalorder %s35, 1
      %p121 = scmp.ne.s32.totalorder %s116, %s118
      %p122 = scmp.eq.s32.totalorder %s35, 0
      %p123 = por %p121, %p122
      %p124 = scmp.ne.s32.totalorder %s116, %s118
      %p125 = scmp.eq.s32.totalorder %s40, 1
      %p126 = por %p124, %p125
      %p127 = scmp.ne.s32.totalorder %s118, %s119
      %p128 = scmp.eq.s32.totalorder %s40, 0
      %p129 = por %p127, %p128
      %p130 = scmp.ne.s32.totalorder %s118, %s119
      %p131 = scmp.eq.s32.totalorder %s41, 1
      %p132 = por %p130, %p131
      %p134 = scmp.ne.s32.totalorder %s119, %s133
      %p135 = scmp.eq.s32.totalorder %s41, 0
      %p136 = por %p134, %p135
      %s138 = sadd.s32 %s137, 1
      %p141 = scmp.eq.s32.totalorder %s35, 1
      %p142 = scmp.ne.s32.totalorder %s137, %s139
      %p143 = scmp.eq.s32.totalorder %s35, 0
      %p144 = por %p142, %p143
      %p145 = scmp.ne.s32.totalorder %s137, %s139
      %p146 = scmp.eq.s32.totalorder %s40, 1
      %p147 = por %p145, %p146
      %p148 = scmp.ne.s32.totalorder %s139, %s140
      %p149 = scmp.eq.s32.totalorder %s40, 0
      %p150 = por %p148, %p149
      %p151 = scmp.ne.s32.totalorder %s139, %s140
      %p152 = scmp.eq.s32.totalorder %s41, 1
      %p153 = por %p151, %p152
      %p155 = scmp.ne.s32.totalorder %s140, %s154
      %p156 = scmp.eq.s32.totalorder %s41, 0
      %p157 = por %p155, %p156
      %s159 = sadd.s32 %s158, 1
      %p162 = scmp.eq.s32.totalorder %s35, 1
      %p163 = scmp.ne.s32.totalorder %s158, %s160
      %p164 = scmp.eq.s32.totalorder %s35, 0
      %p165 = por %p163, %p164
      %p166 = scmp.ne.s32.totalorder %s158, %s160
      %p167 = scmp.eq.s32.totalorder %s40, 1
      %p168 = por %p166, %p167
      %p169 = scmp.ne.s32.totalorder %s160, %s161
      %p170 = scmp.eq.s32.totalorder %s40, 0
      %p171 = por %p169, %p170
      %p172 = scmp.ne.s32.totalorder %s160, %s161
      %p173 = scmp.eq.s32.totalorder %s41, 1
      %p174 = por %p172, %p173
      %p176 = scmp.ne.s32.totalorder %s161, %s175
      %p177 = scmp.eq.s32.totalorder %s41, 0
      %p178 = por %p176, %p177
      %s180 = sadd.s32 %s179, 1
      %p183 = scmp.eq.s32.totalorder %s35, 1
      %p184 = scmp.ne.s32.totalorder %s179, %s181
      %p185 = scmp.eq.s32.totalorder %s35, 0
      %p186 = por %p184, %p185
      %p187 = scmp.ne.s32.totalorder %s179, %s181
      %p188 = scmp.eq.s32.totalorder %s40, 1
      %p189 = por %p187, %p188
      %p190 = scmp.ne.s32.totalorder %s181, %s182
      %p191 = scmp.eq.s32.totalorder %s40, 0
      %p192 = por %p190, %p191
      %p193 = scmp.ne.s32.totalorder %s181, %s182
      %p194 = scmp.eq.s32.totalorder %s41, 1
      %p195 = por %p193, %p194
      %p197 = scmp.ne.s32.totalorder %s182, %s196
      %p198 = scmp.eq.s32.totalorder %s41, 0
      %p199 = por %p197, %p198
      %s201 = sadd.s32 %s200, 1
      %p204 = scmp.eq.s32.totalorder %s35, 1
      %p205 = scmp.ne.s32.totalorder %s200, %s202
      %p206 = scmp.eq.s32.totalorder %s35, 0
      %p207 = por %p205, %p206
      %p208 = scmp.ne.s32.totalorder %s200, %s202
      %p209 = scmp.eq.s32.totalorder %s40, 1
      %p210 = por %p208, %p209
      %p211 = scmp.ne.s32.totalorder %s202, %s203
      %p212 = scmp.eq.s32.totalorder %s40, 0
      %p213 = por %p211, %p212
      %p214 = scmp.ne.s32.totalorder %s202, %s203
      %p215 = scmp.eq.s32.totalorder %s41, 1
      %p216 = por %p214, %p215
      %p218 = scmp.ne.s32.totalorder %s203, %s217
      %p219 = scmp.eq.s32.totalorder %s41, 0
      %p220 = por %p218, %p219
      %s222 = sadd.s32 %s221, 1
      %p225 = scmp.eq.s32.totalorder %s35, 1
      %p226 = scmp.ne.s32.totalorder %s221, %s223
      %p227 = scmp.eq.s32.totalorder %s35, 0
      %p228 = por %p226, %p227
      %p229 = scmp.ne.s32.totalorder %s221, %s223
      %p230 = scmp.eq.s32.totalorder %s40, 1
      %p231 = por %p229, %p230
      %p232 = scmp.ne.s32.totalorder %s223, %s224
      %p233 = scmp.eq.s32.totalorder %s40, 0
      %p234 = por %p232, %p233
      %p235 = scmp.ne.s32.totalorder %s223, %s224
      %p236 = scmp.eq.s32.totalorder %s41, 1
      %p237 = por %p235, %p236
      %p239 = scmp.ne.s32.totalorder %s224, %s238
      %p240 = scmp.eq.s32.totalorder %s41, 0
      %p241 = por %p239, %p240
      %s243 = sadd.s32 %s242, 1
      %p246 = scmp.eq.s32.totalorder %s35, 1
      %p247 = scmp.ne.s32.totalorder %s242, %s244
      %p248 = scmp.eq.s32.totalorder %s35, 0
      %p249 = por %p247, %p248
      %p250 = scmp.ne.s32.totalorder %s242, %s244
      %p251 = scmp.eq.s32.totalorder %s40, 1
      %p252 = por %p250, %p251
      %p253 = scmp.ne.s32.totalorder %s244, %s245
      %p254 = scmp.eq.s32.totalorder %s40, 0
      %p255 = por %p253, %p254
      %p256 = scmp.ne.s32.totalorder %s244, %s245
      %p257 = scmp.eq.s32.totalorder %s41, 1
      %p258 = por %p256, %p257
      %p260 = scmp.ne.s32.totalorder %s245, %s259
      %p261 = scmp.eq.s32.totalorder %s41, 0
      %p262 = por %p260, %p261
      %s264 = sadd.s32 %s263, 1
      %p267 = scmp.eq.s32.totalorder %s35, 1
      %p268 = scmp.ne.s32.totalorder %s263, %s265
      %p269 = scmp.eq.s32.totalorder %s35, 0
      %p270 = por %p268, %p269
      %p271 = scmp.ne.s32.totalorder %s263, %s265
      %p272 = scmp.eq.s32.totalorder %s40, 1
      %p273 = por %p271, %p272
      %p274 = scmp.ne.s32.totalorder %s265, %s266
      %p275 = scmp.eq.s32.totalorder %s40, 0
      %p276 = por %p274, %p275
      %p277 = scmp.ne.s32.totalorder %s265, %s266
      %p278 = scmp.eq.s32.totalorder %s41, 1
      %p279 = por %p277, %p278
      %p281 = scmp.ne.s32.totalorder %s266, %s280
      %p282 = scmp.eq.s32.totalorder %s41, 0
      %p283 = por %p281, %p282
      %s285 = sadd.s32 %s284, 1
      %p288 = scmp.eq.s32.totalorder %s35, 1
      %p289 = scmp.ne.s32.totalorder %s284, %s286
      %p290 = scmp.eq.s32.totalorder %s35, 0
      %p291 = por %p289, %p290
      %p292 = scmp.ne.s32.totalorder %s284, %s286
      %p293 = scmp.eq.s32.totalorder %s40, 1
      %p294 = por %p292, %p293
      %p295 = scmp.ne.s32.totalorder %s286, %s287
      %p296 = scmp.eq.s32.totalorder %s40, 0
      %p297 = por %p295, %p296
      %p298 = scmp.ne.s32.totalorder %s286, %s287
      %p299 = scmp.eq.s32.totalorder %s41, 1
      %p300 = por %p298, %p299
      %p302 = scmp.ne.s32.totalorder %s287, %s301
      %p303 = scmp.eq.s32.totalorder %s41, 0
      %p304 = por %p302, %p303
      %s306 = sadd.s32 %s305, 1
      %p309 = scmp.eq.s32.totalorder %s35, 1
      %p310 = scmp.ne.s32.totalorder %s305, %s307
      %p311 = scmp.eq.s32.totalorder %s35, 0
      %p312 = por %p310, %p311
      %p313 = scmp.ne.s32.totalorder %s305, %s307
      %p314 = scmp.eq.s32.totalorder %s40, 1
      %p315 = por %p313, %p314
      %p316 = scmp.ne.s32.totalorder %s307, %s308
      %p317 = scmp.eq.s32.totalorder %s40, 0
      %p318 = por %p316, %p317
      %p319 = scmp.ne.s32.totalorder %s307, %s308
      %p320 = scmp.eq.s32.totalorder %s41, 1
      %p321 = por %p319, %p320
      %p323 = scmp.ne.s32.totalorder %s308, %s322
      %p324 = scmp.eq.s32.totalorder %s41, 0
      %p325 = por %p323, %p324
      %s327 = sadd.s32 %s326, 1
      %p330 = scmp.eq.s32.totalorder %s35, 1
      %p331 = scmp.ne.s32.totalorder %s326, %s328
      %p332 = scmp.eq.s32.totalorder %s35, 0
      %p333 = por %p331, %p332
      %p334 = scmp.ne.s32.totalorder %s326, %s328
      %p335 = scmp.eq.s32.totalorder %s40, 1
      %p336 = por %p334, %p335
      %p337 = scmp.ne.s32.totalorder %s328, %s329
      %p338 = scmp.eq.s32.totalorder %s40, 0
      %p339 = por %p337, %p338
      %p340 = scmp.ne.s32.totalorder %s328, %s329
      %p341 = scmp.eq.s32.totalorder %s41, 1
      %p342 = por %p340, %p341
      %p344 = scmp.ne.s32.totalorder %s329, %s343
      %p345 = scmp.eq.s32.totalorder %s41, 0
      %p346 = por %p344, %p345
      %s347 = ssub.s32 %s35, %s42
      %p348 = scmp.eq.s32.totalorder %s347, 0
      %s350 = sadd.s32 %s349, 1
      %s351 = scalar_select %p348, %s349, %s350
      %p354 = pneg %p348
      %p355 = scmp.eq.s32.totalorder %s35, 1
      %p356 = por %p354, %p355
      %p357 = scmp.ne.s32.totalorder %s349, %s352
      %p358 = scmp.eq.s32.totalorder %s35, 0
      %p359 = por %p357, %p358
      %p360 = scmp.ne.s32.totalorder %s349, %s352
      %p361 = scmp.eq.s32.totalorder %s40, 1
      %p362 = por %p360, %p361
      %p363 = scmp.ne.s32.totalorder %s352, %s353
      %p364 = scmp.eq.s32.totalorder %s40, 0
      %p365 = por %p363, %p364
      %p366 = scmp.ne.s32.totalorder %s352, %s353
      %p367 = scmp.eq.s32.totalorder %s41, 1
      %p368 = por %p366, %p367
      %p370 = scmp.ne.s32.totalorder %s353, %s369
      %p371 = scmp.eq.s32.totalorder %s41, 0
      %p372 = por %p370, %p371
      %p373 = scmp.le.s32.totalorder 1, %s35
      %p374 = scmp.lt.s32.totalorder %s35, 3
      %p375 = pnand %p373, %p374
      %p376 = pneg %p375
      // Predicated region
      $region9: #{tpu_custom_call.1} parent=5 // pred_check
        _
      $region10: #{tpu_custom_call.1} parent=5 // pred_check_branch
        %378 = sbr.rel (%p375) target = $region12
      $region11: #{tpu_custom_call.1} parent=5 // pred_region
        %s379 = ssub.s32 %s35, 1
        // Predicated region
        $region13: #{tpu_custom_call.1} parent=11 // pred_check
          %p380 = pneg %p108
        $region14: #{tpu_custom_call.1} parent=11 // pred_check_branch
          %382 = sbr.rel (%p380) target = $region16
        $region15: #{tpu_custom_call.1} parent=11 // pred_region
          %s384 = ssub.s32 256, 256
          %385 = vsyncadd [#allocation7], %s384
          %s386 = sshll.u32 [#allocation8], 4
          %s387 = int_to_ptr.vmem [resolvable:$true] %s386
          %392 = dma.hbm_to_vmem [thread:$0]  %s2, 256, %s387, [#allocation7], 64, 64, 4
        $region16: #{tpu_custom_call.1} parent=11 // pred_fallthru
          _
        // Predicated region
        $region17: #{tpu_custom_call.1} parent=11 // pred_check
          %p393 = pneg %p129
        $region18: #{tpu_custom_call.1} parent=11 // pred_check_branch
          %395 = sbr.rel (%p393) target = $region20
        $region19: #{tpu_custom_call.1} parent=11 // pred_region
          %s397 = ssub.s32 16, 16
          %398 = vsyncadd [#allocation10], %s397
          %s400 = sshll.u32 [#allocation9], 4
          %s401 = int_to_ptr.vmem [resolvable:$true] %s400
          %403 = dma.hbm_to_vmem [thread:$0]  %s3, 16, %s401, [#allocation10]
        $region20: #{tpu_custom_call.1} parent=11 // pred_fallthru
          _
        // Predicated region
        $region21: #{tpu_custom_call.1} parent=11 // pred_check
          %p404 = pneg %p150
        $region22: #{tpu_custom_call.1} parent=11 // pred_check_branch
          %406 = sbr.rel (%p404) target = $region24
        $region23: #{tpu_custom_call.1} parent=11 // pred_region
          %s408 = ssub.s32 256, 256
          %409 = vsyncadd [#allocation10], %s408
          %s410 = sshll.u32 [#allocation11], 4
          %s411 = int_to_ptr.vmem [resolvable:$true] %s410
          %416 = dma.hbm_to_vmem [thread:$0]  %s4, 256, %s411, [#allocation10], 64, 64, 4
        $region24: #{tpu_custom_call.1} parent=11 // pred_fallthru
          _
        // Predicated region
        $region25: #{tpu_custom_call.1} parent=11 // pred_check
          %p417 = pneg %p171
        $region26: #{tpu_custom_call.1} parent=11 // pred_check_branch
          %419 = sbr.rel (%p417) target = $region28
        $region27: #{tpu_custom_call.1} parent=11 // pred_region
          %s421 = ssub.s32 16, 16
          %422 = vsyncadd [#allocation13], %s421
          %s424 = sshll.u32 [#allocation12], 4
          %s425 = int_to_ptr.vmem [resolvable:$true] %s424
          %427 = dma.hbm_to_vmem [thread:$0]  %s5, 16, %s425, [#allocation13]
        $region28: #{tpu_custom_call.1} parent=11 // pred_fallthru
          _
        // Predicated region
        $region29: #{tpu_custom_call.1} parent=11 // pred_check
          %p428 = pneg %p192
        $region30: #{tpu_custom_call.1} parent=11 // pred_check_branch
          %430 = sbr.rel (%p428) target = $region32
        $region31: #{tpu_custom_call.1} parent=11 // pred_region
          %s432 = ssub.s32 16, 16
          %433 = vsyncadd [#allocation13], %s432
          %s435 = sshll.u32 [#allocation14], 4
          %s436 = int_to_ptr.vmem [resolvable:$true] %s435
          %438 = dma.hbm_to_vmem [thread:$0]  %s6, 16, %s436, [#allocation13]
        $region32: #{tpu_custom_call.1} parent=11 // pred_fallthru
          _
        // Predicated region
        $region33: #{tpu_custom_call.1} parent=11 // pred_check
          %p439 = pneg %p213
        $region34: #{tpu_custom_call.1} parent=11 // pred_check_branch
          %441 = sbr.rel (%p439) target = $region36
        $region35: #{tpu_custom_call.1} parent=11 // pred_region
          %s443 = ssub.s32 16, 16
          %444 = vsyncadd [#allocation16], %s443
          %s446 = sshll.u32 [#allocation15], 4
          %s447 = int_to_ptr.vmem [resolvable:$true] %s446
          %449 = dma.hbm_to_vmem [thread:$0]  %s7, 16, %s447, [#allocation16]
        $region36: #{tpu_custom_call.1} parent=11 // pred_fallthru
          _
        // Predicated region
        $region37: #{tpu_custom_call.1} parent=11 // pred_check
          %p450 = pneg %p234
        $region38: #{tpu_custom_call.1} parent=11 // pred_check_branch
          %452 = sbr.rel (%p450) target = $region40
        $region39: #{tpu_custom_call.1} parent=11 // pred_region
          %s454 = ssub.s32 256, 256
          %455 = vsyncadd [#allocation16], %s454
          %s456 = sshll.u32 [#allocation17], 4
          %s457 = int_to_ptr.vmem [resolvable:$true] %s456
          %462 = dma.hbm_to_vmem [thread:$0]  %s8, 256, %s457, [#allocation16], 64, 64, 4
        $region40: #{tpu_custom_call.1} parent=11 // pred_fallthru
          _
        // Predicated region
        $region41: #{tpu_custom_call.1} parent=11 // pred_check
          %p463 = pneg %p255
        $region42: #{tpu_custom_call.1} parent=11 // pred_check_branch
          %465 = sbr.rel (%p463) target = $region44
        $region43: #{tpu_custom_call.1} parent=11 // pred_region
          %s467 = ssub.s32 16, 16
          %468 = vsyncadd [#allocation19], %s467
          %s470 = sshll.u32 [#allocation18], 4
          %s471 = int_to_ptr.vmem [resolvable:$true] %s470
          %473 = dma.hbm_to_vmem [thread:$0]  %s9, 16, %s471, [#allocation19]
        $region44: #{tpu_custom_call.1} parent=11 // pred_fallthru
          _
        // Predicated region
        $region45: #{tpu_custom_call.1} parent=11 // pred_check
          %p474 = pneg %p276
        $region46: #{tpu_custom_call.1} parent=11 // pred_check_branch
          %476 = sbr.rel (%p474) target = $region48
        $region47: #{tpu_custom_call.1} parent=11 // pred_region
          %s478 = ssub.s32 1024, 1024
          %479 = vsyncadd [#allocation19], %s478
          %s480 = sshll.u32 [#allocation20], 4
          %s481 = int_to_ptr.vmem [resolvable:$true] %s480
          %486 = dma.hbm_to_vmem [thread:$0]  %s10, 1024, %s481, [#allocation19], 64, 64, 4
        $region48: #{tpu_custom_call.1} parent=11 // pred_fallthru
          _
        // Predicated region
        $region49: #{tpu_custom_call.1} parent=11 // pred_check
          %p487 = pneg %p297
        $region50: #{tpu_custom_call.1} parent=11 // pred_check_branch
          %489 = sbr.rel (%p487) target = $region52
        $region51: #{tpu_custom_call.1} parent=11 // pred_region
          %s491 = ssub.s32 16, 16
          %492 = vsyncadd [#allocation22], %s491
          %s494 = sshll.u32 [#allocation21], 4
          %s495 = int_to_ptr.vmem [resolvable:$true] %s494
          %497 = dma.hbm_to_vmem [thread:$0]  %s11, 16, %s495, [#allocation22]
        $region52: #{tpu_custom_call.1} parent=11 // pred_fallthru
          _
        // Predicated region
        $region53: #{tpu_custom_call.1} parent=11 // pred_check
          %p498 = pneg %p318
        $region54: #{tpu_custom_call.1} parent=11 // pred_check_branch
          %500 = sbr.rel (%p498) target = $region56
        $region55: #{tpu_custom_call.1} parent=11 // pred_region
          %s502 = ssub.s32 16, 16
          %503 = vsyncadd [#allocation22], %s502
          %s505 = sshll.u32 [#allocation23], 4
          %s506 = int_to_ptr.vmem [resolvable:$true] %s505
          %508 = dma.hbm_to_vmem [thread:$0]  %s12, 16, %s506, [#allocation22]
        $region56: #{tpu_custom_call.1} parent=11 // pred_fallthru
          _
        // Predicated region
        $region57: #{tpu_custom_call.1} parent=11 // pred_check
          %p509 = pneg %p339
        $region58: #{tpu_custom_call.1} parent=11 // pred_check_branch
          %511 = sbr.rel (%p509) target = $region60
        $region59: #{tpu_custom_call.1} parent=11 // pred_region
          %s513 = ssub.s32 16, 16
          %514 = vsyncadd [#allocation25], %s513
          %s516 = sshll.u32 [#allocation24], 4
          %s517 = int_to_ptr.vmem [resolvable:$true] %s516
          %519 = dma.hbm_to_vmem [thread:$0]  %s13, 16, %s517, [#allocation25]
        $region60: #{tpu_custom_call.1} parent=11 // pred_fallthru
          _
      $region12: #{tpu_custom_call.1} parent=5 // pred_fallthru
        _
      %p520 = scmp.lt.s32.totalorder %s35, 2
      // Predicated region
      $region61: #{tpu_custom_call.1} parent=5 // pred_check
        %p521 = pneg %p520
      $region62: #{tpu_custom_call.1} parent=5 // pred_check_branch
        %523 = sbr.rel (%p521) target = $region64
      $region63: #{tpu_custom_call.1} parent=5 // pred_region
        // Predicated region
        $region65: #{tpu_custom_call.1} parent=63 // pred_check
          %p524 = pneg %p55
        $region66: #{tpu_custom_call.1} parent=63 // pred_check_branch
          %526 = sbr.rel (%p524) target = $region68
        $region67: #{tpu_custom_call.1} parent=63 // pred_region
          %s527 = sand.u32 %s45, 1
          %s528 = scalar_lea.sflag [#allocation4], %s527
          %s529 = sand.u32 %s45, 1
          %s530 = smul.addr %s529, 8
          %s531 = scalar_lea.vmem [#allocation3], %s530
          %s533 = ssub.s32 128, 128
          %534 = vsyncadd %s528, %s533
          %s535 = smul.addr %s35, 128
          %s536 = scalar_lea.hbm %s0, %s535
          %s538 = sshll.u32 %s531, 4
          %s539 = int_to_ptr.vmem [resolvable:$true] %s538
          %541 = dma.hbm_to_vmem [thread:$0]  %s536, 128, %s539, %s528
        $region68: #{tpu_custom_call.1} parent=63 // pred_fallthru
          _
        // Predicated region
        $region69: #{tpu_custom_call.1} parent=63 // pred_check
          %p542 = pneg %p81
        $region70: #{tpu_custom_call.1} parent=63 // pred_check_branch
          %544 = sbr.rel (%p542) target = $region72
        $region71: #{tpu_custom_call.1} parent=63 // pred_region
          %s545 = sand.u32 %s35, 1
          %s546 = scalar_lea.sflag [#allocation7], %s545
          %s547 = sand.u32 %s71, 1
          %s548 = scalar_lea.vmem [#allocation6], %s547
          %s550 = ssub.s32 16, 16
          %551 = vsyncadd %s546, %s550
          %s552 = smul.addr %s35, 16
          %s553 = scalar_lea.hbm %s1, %s552
          %s555 = sshll.u32 %s548, 4
          %s556 = int_to_ptr.vmem [resolvable:$true] %s555
          %558 = dma.hbm_to_vmem [thread:$0]  %s553, 16, %s556, %s546
        $region72: #{tpu_custom_call.1} parent=63 // pred_fallthru
          _
      $region64: #{tpu_custom_call.1} parent=5 // pred_fallthru
        _
      %p559 = scmp.le.s32.totalorder 1, %s35
      %p560 = scmp.lt.s32.totalorder %s35, 3
      %p561 = pnand %p559, %p560
      %p562 = pneg %p561
      // Predicated region
      $region73: #{tpu_custom_call.1} parent=5 // pred_check
        _
      $region74: #{tpu_custom_call.1} parent=5 // pred_check_branch
        %564 = sbr.rel (%p561) target = $region76
      $region75: #{tpu_custom_call.1} parent=5 // pred_region
        %s565 = ssub.s32 %s35, 1
        %s566 = sand.u32 %s48, 1
        %s567 = scalar_lea.sflag [#allocation4], %s566
        %s568 = sand.u32 %s48, 1
        %s569 = smul.addr %s568, 8
        %s570 = scalar_lea.vmem [#allocation3], %s569
        // Predicated region
        $region77: #{tpu_custom_call.1} parent=75 // pred_check
          %p571 = pneg %p61
        $region78: #{tpu_custom_call.1} parent=75 // pred_check_branch
          %573 = sbr.rel (%p571) target = $region80
        $region79: #{tpu_custom_call.1} parent=75 // pred_region
          %574 = dma.done %s567, 128
        $region80: #{tpu_custom_call.1} parent=75 // pred_fallthru
          _
        %s575 = sand.u32 %s40, 1
        %s576 = scalar_lea.sflag [#allocation7], %s575
        %s577 = sand.u32 %s74, 1
        %s578 = scalar_lea.vmem [#allocation6], %s577
        // Predicated region
        $region81: #{tpu_custom_call.1} parent=75 // pred_check
          %p579 = pneg %p87
        $region82: #{tpu_custom_call.1} parent=75 // pred_check_branch
          %581 = sbr.rel (%p579) target = $region84
        $region83: #{tpu_custom_call.1} parent=75 // pred_region
          %582 = dma.done %s576, 16
        $region84: #{tpu_custom_call.1} parent=75 // pred_fallthru
          _
        // Predicated region
        $region85: #{tpu_custom_call.1} parent=75 // pred_check
          %p583 = pneg %p108
        $region86: #{tpu_custom_call.1} parent=75 // pred_check_branch
          %585 = sbr.rel (%p583) target = $region88
        $region87: #{tpu_custom_call.1} parent=75 // pred_region
          %586 = dma.done [#allocation7], 256
        $region88: #{tpu_custom_call.1} parent=75 // pred_fallthru
          _
        // Predicated region
        $region89: #{tpu_custom_call.1} parent=75 // pred_check
          %p587 = pneg %p129
        $region90: #{tpu_custom_call.1} parent=75 // pred_check_branch
          %589 = sbr.rel (%p587) target = $region92
        $region91: #{tpu_custom_call.1} parent=75 // pred_region
          %590 = dma.done [#allocation10], 16
        $region92: #{tpu_custom_call.1} parent=75 // pred_fallthru
          _
        // Predicated region
        $region93: #{tpu_custom_call.1} parent=75 // pred_check
          %p591 = pneg %p150
        $region94: #{tpu_custom_call.1} parent=75 // pred_check_branch
          %593 = sbr.rel (%p591) target = $region96
        $region95: #{tpu_custom_call.1} parent=75 // pred_region
          %594 = dma.done [#allocation10], 256
        $region96: #{tpu_custom_call.1} parent=75 // pred_fallthru
          _
        // Predicated region
        $region97: #{tpu_custom_call.1} parent=75 // pred_check
          %p595 = pneg %p171
        $region98: #{tpu_custom_call.1} parent=75 // pred_check_branch
          %597 = sbr.rel (%p595) target = $region100
        $region99: #{tpu_custom_call.1} parent=75 // pred_region
          %598 = dma.done [#allocation13], 16
        $region100: #{tpu_custom_call.1} parent=75 // pred_fallthru
          _
        // Predicated region
        $region101: #{tpu_custom_call.1} parent=75 // pred_check
          %p599 = pneg %p192
        $region102: #{tpu_custom_call.1} parent=75 // pred_check_branch
          %601 = sbr.rel (%p599) target = $region104
        $region103: #{tpu_custom_call.1} parent=75 // pred_region
          %602 = dma.done [#allocation13], 16
        $region104: #{tpu_custom_call.1} parent=75 // pred_fallthru
          _
        // Predicated region
        $region105: #{tpu_custom_call.1} parent=75 // pred_check
          %p603 = pneg %p213
        $region106: #{tpu_custom_call.1} parent=75 // pred_check_branch
          %605 = sbr.rel (%p603) target = $region108
        $region107: #{tpu_custom_call.1} parent=75 // pred_region
          %606 = dma.done [#allocation16], 16
        $region108: #{tpu_custom_call.1} parent=75 // pred_fallthru
          _
        // Predicated region
        $region109: #{tpu_custom_call.1} parent=75 // pred_check
          %p607 = pneg %p234
        $region110: #{tpu_custom_call.1} parent=75 // pred_check_branch
          %609 = sbr.rel (%p607) target = $region112
        $region111: #{tpu_custom_call.1} parent=75 // pred_region
          %610 = dma.done [#allocation16], 256
        $region112: #{tpu_custom_call.1} parent=75 // pred_fallthru
          _
        // Predicated region
        $region113: #{tpu_custom_call.1} parent=75 // pred_check
          %p611 = pneg %p255
        $region114: #{tpu_custom_call.1} parent=75 // pred_check_branch
          %613 = sbr.rel (%p611) target = $region116
        $region115: #{tpu_custom_call.1} parent=75 // pred_region
          %614 = dma.done [#allocation19], 16
        $region116: #{tpu_custom_call.1} parent=75 // pred_fallthru
          _
        // Predicated region
        $region117: #{tpu_custom_call.1} parent=75 // pred_check
          %p615 = pneg %p276
        $region118: #{tpu_custom_call.1} parent=75 // pred_check_branch
          %617 = sbr.rel (%p615) target = $region120
        $region119: #{tpu_custom_call.1} parent=75 // pred_region
          %618 = dma.done [#allocation19], 1024
        $region120: #{tpu_custom_call.1} parent=75 // pred_fallthru
          _
        // Predicated region
        $region121: #{tpu_custom_call.1} parent=75 // pred_check
          %p619 = pneg %p297
        $region122: #{tpu_custom_call.1} parent=75 // pred_check_branch
          %621 = sbr.rel (%p619) target = $region124
        $region123: #{tpu_custom_call.1} parent=75 // pred_region
          %622 = dma.done [#allocation22], 16
        $region124: #{tpu_custom_call.1} parent=75 // pred_fallthru
          _
        // Predicated region
        $region125: #{tpu_custom_call.1} parent=75 // pred_check
          %p623 = pneg %p318
        $region126: #{tpu_custom_call.1} parent=75 // pred_check_branch
          %625 = sbr.rel (%p623) target = $region128
        $region127: #{tpu_custom_call.1} parent=75 // pred_region
          %626 = dma.done [#allocation22], 16
        $region128: #{tpu_custom_call.1} parent=75 // pred_fallthru
          _
        // Predicated region
        $region129: #{tpu_custom_call.1} parent=75 // pred_check
          %p627 = pneg %p339
        $region130: #{tpu_custom_call.1} parent=75 // pred_check_branch
          %629 = sbr.rel (%p627) target = $region132
        $region131: #{tpu_custom_call.1} parent=75 // pred_region
          %630 = dma.done [#allocation25], 16
        $region132: #{tpu_custom_call.1} parent=75 // pred_fallthru
          _
        %s631 = sand.u32 %s48, 1
        %s632 = scalar_lea.sflag [#allocation4], %s631
        %s633 = sand.u32 %s48, 1
        %s634 = smul.addr %s633, 8
        %s635 = scalar_lea.vmem [#allocation3], %s634
        %p636 = pneg %p61
        %p637 = pneg %p58
        %s638 = sand.u32 %s40, 1
        %s639 = scalar_lea.sflag [#allocation7], %s638
        %s640 = sand.u32 %s74, 1
        %s641 = scalar_lea.vmem [#allocation6], %s640
        %p642 = pneg %p87
        %p643 = pneg %p84
        %p644 = pneg %p108
        %p645 = pneg %p105
        %p646 = pneg %p129
        %p647 = pneg %p126
        %p648 = pneg %p150
        %p649 = pneg %p147
        %p650 = pneg %p171
        %p651 = pneg %p168
        %p652 = pneg %p192
        %p653 = pneg %p189
        %p654 = pneg %p213
        %p655 = pneg %p210
        %p656 = pneg %p234
        %p657 = pneg %p231
        %p658 = pneg %p255
        %p659 = pneg %p252
        %p660 = pneg %p276
        %p661 = pneg %p273
        %p662 = pneg %p297
        %p663 = pneg %p294
        %p664 = pneg %p318
        %p665 = pneg %p315
        %p666 = pneg %p339
        %p667 = pneg %p336
        %p668 = pneg %p365
        %p669 = pneg %p362
        %s670 = sand.u32 %s352, 1
        %s671 = scalar_lea.sflag [#allocation5], %s670
        %s672 = sand.u32 %s352, 1
        %s673 = smul.addr %s672, 8
        %s674 = scalar_lea.vmem [#allocation26], %s673
        %v676 = vld [vmem:[%s570] sm:$0xff]
        %v677 = vpack.c.bf16 %v676, %v676
        %v678 = vld [vmem:[#allocation8] sm:$0xf]
        %v679 = vld [vmem:[#allocation8 + $0x4] sm:$0xf]
        %v680 = vld [vmem:[#allocation8 + $0x8] sm:$0xf]
        %v681 = vld [vmem:[#allocation8 + $0xc] sm:$0xf]
        %v682 = vld [vmem:[#allocation9] sm:$0x1]
        %v684 = vlaneseq
        %v685 = vshrl.u32 %v684, 7
        %v686 = vsub.s32 0, %v685
        %v687 = vrot.slane %v682, %v686
        %v693 = vunpack.c.l.b16 %v678
        %v694 = vunpack.c.l.b16 %v679
        %v695 = vunpack.c.l.b16 %v680
        %v696 = vunpack.c.l.b16 %v681
        %v697 = vpack.c.b16 %v694, %v693
        %v698 = vpack.c.b16 %v696, %v695
        %vm701 = vcmask 261120
        %v703 = vsel %vm701, %v677, 0
        %705 = vmatprep.subr.bf16.mxu0 0
        %706 = vmatpush1.bf16.msra.mxu0 %v697
        %707 = vmatprep.subr.bf16.mxu0 0
        %708 = vmatpush1.bf16.msra.mxu0 %v698
        %709 = vmatprep.subr.bf16.mxu0 0
        %710 = vmatpush1.bf16.msra.mxu0 0
        %711 = vmatprep.subr.bf16.mxu0 0
        %712 = vmatpush1.bf16.msra.mxu0 0
        %713 = vmatprep.subr.bf16.mxu0 0
        %714 = vmatpush1.bf16.msra.mxu0 0
        %715 = vmatprep.subr.bf16.mxu0 0
        %716 = vmatpush1.bf16.msra.mxu0 0
        %717 = vmatprep.subr.bf16.mxu0 0
        %718 = vmatpush1.bf16.msra.mxu0 0
        %719 = vmatprep.subr.bf16.mxu0 0
        %720 = vmatpush1.bf16.msra.mxu0 0
        %721 = vmatprep.subr.bf16.mxu0 0
        %722 = vmatpush1.bf16.msra.mxu0 0
        %723 = vmatprep.subr.bf16.mxu0 0
        %724 = vmatpush1.bf16.msra.mxu0 0
        %725 = vmatprep.subr.bf16.mxu0 0
        %726 = vmatpush1.bf16.msra.mxu0 0
        %727 = vmatprep.subr.bf16.mxu0 0
        %728 = vmatpush1.bf16.msra.mxu0 0
        %729 = vmatprep.subr.bf16.mxu0 0
        %730 = vmatpush1.bf16.msra.mxu0 0
        %731 = vmatprep.subr.bf16.mxu0 0
        %732 = vmatpush1.bf16.msra.mxu0 0
        %733 = vmatprep.subr.bf16.mxu0 0
        %734 = vmatpush1.bf16.msra.mxu0 0
        %735 = vmatprep.subr.bf16.mxu0 0
        %736 = vmatpush1.bf16.msra.mxu0 0
        %737 = vmatprep.mubr.bf16.mxu0 0
        %738 = vmatmul.mubr.bf16.gmra.mrb[0].mxu0 %v703
        %v739 = vpop.f32.mrb[0].mxu0
        %v740 = vadd.f32 %v687, %v739
        %v741 = vpop.f32.mrb[0].mxu0
        %v742 = vpop.f32.mrb[0].mxu0
        %v743 = vpop.f32.mrb[0].mxu0
        %744 = vdwg.mxu0
        %v745 = vpack.c.bf16 %v740, %v740
        %v746 = vld [vmem:[%s578] sm:$0x1]
        %v748 = vlaneseq
        %v749 = vshrl.u32 %v748, 7
        %v750 = vsub.s32 0, %v749
        %v751 = vrot.slane %v746, %v750
        %754 = vrot.lane.b32.xlu0 %v745, 96
        %v755 = vpop.permute.xlu0 %754
        %vm756 = vcmask 64512
        %v758 = vsel %vm756, %v745, 0
        %v761 = vsel %vm756, %v755, 0
        %763 = vmatprep.subr.bf16.mxu0 0
        %764 = vmatpush1.bf16.xpose.msra.mxu0 %v761
        %765 = vmatprep.subr.bf16.mxu0 0
        %766 = vmatpush1.bf16.xpose.msra.mxu0 0
        %767 = vmatprep.subr.bf16.mxu0 0
        %768 = vmatpush1.bf16.xpose.msra.mxu0 0
        %769 = vmatprep.subr.bf16.mxu0 0
        %770 = vmatpush1.bf16.xpose.msra.mxu0 0
        %771 = vmatprep.subr.bf16.mxu0 0
        %772 = vmatpush1.bf16.xpose.msra.mxu0 0
        %773 = vmatprep.subr.bf16.mxu0 0
        %774 = vmatpush1.bf16.xpose.msra.mxu0 0
        %775 = vmatprep.subr.bf16.mxu0 0
        %776 = vmatpush1.bf16.xpose.msra.mxu0 0
        %777 = vmatprep.subr.bf16.mxu0 0
        %778 = vmatpush1.bf16.xpose.msra.mxu0 0
        %779 = vmatprep.subr.bf16.mxu0 0
        %780 = vmatpush1.bf16.xpose.msra.mxu0 0
        %781 = vmatprep.subr.bf16.mxu0 0
        %782 = vmatpush1.bf16.xpose.msra.mxu0 0
        %783 = vmatprep.subr.bf16.mxu0 0
        %784 = vmatpush1.bf16.xpose.msra.mxu0 0
        %785 = vmatprep.subr.bf16.mxu0 0
        %786 = vmatpush1.bf16.xpose.msra.mxu0 0
        %787 = vmatprep.subr.bf16.mxu0 0
        %788 = vmatpush1.bf16.xpose.msra.mxu0 0
        %789 = vmatprep.subr.bf16.mxu0 0
        %790 = vmatpush1.bf16.xpose.msra.mxu0 0
        %791 = vmatprep.subr.bf16.mxu0 0
        %792 = vmatpush1.bf16.xpose.msra.mxu0 0
        %793 = vmatprep.subr.bf16.mxu0 0
        %794 = vmatpush1.bf16.xpose.msra.mxu0 0
        %795 = vmatprep.mubr.bf16.mxu0 0
        %796 = vmatmul.mubr.bf16.gmra.mrb[0].mxu0 %v758
        %v797 = vpop.f32.mrb[0].mxu0
        %v798 = vadd.f32 %v751, %v797
        %v799 = vpop.f32.mrb[0].mxu0
        %v800 = vpop.f32.mrb[0].mxu0
        %v801 = vpop.f32.mrb[0].mxu0
        %802 = vdwg.mxu0
        %v803 = vsel %vm756, %v798, -inf
        %804 = vmax.xlane.f32.xlu0 %v803
        %v805 = vpop.xlane.xlu0 %804
        %v806 = vsub.f32 %v798, %v805
        %v807 = vmul.f32 %v806, 1.442695
        %v808 = vpow.pop %v807
        %v809 = vsel %vm756, %v808, 0.0
        %810 = vadd.xlane.f32.xlu0 %v809
        %v811 = vpop.xlane.xlu0 %810
        %v812 = vrcp.pop %v811
        %v813 = vmul.f32 %v808, %v812
        %v814 = vpack.c.bf16 %v813, %v813
        %815 = vrot.lane.b32.xlu0 %v745, 64
        %v816 = vpop.permute.xlu0 %815
        %v818 = vsel %vm756, %v814, 0
        %vm820 = vcmask 1043456
        %v822 = vsel %vm820, %v816, 0
        %824 = vmatprep.subr.bf16.mxu0 0
        %825 = vmatpush1.bf16.msra.mxu0 %v822
        %826 = vmatprep.subr.bf16.mxu0 0
        %827 = vmatpush1.bf16.msra.mxu0 0
        %828 = vmatprep.subr.bf16.mxu0 0
        %829 = vmatpush1.bf16.msra.mxu0 0
        %830 = vmatprep.subr.bf16.mxu0 0
        %831 = vmatpush1.bf16.msra.mxu0 0
        %832 = vmatprep.subr.bf16.mxu0 0
        %833 = vmatpush1.bf16.msra.mxu0 0
        %834 = vmatprep.subr.bf16.mxu0 0
        %835 = vmatpush1.bf16.msra.mxu0 0
        %836 = vmatprep.subr.bf16.mxu0 0
        %837 = vmatpush1.bf16.msra.mxu0 0
        %838 = vmatprep.subr.bf16.mxu0 0
        %839 = vmatpush1.bf16.msra.mxu0 0
        %840 = vmatprep.subr.bf16.mxu0 0
        %841 = vmatpush1.bf16.msra.mxu0 0
        %842 = vmatprep.subr.bf16.mxu0 0
        %843 = vmatpush1.bf16.msra.mxu0 0
        %844 = vmatprep.subr.bf16.mxu0 0
        %845 = vmatpush1.bf16.msra.mxu0 0
        %846 = vmatprep.subr.bf16.mxu0 0
        %847 = vmatpush1.bf16.msra.mxu0 0
        %848 = vmatprep.subr.bf16.mxu0 0
        %849 = vmatpush1.bf16.msra.mxu0 0
        %850 = vmatprep.subr.bf16.mxu0 0
        %851 = vmatpush1.bf16.msra.mxu0 0
        %852 = vmatprep.subr.bf16.mxu0 0
        %853 = vmatpush1.bf16.msra.mxu0 0
        %854 = vmatprep.subr.bf16.mxu0 0
        %855 = vmatpush1.bf16.msra.mxu0 0
        %856 = vmatprep.mubr.bf16.mxu0 0
        %857 = vmatmul.mubr.bf16.gmra.mrb[0].mxu0 %v818
        %v858 = vpop.f32.mrb[0].mxu0
        %v859 = vadd.f32 0.0, %v858
        %v860 = vpop.f32.mrb[0].mxu0
        %v861 = vpop.f32.mrb[0].mxu0
        %v862 = vpop.f32.mrb[0].mxu0
        %863 = vdwg.mxu0
        %864 = vst.msk [vmem:[#allocation2] sm:$0xff] %vm756, %v859
        %865 = vrot.lane.b32.xlu0 %v745, 120
        %v866 = vpop.permute.xlu0 %865
        %867 = vrot.lane.b32.xlu0 %v745, 88
        %v868 = vpop.permute.xlu0 %867
        %v870 = vsel %vm756, %v866, 0
        %v873 = vsel %vm756, %v868, 0
        %875 = vmatprep.subr.bf16.mxu0 0
        %876 = vmatpush1.bf16.xpose.msra.mxu0 %v873
        %877 = vmatprep.subr.bf16.mxu0 0
        %878 = vmatpush1.bf16.xpose.msra.mxu0 0
        %879 = vmatprep.subr.bf16.mxu0 0
        %880 = vmatpush1.bf16.xpose.msra.mxu0 0
        %881 = vmatprep.subr.bf16.mxu0 0
        %882 = vmatpush1.bf16.xpose.msra.mxu0 0
        %883 = vmatprep.subr.bf16.mxu0 0
        %884 = vmatpush1.bf16.xpose.msra.mxu0 0
        %885 = vmatprep.subr.bf16.mxu0 0
        %886 = vmatpush1.bf16.xpose.msra.mxu0 0
        %887 = vmatprep.subr.bf16.mxu0 0
        %888 = vmatpush1.bf16.xpose.msra.mxu0 0
        %889 = vmatprep.subr.bf16.mxu0 0
        %890 = vmatpush1.bf16.xpose.msra.mxu0 0
        %891 = vmatprep.subr.bf16.mxu0 0
        %892 = vmatpush1.bf16.xpose.msra.mxu0 0
        %893 = vmatprep.subr.bf16.mxu0 0
        %894 = vmatpush1.bf16.xpose.msra.mxu0 0
        %895 = vmatprep.subr.bf16.mxu0 0
        %896 = vmatpush1.bf16.xpose.msra.mxu0 0
        %897 = vmatprep.subr.bf16.mxu0 0
        %898 = vmatpush1.bf16.xpose.msra.mxu0 0
        %899 = vmatprep.subr.bf16.mxu0 0
        %900 = vmatpush1.bf16.xpose.msra.mxu0 0
        %901 = vmatprep.subr.bf16.mxu0 0
        %902 = vmatpush1.bf16.xpose.msra.mxu0 0
        %903 = vmatprep.subr.bf16.mxu0 0
        %904 = vmatpush1.bf16.xpose.msra.mxu0 0
        %905 = vmatprep.subr.bf16.mxu0 0
        %906 = vmatpush1.bf16.xpose.msra.mxu0 0
        %907 = vmatprep.mubr.bf16.mxu0 0
        %908 = vmatmul.mubr.bf16.gmra.mrb[0].mxu0 %v870
        %v909 = vpop.f32.mrb[0].mxu0
        %v910 = vadd.f32 %v751, %v909
        %v911 = vpop.f32.mrb[0].mxu0
        %v912 = vpop.f32.mrb[0].mxu0
        %v913 = vpop.f32.mrb[0].mxu0
        %914 = vdwg.mxu0
        %v915 = vsel %vm756, %v910, -inf
        %916 = vmax.xlane.f32.xlu0 %v915
        %v917 = vpop.xlane.xlu0 %916
        %v918 = vsub.f32 %v910, %v917
        %v919 = vmul.f32 %v918, 1.442695
        %v920 = vpow.pop %v919
        %v921 = vsel %vm756, %v920, 0.0
        %922 = vadd.xlane.f32.xlu0 %v921
        %v923 = vpop.xlane.xlu0 %922
        %v924 = vrcp.pop %v923
        %v925 = vmul.f32 %v920, %v924
        %v926 = vpack.c.bf16 %v925, %v925
        %927 = vrot.lane.b32.xlu0 %v745, 56
        %v928 = vpop.permute.xlu0 %927
        %v930 = vsel %vm756, %v926, 0
        %v933 = vsel %vm820, %v928, 0
        %935 = vmatprep.subr.bf16.mxu0 0
        %936 = vmatpush1.bf16.msra.mxu0 %v933
        %937 = vmatprep.subr.bf16.mxu0 0
        %938 = vmatpush1.bf16.msra.mxu0 0
        %939 = vmatprep.subr.bf16.mxu0 0
        %940 = vmatpush1.bf16.msra.mxu0 0
        %941 = vmatprep.subr.bf16.mxu0 0
        %942 = vmatpush1.bf16.msra.mxu0 0
        %943 = vmatprep.subr.bf16.mxu0 0
        %944 = vmatpush1.bf16.msra.mxu0 0
        %945 = vmatprep.subr.bf16.mxu0 0
        %946 = vmatpush1.bf16.msra.mxu0 0
        %947 = vmatprep.subr.bf16.mxu0 0
        %948 = vmatpush1.bf16.msra.mxu0 0
        %949 = vmatprep.subr.bf16.mxu0 0
        %950 = vmatpush1.bf16.msra.mxu0 0
        %951 = vmatprep.subr.bf16.mxu0 0
        %952 = vmatpush1.bf16.msra.mxu0 0
        %953 = vmatprep.subr.bf16.mxu0 0
        %954 = vmatpush1.bf16.msra.mxu0 0
        %955 = vmatprep.subr.bf16.mxu0 0
        %956 = vmatpush1.bf16.msra.mxu0 0
        %957 = vmatprep.subr.bf16.mxu0 0
        %958 = vmatpush1.bf16.msra.mxu0 0
        %959 = vmatprep.subr.bf16.mxu0 0
        %960 = vmatpush1.bf16.msra.mxu0 0
        %961 = vmatprep.subr.bf16.mxu0 0
        %962 = vmatpush1.bf16.msra.mxu0 0
        %963 = vmatprep.subr.bf16.mxu0 0
        %964 = vmatpush1.bf16.msra.mxu0 0
        %965 = vmatprep.subr.bf16.mxu0 0
        %966 = vmatpush1.bf16.msra.mxu0 0
        %967 = vmatprep.mubr.bf16.mxu0 0
        %968 = vmatmul.mubr.bf16.gmra.mrb[0].mxu0 %v930
        %v969 = vpop.f32.mrb[0].mxu0
        %v970 = vadd.f32 0.0, %v969
        %v971 = vpop.f32.mrb[0].mxu0
        %v972 = vpop.f32.mrb[0].mxu0
        %v973 = vpop.f32.mrb[0].mxu0
        %974 = vdwg.mxu0
        %976 = vrot.lane.b32.xlu0 %v970, 8
        %v977 = vpop.permute.xlu0 %976
        %vm979 = vcmask 130112
        %980 = vst.msk [vmem:[#allocation2] sm:$0xff] %vm979, %v977
        %981 = vrot.lane.b32.xlu0 %v745, 112
        %v982 = vpop.permute.xlu0 %981
        %983 = vrot.lane.b32.xlu0 %v745, 80
        %v984 = vpop.permute.xlu0 %983
        %v986 = vsel %vm756, %v982, 0
        %v989 = vsel %vm756, %v984, 0
        %991 = vmatprep.subr.bf16.mxu0 0
        %992 = vmatpush1.bf16.xpose.msra.mxu0 %v989
        %993 = vmatprep.subr.bf16.mxu0 0
        %994 = vmatpush1.bf16.xpose.msra.mxu0 0
        %995 = vmatprep.subr.bf16.mxu0 0
        %996 = vmatpush1.bf16.xpose.msra.mxu0 0
        %997 = vmatprep.subr.bf16.mxu0 0
        %998 = vmatpush1.bf16.xpose.msra.mxu0 0
        %999 = vmatprep.subr.bf16.mxu0 0
        %1000 = vmatpush1.bf16.xpose.msra.mxu0 0
        %1001 = vmatprep.subr.bf16.mxu0 0
        %1002 = vmatpush1.bf16.xpose.msra.mxu0 0
        %1003 = vmatprep.subr.bf16.mxu0 0
        %1004 = vmatpush1.bf16.xpose.msra.mxu0 0
        %1005 = vmatprep.subr.bf16.mxu0 0
        %1006 = vmatpush1.bf16.xpose.msra.mxu0 0
        %1007 = vmatprep.subr.bf16.mxu0 0
        %1008 = vmatpush1.bf16.xpose.msra.mxu0 0
        %1009 = vmatprep.subr.bf16.mxu0 0
        %1010 = vmatpush1.bf16.xpose.msra.mxu0 0
        %1011 = vmatprep.subr.bf16.mxu0 0
        %1012 = vmatpush1.bf16.xpose.msra.mxu0 0
        %1013 = vmatprep.subr.bf16.mxu0 0
        %1014 = vmatpush1.bf16.xpose.msra.mxu0 0
        %1015 = vmatprep.subr.bf16.mxu0 0
        %1016 = vmatpush1.bf16.xpose.msra.mxu0 0
        %1017 = vmatprep.subr.bf16.mxu0 0
        %1018 = vmatpush1.bf16.xpose.msra.mxu0 0
        %1019 = vmatprep.subr.bf16.mxu0 0
        %1020 = vmatpush1.bf16.xpose.msra.mxu0 0
        %1021 = vmatprep.subr.bf16.mxu0 0
        %1022 = vmatpush1.bf16.xpose.msra.mxu0 0
        %1023 = vmatprep.mubr.bf16.mxu0 0
        %1024 = vmatmul.mubr.bf16.gmra.mrb[0].mxu0 %v986
        %v1025 = vpop.f32.mrb[0].mxu0
        %v1026 = vadd.f32 %v751, %v1025
        %v1027 = vpop.f32.mrb[0].mxu0
        %v1028 = vpop.f32.mrb[0].mxu0
        %v1029 = vpop.f32.mrb[0].mxu0
        %1030 = vdwg.mxu0
        %v1031 = vsel %vm756, %v1026, -inf
        %1032 = vmax.xlane.f32.xlu0 %v1031
        %v1033 = vpop.xlane.xlu0 %1032
        %v1034 = vsub.f32 %v1026, %v1033
        %v1035 = vmul.f32 %v1034, 1.442695
        %v1036 = vpow.pop %v1035
        %v1037 = vsel %vm756, %v1036, 0.0
        %1038 = vadd.xlane.f32.xlu0 %v1037
        %v1039 = vpop.xlane.xlu0 %1038
        %v1040 = vrcp.pop %v1039
        %v1041 = vmul.f32 %v1036, %v1040
        %v1042 = vpack.c.bf16 %v1041, %v1041
        %1043 = vrot.lane.b32.xlu0 %v745, 48
        %v1044 = vpop.permute.xlu0 %1043
        %v1046 = vsel %vm756, %v1042, 0
        %v1049 = vsel %vm820, %v1044, 0
        %1051 = vmatprep.subr.bf16.mxu0 0
        %1052 = vmatpush1.bf16.msra.mxu0 %v1049
        %1053 = vmatprep.subr.bf16.mxu0 0
        %1054 = vmatpush1.bf16.msra.mxu0 0
        %1055 = vmatprep.subr.bf16.mxu0 0
        %1056 = vmatpush1.bf16.msra.mxu0 0
        %1057 = vmatprep.subr.bf16.mxu0 0
        %1058 = vmatpush1.bf16.msra.mxu0 0
        %1059 = vmatprep.subr.bf16.mxu0 0
        %1060 = vmatpush1.bf16.msra.mxu0 0
        %1061 = vmatprep.subr.bf16.mxu0 0
        %1062 = vmatpush1.bf16.msra.mxu0 0
        %1063 = vmatprep.subr.bf16.mxu0 0
        %1064 = vmatpush1.bf16.msra.mxu0 0
        %1065 = vmatprep.subr.bf16.mxu0 0
        %1066 = vmatpush1.bf16.msra.mxu0 0
        %1067 = vmatprep.subr.bf16.mxu0 0
        %1068 = vmatpush1.bf16.msra.mxu0 0
        %1069 = vmatprep.subr.bf16.mxu0 0
        %1070 = vmatpush1.bf16.msra.mxu0 0
        %1071 = vmatprep.subr.bf16.mxu0 0
        %1072 = vmatpush1.bf16.msra.mxu0 0
        %1073 = vmatprep.subr.bf16.mxu0 0
        %1074 = vmatpush1.bf16.msra.mxu0 0
        %1075 = vmatprep.subr.bf16.mxu0 0
        %1076 = vmatpush1.bf16.msra.mxu0 0
        %1077 = vmatprep.subr.bf16.mxu0 0
        %1078 = vmatpush1.bf16.msra.mxu0 0
        %1079 = vmatprep.subr.bf16.mxu0 0
        %1080 = vmatpush1.bf16.msra.mxu0 0
        %1081 = vmatprep.subr.bf16.mxu0 0
        %1082 = vmatpush1.bf16.msra.mxu0 0
        %1083 = vmatprep.mubr.bf16.mxu0 0
        %1084 = vmatmul.mubr.bf16.gmra.mrb[0].mxu0 %v1046
        %v1085 = vpop.f32.mrb[0].mxu0
        %v1086 = vadd.f32 0.0, %v1085
        %v1087 = vpop.f32.mrb[0].mxu0
        %v1088 = vpop.f32.mrb[0].mxu0
        %v1089 = vpop.f32.mrb[0].mxu0
        %1090 = vdwg.mxu0
        %1092 = vrot.lane.b32.xlu0 %v1086, 16
        %v1093 = vpop.permute.xlu0 %1092
        %vm1095 = vcmask 195712
        %1096 = vst.msk [vmem:[#allocation2] sm:$0xff] %vm1095, %v1093
        %1097 = vrot.lane.b32.xlu0 %v745, 104
        %v1098 = vpop.permute.xlu0 %1097
        %1099 = vrot.lane.b32.xlu0 %v745, 72
        %v1100 = vpop.permute.xlu0 %1099
        %v1102 = vsel %vm756, %v1098, 0
        %v1105 = vsel %vm756, %v1100, 0
        %1107 = vmatprep.subr.bf16.mxu0 0
        %1108 = vmatpush1.bf16.xpose.msra.mxu0 %v1105
        %1109 = vmatprep.subr.bf16.mxu0 0
        %1110 = vmatpush1.bf16.xpose.msra.mxu0 0
        %1111 = vmatprep.subr.bf16.mxu0 0
        %1112 = vmatpush1.bf16.xpose.msra.mxu0 0
        %1113 = vmatprep.subr.bf16.mxu0 0
        %1114 = vmatpush1.bf16.xpose.msra.mxu0 0
        %1115 = vmatprep.subr.bf16.mxu0 0
        %1116 = vmatpush1.bf16.xpose.msra.mxu0 0
        %1117 = vmatprep.subr.bf16.mxu0 0
        %1118 = vmatpush1.bf16.xpose.msra.mxu0 0
        %1119 = vmatprep.subr.bf16.mxu0 0
        %1120 = vmatpush1.bf16.xpose.msra.mxu0 0
        %1121 = vmatprep.subr.bf16.mxu0 0
        %1122 = vmatpush1.bf16.xpose.msra.mxu0 0
        %1123 = vmatprep.subr.bf16.mxu0 0
        %1124 = vmatpush1.bf16.xpose.msra.mxu0 0
        %1125 = vmatprep.subr.bf16.mxu0 0
        %1126 = vmatpush1.bf16.xpose.msra.mxu0 0
        %1127 = vmatprep.subr.bf16.mxu0 0
        %1128 = vmatpush1.bf16.xpose.msra.mxu0 0
        %1129 = vmatprep.subr.bf16.mxu0 0
        %1130 = vmatpush1.bf16.xpose.msra.mxu0 0
        %1131 = vmatprep.subr.bf16.mxu0 0
        %1132 = vmatpush1.bf16.xpose.msra.mxu0 0
        %1133 = vmatprep.subr.bf16.mxu0 0
        %1134 = vmatpush1.bf16.xpose.msra.mxu0 0
        %1135 = vmatprep.subr.bf16.mxu0 0
        %1136 = vmatpush1.bf16.xpose.msra.mxu0 0
        %1137 = vmatprep.subr.bf16.mxu0 0
        %1138 = vmatpush1.bf16.xpose.msra.mxu0 0
        %1139 = vmatprep.mubr.bf16.mxu0 0
        %1140 = vmatmul.mubr.bf16.gmra.mrb[0].mxu0 %v1102
        %v1141 = vpop.f32.mrb[0].mxu0
        %v1142 = vadd.f32 %v751, %v1141
        %v1143 = vpop.f32.mrb[0].mxu0
        %v1144 = vpop.f32.mrb[0].mxu0
        %v1145 = vpop.f32.mrb[0].mxu0
        %1146 = vdwg.mxu0
        %v1147 = vsel %vm756, %v1142, -inf
        %1148 = vmax.xlane.f32.xlu0 %v1147
        %v1149 = vpop.xlane.xlu0 %1148
        %v1150 = vsub.f32 %v1142, %v1149
        %v1151 = vmul.f32 %v1150, 1.442695
        %v1152 = vpow.pop %v1151
        %v1153 = vsel %vm756, %v1152, 0.0
        %1154 = vadd.xlane.f32.xlu0 %v1153
        %v1155 = vpop.xlane.xlu0 %1154
        %v1156 = vrcp.pop %v1155
        %v1157 = vmul.f32 %v1152, %v1156
        %v1158 = vpack.c.bf16 %v1157, %v1157
        %1159 = vrot.lane.b32.xlu0 %v745, 40
        %v1160 = vpop.permute.xlu0 %1159
        %v1162 = vsel %vm756, %v1158, 0
        %v1165 = vsel %vm820, %v1160, 0
        %1167 = vmatprep.subr.bf16.mxu0 0
        %1168 = vmatpush1.bf16.msra.mxu0 %v1165
        %1169 = vmatprep.subr.bf16.mxu0 0
        %1170 = vmatpush1.bf16.msra.mxu0 0
        %1171 = vmatprep.subr.bf16.mxu0 0
        %1172 = vmatpush1.bf16.msra.mxu0 0
        %1173 = vmatprep.subr.bf16.mxu0 0
        %1174 = vmatpush1.bf16.msra.mxu0 0
        %1175 = vmatprep.subr.bf16.mxu0 0
        %1176 = vmatpush1.bf16.msra.mxu0 0
        %1177 = vmatprep.subr.bf16.mxu0 0
        %1178 = vmatpush1.bf16.msra.mxu0 0
        %1179 = vmatprep.subr.bf16.mxu0 0
        %1180 = vmatpush1.bf16.msra.mxu0 0
        %1181 = vmatprep.subr.bf16.mxu0 0
        %1182 = vmatpush1.bf16.msra.mxu0 0
        %1183 = vmatprep.subr.bf16.mxu0 0
        %1184 = vmatpush1.bf16.msra.mxu0 0
        %1185 = vmatprep.subr.bf16.mxu0 0
        %1186 = vmatpush1.bf16.msra.mxu0 0
        %1187 = vmatprep.subr.bf16.mxu0 0
        %1188 = vmatpush1.bf16.msra.mxu0 0
        %1189 = vmatprep.subr.bf16.mxu0 0
        %1190 = vmatpush1.bf16.msra.mxu0 0
        %1191 = vmatprep.subr.bf16.mxu0 0
        %1192 = vmatpush1.bf16.msra.mxu0 0
        %1193 = vmatprep.subr.bf16.mxu0 0
        %1194 = vmatpush1.bf16.msra.mxu0 0
        %1195 = vmatprep.subr.bf16.mxu0 0
        %1196 = vmatpush1.bf16.msra.mxu0 0
        %1197 = vmatprep.subr.bf16.mxu0 0
        %1198 = vmatpush1.bf16.msra.mxu0 0
        %1199 = vmatprep.mubr.bf16.mxu0 0
        %1200 = vmatmul.mubr.bf16.gmra.mrb[0].mxu0 %v1162
        %v1201 = vpop.f32.mrb[0].mxu0
        %v1202 = vadd.f32 0.0, %v1201
        %v1203 = vpop.f32.mrb[0].mxu0
        %v1204 = vpop.f32.mrb[0].mxu0
        %v1205 = vpop.f32.mrb[0].mxu0
        %1206 = vdwg.mxu0
        %1208 = vrot.lane.b32.xlu0 %v1202, 24
        %v1209 = vpop.permute.xlu0 %1208
        %vm1211 = vcmask 261312
        %1212 = vst.msk [vmem:[#allocation2] sm:$0xff] %vm1211, %v1209
        %v1213 = vld [vmem:[#allocation2] sm:$0xff]
        %v1214 = vpack.c.bf16 %v1213, %v1213
        %v1215 = vld [vmem:[#allocation11] sm:$0xf]
        %v1216 = vld [vmem:[#allocation11 + $0x4] sm:$0xf]
        %v1217 = vld [vmem:[#allocation11 + $0x8] sm:$0xf]
        %v1218 = vld [vmem:[#allocation11 + $0xc] sm:$0xf]
        %v1219 = vld [vmem:[#allocation12] sm:$0x1]
        %v1221 = vlaneseq
        %v1222 = vshrl.u32 %v1221, 7
        %v1223 = vsub.s32 0, %v1222
        %v1224 = vrot.slane %v1219, %v1223
        %v1230 = vunpack.c.l.b16 %v1215
        %v1231 = vunpack.c.l.b16 %v1216
        %v1232 = vunpack.c.l.b16 %v1217
        %v1233 = vunpack.c.l.b16 %v1218
        %v1234 = vpack.c.b16 %v1231, %v1230
        %v1235 = vpack.c.b16 %v1233, %v1232
        %v1239 = vsel %vm701, %v1214, 0
        %1241 = vmatprep.subr.bf16.mxu0 0
        %1242 = vmatpush1.bf16.msra.mxu0 %v1234
        %1243 = vmatprep.subr.bf16.mxu0 0
        %1244 = vmatpush1.bf16.msra.mxu0 %v1235
        %1245 = vmatprep.subr.bf16.mxu0 0
        %1246 = vmatpush1.bf16.msra.mxu0 0
        %1247 = vmatprep.subr.bf16.mxu0 0
        %1248 = vmatpush1.bf16.msra.mxu0 0
        %1249 = vmatprep.subr.bf16.mxu0 0
        %1250 = vmatpush1.bf16.msra.mxu0 0
        %1251 = vmatprep.subr.bf16.mxu0 0
        %1252 = vmatpush1.bf16.msra.mxu0 0
        %1253 = vmatprep.subr.bf16.mxu0 0
        %1254 = vmatpush1.bf16.msra.mxu0 0
        %1255 = vmatprep.subr.bf16.mxu0 0
        %1256 = vmatpush1.bf16.msra.mxu0 0
        %1257 = vmatprep.subr.bf16.mxu0 0
        %1258 = vmatpush1.bf16.msra.mxu0 0
        %1259 = vmatprep.subr.bf16.mxu0 0
        %1260 = vmatpush1.bf16.msra.mxu0 0
        %1261 = vmatprep.subr.bf16.mxu0 0
        %1262 = vmatpush1.bf16.msra.mxu0 0
        %1263 = vmatprep.subr.bf16.mxu0 0
        %1264 = vmatpush1.bf16.msra.mxu0 0
        %1265 = vmatprep.subr.bf16.mxu0 0
        %1266 = vmatpush1.bf16.msra.mxu0 0
        %1267 = vmatprep.subr.bf16.mxu0 0
        %1268 = vmatpush1.bf16.msra.mxu0 0
        %1269 = vmatprep.subr.bf16.mxu0 0
        %1270 = vmatpush1.bf16.msra.mxu0 0
        %1271 = vmatprep.subr.bf16.mxu0 0
        %1272 = vmatpush1.bf16.msra.mxu0 0
        %1273 = vmatprep.mubr.bf16.mxu0 0
        %1274 = vmatmul.mubr.bf16.gmra.mrb[0].mxu0 %v1239
        %v1275 = vpop.f32.mrb[0].mxu0
        %v1276 = vadd.f32 %v1224, %v1275
        %v1277 = vpop.f32.mrb[0].mxu0
        %v1278 = vpop.f32.mrb[0].mxu0
        %v1279 = vpop.f32.mrb[0].mxu0
        %1280 = vdwg.mxu0
        %v1281 = vadd.f32 %v1276, %v676
        %v1282 = vld [vmem:[#allocation14] sm:$0x1]
        %v1283 = vld [vmem:[#allocation15] sm:$0x1]
        %v1284 = vsel %vm701, %v1281, 0.0
        %1285 = vadd.xlane.f32.xlu0 %v1284
        %v1286 = vpop.xlane.xlu0 %1285
        %v1287 = vrcp.pop 32.0
        %v1288 = vmul.f32 %v1286, %v1287
        %v1289 = vsub.f32 %v1281, %v1288
        %v1290 = vmul.f32 %v1289, %v1289
        %v1291 = vsel %vm701, %v1290, 0.0
        %1292 = vadd.xlane.f32.xlu0 %v1291
        %v1293 = vpop.xlane.xlu0 %1292
        %v1294 = vmul.f32 %v1293, %v1287
        %v1295 = vadd.f32 %v1294, 1e-05
        %v1296 = vrsqrt.pop %v1295
        %v1297 = vmul.f32 %v1289, %v1296
        %v1299 = vlaneseq
        %v1300 = vshrl.u32 %v1299, 7
        %v1301 = vsub.s32 0, %v1300
        %v1302 = vrot.slane %v1282, %v1301
        %v1304 = vmul.f32 %v1297, %v1302
        %v1306 = vlaneseq
        %v1307 = vshrl.u32 %v1306, 7
        %v1308 = vsub.s32 0, %v1307
        %v1309 = vrot.slane %v1283, %v1308
        %v1311 = vadd.f32 %v1304, %v1309
        %v1312 = vpack.c.bf16 %v1311, %v1311
        %v1313 = vld [vmem:[#allocation17] sm:$0xf]
        %v1314 = vld [vmem:[#allocation17 + $0x4] sm:$0xf]
        %v1315 = vld [vmem:[#allocation17 + $0x8] sm:$0xf]
        %v1316 = vld [vmem:[#allocation17 + $0xc] sm:$0xf]
        %v1317 = vld [vmem:[#allocation18] sm:$0x1]
        %v1319 = vlaneseq
        %v1320 = vshrl.u32 %v1319, 7
        %v1321 = vsub.s32 0, %v1320
        %v1322 = vrot.slane %v1317, %v1321
        %v1328 = vunpack.c.l.b16 %v1313
        %v1329 = vunpack.c.l.b16 %v1314
        %v1330 = vunpack.c.l.b16 %v1315
        %v1331 = vunpack.c.l.b16 %v1316
        %v1332 = vpack.c.b16 %v1329, %v1328
        %v1333 = vpack.c.b16 %v1331, %v1330
        %v1337 = vsel %vm701, %v1312, 0
        %1339 = vmatprep.subr.bf16.mxu0 0
        %1340 = vmatpush1.bf16.msra.mxu0 %v1332
        %1341 = vmatprep.subr.bf16.mxu0 0
        %1342 = vmatpush1.bf16.msra.mxu0 %v1333
        %1343 = vmatprep.subr.bf16.mxu0 0
        %1344 = vmatpush1.bf16.msra.mxu0 0
        %1345 = vmatprep.subr.bf16.mxu0 0
        %1346 = vmatpush1.bf16.msra.mxu0 0
        %1347 = vmatprep.subr.bf16.mxu0 0
        %1348 = vmatpush1.bf16.msra.mxu0 0
        %1349 = vmatprep.subr.bf16.mxu0 0
        %1350 = vmatpush1.bf16.msra.mxu0 0
        %1351 = vmatprep.subr.bf16.mxu0 0
        %1352 = vmatpush1.bf16.msra.mxu0 0
        %1353 = vmatprep.subr.bf16.mxu0 0
        %1354 = vmatpush1.bf16.msra.mxu0 0
        %1355 = vmatprep.subr.bf16.mxu0 0
        %1356 = vmatpush1.bf16.msra.mxu0 0
        %1357 = vmatprep.subr.bf16.mxu0 0
        %1358 = vmatpush1.bf16.msra.mxu0 0
        %1359 = vmatprep.subr.bf16.mxu0 0
        %1360 = vmatpush1.bf16.msra.mxu0 0
        %1361 = vmatprep.subr.bf16.mxu0 0
        %1362 = vmatpush1.bf16.msra.mxu0 0
        %1363 = vmatprep.subr.bf16.mxu0 0
        %1364 = vmatpush1.bf16.msra.mxu0 0
        %1365 = vmatprep.subr.bf16.mxu0 0
        %1366 = vmatpush1.bf16.msra.mxu0 0
        %1367 = vmatprep.subr.bf16.mxu0 0
        %1368 = vmatpush1.bf16.msra.mxu0 0
        %1369 = vmatprep.subr.bf16.mxu0 0
        %1370 = vmatpush1.bf16.msra.mxu0 0
        %1371 = vmatprep.mubr.bf16.mxu0 0
        %1372 = vmatmul.mubr.bf16.gmra.mrb[0].mxu0 %v1337
        %v1373 = vpop.f32.mrb[0].mxu0
        %v1374 = vadd.f32 %v1322, %v1373
        %v1375 = vpop.f32.mrb[0].mxu0
        %v1376 = vpop.f32.mrb[0].mxu0
        %v1377 = vpop.f32.mrb[0].mxu0
        %1378 = vdwg.mxu0
        %v1379 = vmul.f32 %v1374, 0.5
        %v1380 = vmul.f32 %v1374, 0.044715
        %v1381 = vmul.f32 %v1380, %v1374
        %v1382 = vmul.f32 %v1381, %v1374
        %v1383 = vadd.f32 %v1374, %v1382
        %v1384 = vmul.f32 %v1383, 0.7978846
        %v1385 = vtanh.pop %v1384
        %v1386 = vadd.f32 %v1385, 1.0
        %v1387 = vmul.f32 %v1379, %v1386
        %v1388 = vpack.c.bf16 %v1387, %v1387
        %v1389 = vld [vmem:[#allocation20] sm:$0xf]
        %v1390 = vld [vmem:[#allocation20 + $0x4] sm:$0xf]
        %v1391 = vld [vmem:[#allocation20 + $0x8] sm:$0xf]
        %v1392 = vld [vmem:[#allocation20 + $0xc] sm:$0xf]
        %v1393 = vld [vmem:[#allocation20 + $0x10] sm:$0xf]
        %v1394 = vld [vmem:[#allocation20 + $0x14] sm:$0xf]
        %v1395 = vld [vmem:[#allocation20 + $0x18] sm:$0xf]
        %v1396 = vld [vmem:[#allocation20 + $0x1c] sm:$0xf]
        %v1397 = vld [vmem:[#allocation20 + $0x20] sm:$0xf]
        %v1398 = vld [vmem:[#allocation20 + $0x24] sm:$0xf]
        %v1399 = vld [vmem:[#allocation20 + $0x28] sm:$0xf]
        %v1400 = vld [vmem:[#allocation20 + $0x2c] sm:$0xf]
        %v1401 = vld [vmem:[#allocation20 + $0x30] sm:$0xf]
        %v1402 = vld [vmem:[#allocation20 + $0x34] sm:$0xf]
        %v1403 = vld [vmem:[#allocation20 + $0x38] sm:$0xf]
        %v1404 = vld [vmem:[#allocation20 + $0x3c] sm:$0xf]
        %v1405 = vld [vmem:[#allocation21] sm:$0x1]
        %v1407 = vlaneseq
        %v1408 = vshrl.u32 %v1407, 7
        %v1409 = vsub.s32 0, %v1408
        %v1410 = vrot.slane %v1405, %v1409
        %v1428 = vunpack.c.l.b16 %v1389
        %v1429 = vunpack.c.l.b16 %v1390
        %v1430 = vunpack.c.l.b16 %v1391
        %v1431 = vunpack.c.l.b16 %v1392
        %v1432 = vunpack.c.l.b16 %v1393
        %v1433 = vunpack.c.l.b16 %v1394
        %v1434 = vunpack.c.l.b16 %v1395
        %v1435 = vunpack.c.l.b16 %v1396
        %v1436 = vunpack.c.l.b16 %v1397
        %v1437 = vunpack.c.l.b16 %v1398
        %v1438 = vunpack.c.l.b16 %v1399
        %v1439 = vunpack.c.l.b16 %v1400
        %v1440 = vunpack.c.l.b16 %v1401
        %v1441 = vunpack.c.l.b16 %v1402
        %v1442 = vunpack.c.l.b16 %v1403
        %v1443 = vunpack.c.l.b16 %v1404
        %v1444 = vpack.c.b16 %v1429, %v1428
        %v1445 = vpack.c.b16 %v1431, %v1430
        %v1446 = vpack.c.b16 %v1433, %v1432
        %v1447 = vpack.c.b16 %v1435, %v1434
        %v1448 = vpack.c.b16 %v1437, %v1436
        %v1449 = vpack.c.b16 %v1439, %v1438
        %v1450 = vpack.c.b16 %v1441, %v1440
        %v1451 = vpack.c.b16 %v1443, %v1442
        %1460 = vmatprep.subr.bf16.mxu0 0
        %1461 = vmatpush1.bf16.msra.mxu0 %v1444
        %1462 = vmatprep.subr.bf16.mxu0 0
        %1463 = vmatpush1.bf16.msra.mxu0 %v1445
        %1464 = vmatprep.subr.bf16.mxu0 0
        %1465 = vmatpush1.bf16.msra.mxu0 %v1446
        %1466 = vmatprep.subr.bf16.mxu0 0
        %1467 = vmatpush1.bf16.msra.mxu0 %v1447
        %1468 = vmatprep.subr.bf16.mxu0 0
        %1469 = vmatpush1.bf16.msra.mxu0 %v1448
        %1470 = vmatprep.subr.bf16.mxu0 0
        %1471 = vmatpush1.bf16.msra.mxu0 %v1449
        %1472 = vmatprep.subr.bf16.mxu0 0
        %1473 = vmatpush1.bf16.msra.mxu0 %v1450
        %1474 = vmatprep.subr.bf16.mxu0 0
        %1475 = vmatpush1.bf16.msra.mxu0 %v1451
        %1476 = vmatprep.subr.bf16.mxu0 0
        %1477 = vmatpush1.bf16.msra.mxu0 0
        %1478 = vmatprep.subr.bf16.mxu0 0
        %1479 = vmatpush1.bf16.msra.mxu0 0
        %1480 = vmatprep.subr.bf16.mxu0 0
        %1481 = vmatpush1.bf16.msra.mxu0 0
        %1482 = vmatprep.subr.bf16.mxu0 0
        %1483 = vmatpush1.bf16.msra.mxu0 0
        %1484 = vmatprep.subr.bf16.mxu0 0
        %1485 = vmatpush1.bf16.msra.mxu0 0
        %1486 = vmatprep.subr.bf16.mxu0 0
        %1487 = vmatpush1.bf16.msra.mxu0 0
        %1488 = vmatprep.subr.bf16.mxu0 0
        %1489 = vmatpush1.bf16.msra.mxu0 0
        %1490 = vmatprep.subr.bf16.mxu0 0
        %1491 = vmatpush1.bf16.msra.mxu0 0
        %1492 = vmatprep.mubr.bf16.mxu0 0
        %1493 = vmatmul.mubr.bf16.gmra.mrb[0].mxu0 %v1388
        %v1494 = vpop.f32.mrb[0].mxu0
        %v1495 = vadd.f32 %v1410, %v1494
        %v1496 = vpop.f32.mrb[0].mxu0
        %v1497 = vpop.f32.mrb[0].mxu0
        %v1498 = vpop.f32.mrb[0].mxu0
        %1499 = vdwg.mxu0
        %v1500 = vadd.f32 %v1495, %v1311
        %v1501 = vld [vmem:[#allocation23] sm:$0x1]
        %v1502 = vld [vmem:[#allocation24] sm:$0x1]
        %v1503 = vsel %vm701, %v1500, 0.0
        %1504 = vadd.xlane.f32.xlu0 %v1503
        %v1505 = vpop.xlane.xlu0 %1504
        %v1506 = vmul.f32 %v1505, %v1287
        %v1507 = vsub.f32 %v1500, %v1506
        %v1508 = vmul.f32 %v1507, %v1507
        %v1509 = vsel %vm701, %v1508, 0.0
        %1510 = vadd.xlane.f32.xlu0 %v1509
        %v1511 = vpop.xlane.xlu0 %1510
        %v1512 = vmul.f32 %v1511, %v1287
        %v1513 = vadd.f32 %v1512, 1e-05
        %v1514 = vrsqrt.pop %v1513
        %v1515 = vmul.f32 %v1507, %v1514
        %v1517 = vlaneseq
        %v1518 = vshrl.u32 %v1517, 7
        %v1519 = vsub.s32 0, %v1518
        %v1520 = vrot.slane %v1501, %v1519
        %v1522 = vmul.f32 %v1515, %v1520
        %v1524 = vlaneseq
        %v1525 = vshrl.u32 %v1524, 7
        %v1526 = vsub.s32 0, %v1525
        %v1527 = vrot.slane %v1502, %v1526
        %v1529 = vadd.f32 %v1522, %v1527
        %1530 = vst.msk [vmem:[%s674] sm:$0xff] %vm701, %v1529
        %s1531 = sand.u32 %s352, 1
        %s1532 = scalar_lea.sflag [#allocation5], %s1531
        %s1533 = sand.u32 %s352, 1
        %s1534 = smul.addr %s1533, 8
        %s1535 = scalar_lea.vmem [#allocation26], %s1534
        // Predicated region
        $region133: #{tpu_custom_call.1} parent=75 // pred_check
          %p1536 = pneg %p362
        $region134: #{tpu_custom_call.1} parent=75 // pred_check_branch
          %1538 = sbr.rel (%p1536) target = $region136
        $region135: #{tpu_custom_call.1} parent=75 // pred_region
          %s1540 = ssub.s32 128, 128
          %1541 = vsyncadd %s1532, %s1540
          %s1542 = smul.addr %s40, 128
          %s1543 = scalar_lea.hbm %s14, %s1542
          %s1545 = sshll.u32 %s1535, 4
          %s1546 = int_to_ptr.vmem [resolvable:$true] %s1545
          %1548 = dma.vmem_to_hbm [thread:$0]  %s1546, 128, %s1543, %s1532
        $region136: #{tpu_custom_call.1} parent=75 // pred_fallthru
          _
      $region76: #{tpu_custom_call.1} parent=5 // pred_fallthru
        _
      %p1549 = scmp.le.s32.totalorder 2, %s35
      // Predicated region
      $region137: #{tpu_custom_call.1} parent=5 // pred_check
        %p1550 = pneg %p1549
      $region138: #{tpu_custom_call.1} parent=5 // pred_check_branch
        %1552 = sbr.rel (%p1550) target = $region140
      $region139: #{tpu_custom_call.1} parent=5 // pred_region
        %s1553 = ssub.s32 %s35, 2
        // Predicated region
        $region141: #{tpu_custom_call.1} parent=139 // pred_check
          %p1554 = pneg %p368
        $region142: #{tpu_custom_call.1} parent=139 // pred_check_branch
          %1556 = sbr.rel (%p1554) target = $region144
        $region143: #{tpu_custom_call.1} parent=139 // pred_region
          %s1557 = sand.u32 %s353, 1
          %s1558 = scalar_lea.sflag [#allocation5], %s1557
          %s1559 = sand.u32 %s353, 1
          %s1560 = smul.addr %s1559, 8
          %s1561 = scalar_lea.vmem [#allocation26], %s1560
          %1562 = dma.done %s1558, 128
        $region144: #{tpu_custom_call.1} parent=139 // pred_fallthru
          _
      $region140: #{tpu_custom_call.1} parent=5 // pred_fallthru
        _
    $region6: #{tpu_custom_call.1} parent=1 // loop_footer
      %s39 = sadd.s32 1, %s35
    $region7: #{tpu_custom_call.1} parent=1 // loop_footer_branch
      %34 = sbr.rel target = $region3
    $region8: #{tpu_custom_call.1} parent=1 // loop_exit
      _
    %1563 = vsyncpa [#allocation4], 1
    %s1564 = scalar_lea.sflag [#allocation4], 1
    %1565 = vsyncpa %s1564, 1
    %1566 = vsyncpa [#allocation7], 1
    %s1567 = scalar_lea.sflag [#allocation7], 1
    %1568 = vsyncpa %s1567, 1
    %1569 = vsyncpa [#allocation10], 1
    %1570 = vsyncpa [#allocation13], 1
    %1571 = vsyncpa [#allocation16], 1
    %1572 = vsyncpa [#allocation19], 1
    %1573 = vsyncpa [#allocation22], 1
    %1574 = vsyncpa [#allocation25], 1
    %1575 = vsyncpa [#allocation5], 1
    %s1576 = scalar_lea.sflag [#allocation5], 1
    %1577 = vsyncpa %s1576, 1

// kernel: tpu_custom_call.1
$region0: #{tpu_custom_call.1}
  #allocation0 [shape = 'u32[]', space=smem, size = 0x4, offset = 0x4, fixed_abs, tag = 'smem constant byte address 0x4 - core index']
  #allocation1 [shape = 'u32[144,128]{1,0:T(1,128)}', space=vmem, size = 0x12000, scoped, tag = 'internal scratch']
  #allocation2 [shape = 'f32[8,32]{1,0:T(8,128)}', space=vmem, size = 0x1000, scoped, tag = 'scratch operand']
  %s0 = inlined_call_operand.hbm [shape: f32[2,8,32], index: 0, kind: input, shape index: {}]
  %s1 = inlined_call_operand.hbm [shape: f32[2,1,8], index: 1, kind: input, shape index: {}]
  %s2 = inlined_call_operand.hbm [shape: bf16[32,96], index: 2, kind: input, shape index: {}]
  %s3 = inlined_call_operand.hbm [shape: f32[1,96], index: 3, kind: input, shape index: {}]
  %s4 = inlined_call_operand.hbm [shape: bf16[32,32], index: 4, kind: input, shape index: {}]
  %s5 = inlined_call_operand.hbm [shape: f32[1,32], index: 5, kind: input, shape index: {}]
  %s6 = inlined_call_operand.hbm [shape: f32[1,32], index: 6, kind: input, shape index: {}]
  %s7 = inlined_call_operand.hbm [shape: f32[1,32], index: 7, kind: input, shape index: {}]
  %s8 = inlined_call_operand.hbm [shape: bf16[32,128], index: 8, kind: input, shape index: {}]
  %s9 = inlined_call_operand.hbm [shape: f32[1,128], index: 9, kind: input, shape index: {}]
  %s10 = inlined_call_operand.hbm [shape: bf16[128,32], index: 10, kind: input, shape index: {}]
  %s11 = inlined_call_operand.hbm [shape: f32[1,32], index: 11, kind: input, shape index: {}]
  %s12 = inlined_call_operand.hbm [shape: f32[1,32], index: 12, kind: input, shape index: {}]
  %s13 = inlined_call_operand.hbm [shape: f32[1,32], index: 13, kind: input, shape index: {}]
  %s14 = inlined_call_operand.hbm [shape: f32[2,8,32], index: 14, kind: output, shape index: {}]
  %s15 = sld [smem:[#allocation0]]
  $region145: #{tpu_custom_call.1} parent=0
    _
  %s17 = ssub.s32 1, %s15
  %s18 = scalar_select 0, %s17, %s15
  $region1: #{tpu_custom_call.1} parent=0
    #allocation3 [shape = 'u8[8192]{0}', space=vmem, size = 0x2000, scoped, tag = 'input window, operand 0']
    #allocation4 [shape = 's32[2]{0}', space=sflag, size = 0x8, scoped, tag = 'scoped memory for tpu_custom_call.1']
    #allocation5 [shape = 's32[2]{0}', space=sflag, size = 0x8, scoped, tag = 'scoped memory for tpu_custom_call.1']
    #allocation6 [shape = 'u8[1024]{0}', space=vmem, size = 0x400, scoped, tag = 'input window, operand 1']
    #allocation7 [shape = 's32[2]{0}', space=sflag, size = 0x8, scoped, tag = 'scoped memory for tpu_custom_call.1']
    #allocation8 [shape = 'u8[8192]{0}', space=vmem, size = 0x2000, scoped, tag = 'input window, operand 2, single buffered']
    #allocation9 [shape = 'u8[512]{0}', space=vmem, size = 0x400, scoped, tag = 'input window, operand 3, single buffered']
    #allocation10 [shape = 's32[1]{0}', space=sflag, size = 0x4, scoped, tag = 'scoped memory for tpu_custom_call.1']
    #allocation11 [shape = 'u8[8192]{0}', space=vmem, size = 0x2000, scoped, tag = 'input window, operand 4, single buffered']
    #allocation12 [shape = 'u8[512]{0}', space=vmem, size = 0x400, scoped, tag = 'input window, operand 5, single buffered']
    #allocation13 [shape = 's32[1]{0}', space=sflag, size = 0x4, scoped, tag = 'scoped memory for tpu_custom_call.1']
    #allocation14 [shape = 'u8[512]{0}', space=vmem, size = 0x400, scoped, tag = 'input window, operand 6, single buffered']
    #allocation15 [shape = 'u8[512]{0}', space=vmem, size = 0x400, scoped, tag = 'input window, operand 7, single buffered']
    #allocation16 [shape = 's32[1]{0}', space=sflag, size = 0x4, scoped, tag = 'scoped memory for tpu_custom_call.1']
    #allocation17 [shape = 'u8[8192]{0}', space=vmem, size = 0x2000, scoped, tag = 'input window, operand 8, single buffered']
    #allocation18 [shape = 'u8[512]{0}', space=vmem, size = 0x400, scoped, tag = 'input window, operand 9, single buffered']
    #allocation19 [shape = 's32[1]{0}', space=sflag, size = 0x4, scoped, tag = 'scoped memory for tpu_custom_call.1']
    #allocation20 [shape = 'u8[32768]{0}', space=vmem, size = 0x8000, scoped, tag = 'input window, operand 10, single buffered']
    #allocation21 [shape = 'u8[512]{0}', space=vmem, size = 0x400, scoped, tag = 'input window, operand 11, single buffered']
    #allocation22 [shape = 's32[1]{0}', space=sflag, size = 0x4, scoped, tag = 'scoped memory for tpu_custom_call.1']
    #allocation23 [shape = 'u8[512]{0}', space=vmem, size = 0x400, scoped, tag = 'input window, operand 12, single buffered']
    #allocation24 [shape = 'u8[512]{0}', space=vmem, size = 0x400, scoped, tag = 'input window, operand 13, single buffered']
    #allocation25 [shape = 's32[1]{0}', space=sflag, size = 0x4, scoped, tag = 'scoped memory for tpu_custom_call.1']
    #allocation26 [shape = 'u8[8192]{0}', space=vmem, size = 0x2000, scoped, tag = 'output window, operand 0']
    %19 = vsyncpa [#allocation4], 0
    %s20 = scalar_lea.sflag [#allocation4], 1
    %21 = vsyncpa %s20, 0
    %22 = vsyncpa [#allocation7], 0
    %s23 = scalar_lea.sflag [#allocation7], 1
    %24 = vsyncpa %s23, 0
    %25 = vsyncpa [#allocation10], 0
    %26 = vsyncpa [#allocation13], 0
    %27 = vsyncpa [#allocation16], 0
    %28 = vsyncpa [#allocation19], 0
    %29 = vsyncpa [#allocation22], 0
    %30 = vsyncpa [#allocation25], 0
    %31 = vsyncpa [#allocation5], 0
    %s32 = scalar_lea.sflag [#allocation5], 1
    %33 = vsyncpa %s32, 0
    loop: start=0, step=1, limit=4
    $region2: #{tpu_custom_call.1} parent=1 // loop_pre_header
      _
    $region3: #{tpu_custom_call.1} parent=1 // loop_header
      %s35 = sphi 0, %s39
      %p36 = scmp.ge.s32.totalorder %s35, 4
      %s45 = sphi 0, %s47
      %s48 = sphi 0, %s45
      %s49 = sphi 0, %s48
      %s65 = sphi 0, %s49
      %s71 = sphi 0, %s73
      %s74 = sphi 0, %s71
      %s75 = sphi 0, %s74
      %s91 = sphi 0, %s75
      %s95 = sphi 0, %s95
      %s97 = sphi 0, %s95
      %s98 = sphi 0, %s97
      %s112 = sphi 0, %s98
      %s116 = sphi 0, %s116
      %s118 = sphi 0, %s116
      %s119 = sphi 0, %s118
      %s133 = sphi 0, %s119
      %s137 = sphi 0, %s137
      %s139 = sphi 0, %s137
      %s140 = sphi 0, %s139
      %s154 = sphi 0, %s140
      %s158 = sphi 0, %s158
      %s160 = sphi 0, %s158
      %s161 = sphi 0, %s160
      %s175 = sphi 0, %s161
      %s179 = sphi 0, %s179
      %s181 = sphi 0, %s179
      %s182 = sphi 0, %s181
      %s196 = sphi 0, %s182
      %s200 = sphi 0, %s200
      %s202 = sphi 0, %s200
      %s203 = sphi 0, %s202
      %s217 = sphi 0, %s203
      %s221 = sphi 0, %s221
      %s223 = sphi 0, %s221
      %s224 = sphi 0, %s223
      %s238 = sphi 0, %s224
      %s242 = sphi 0, %s242
      %s244 = sphi 0, %s242
      %s245 = sphi 0, %s244
      %s259 = sphi 0, %s245
      %s263 = sphi 0, %s263
      %s265 = sphi 0, %s263
      %s266 = sphi 0, %s265
      %s280 = sphi 0, %s266
      %s284 = sphi 0, %s284
      %s286 = sphi 0, %s284
      %s287 = sphi 0, %s286
      %s301 = sphi 0, %s287
      %s305 = sphi 0, %s305
      %s307 = sphi 0, %s305
      %s308 = sphi 0, %s307
      %s322 = sphi 0, %s308
      %s326 = sphi 0, %s326
      %s328 = sphi 0, %s326
      %s329 = sphi 0, %s328
      %s343 = sphi 0, %s329
      %s349 = sphi 0, %s351
      %s352 = sphi 0, %s349
      %s353 = sphi 0, %s352
      %s369 = sphi 0, %s353
    $region4: #{tpu_custom_call.1} parent=1 // loop_header_branch
      %38 = sbr.rel (%p36) target = $region8
    $region5: #{tpu_custom_call.1} parent=1 // loop_body
      %s40 = ssub.s32 %s35, 1
      %s41 = ssub.s32 %s35, 2
      %s42 = sadd.s32 %s35, 1
      %s43 = ssub.s32 %s35, %s42
      %p44 = scmp.eq.s32.totalorder %s43, 0
      %s46 = sadd.s32 %s45, 1
      %s47 = scalar_select %p44, %s45, %s46
      %p50 = pneg %p44
      %p51 = scmp.eq.s32.totalorder %s35, 1
      %p52 = por %p50, %p51
      %p53 = scmp.ne.s32.totalorder %s45, %s48
      %p54 = scmp.eq.s32.totalorder %s35, 0
      %p55 = por %p53, %p54
      %p56 = scmp.ne.s32.totalorder %s45, %s48
      %p57 = scmp.eq.s32.totalorder %s40, 1
      %p58 = por %p56, %p57
      %p59 = scmp.ne.s32.totalorder %s48, %s49
      %p60 = scmp.eq.s32.totalorder %s40, 0
      %p61 = por %p59, %p60
      %p62 = scmp.ne.s32.totalorder %s48, %s49
      %p63 = scmp.eq.s32.totalorder %s41, 1
      %p64 = por %p62, %p63
      %p66 = scmp.ne.s32.totalorder %s49, %s65
      %p67 = scmp.eq.s32.totalorder %s41, 0
      %p68 = por %p66, %p67
      %s69 = ssub.s32 %s35, %s42
      %p70 = scmp.eq.s32.totalorder %s69, 0
      %s72 = sadd.s32 %s71, 1
      %s73 = scalar_select %p70, %s71, %s72
      %p76 = pneg %p70
      %p77 = scmp.eq.s32.totalorder %s35, 1
      %p78 = por %p76, %p77
      %p79 = scmp.ne.s32.totalorder %s71, %s74
      %p80 = scmp.eq.s32.totalorder %s35, 0
      %p81 = por %p79, %p80
      %p82 = scmp.ne.s32.totalorder %s71, %s74
      %p83 = scmp.eq.s32.totalorder %s40, 1
      %p84 = por %p82, %p83
      %p85 = scmp.ne.s32.totalorder %s74, %s75
      %p86 = scmp.eq.s32.totalorder %s40, 0
      %p87 = por %p85, %p86
      %p88 = scmp.ne.s32.totalorder %s74, %s75
      %p89 = scmp.eq.s32.totalorder %s41, 1
      %p90 = por %p88, %p89
      %p92 = scmp.ne.s32.totalorder %s75, %s91
      %p93 = scmp.eq.s32.totalorder %s41, 0
      %p94 = por %p92, %p93
      %s96 = sadd.s32 %s95, 1
      %p99 = scmp.eq.s32.totalorder %s35, 1
      %p100 = scmp.ne.s32.totalorder %s95, %s97
      %p101 = scmp.eq.s32.totalorder %s35, 0
      %p102 = por %p100, %p101
      %p103 = scmp.ne.s32.totalorder %s95, %s97
      %p104 = scmp.eq.s32.totalorder %s40, 1
      %p105 = por %p103, %p104
      %p106 = scmp.ne.s32.totalorder %s97, %s98
      %p107 = scmp.eq.s32.totalorder %s40, 0
      %p108 = por %p106, %p107
      %p109 = scmp.ne.s32.totalorder %s97, %s98
      %p110 = scmp.eq.s32.totalorder %s41, 1
      %p111 = por %p109, %p110
      %p113 = scmp.ne.s32.totalorder %s98, %s112
      %p114 = scmp.eq.s32.totalorder %s41, 0
      %p115 = por %p113, %p114
      %s117 = sadd.s32 %s116, 1
      %p120 = scmp.eq.s32.totalorder %s35, 1
      %p121 = scmp.ne.s32.totalorder %s116, %s118
      %p122 = scmp.eq.s32.totalorder %s35, 0
      %p123 = por %p121, %p122
      %p124 = scmp.ne.s32.totalorder %s116, %s118
      %p125 = scmp.eq.s32.totalorder %s40, 1
      %p126 = por %p124, %p125
      %p127 = scmp.ne.s32.totalorder %s118, %s119
      %p128 = scmp.eq.s32.totalorder %s40, 0
      %p129 = por %p127, %p128
      %p130 = scmp.ne.s32.totalorder %s118, %s119
      %p131 = scmp.eq.s32.totalorder %s41, 1
      %p132 = por %p130, %p131
      %p134 = scmp.ne.s32.totalorder %s119, %s133
      %p135 = scmp.eq.s32.totalorder %s41, 0
      %p136 = por %p134, %p135
      %s138 = sadd.s32 %s137, 1
      %p141 = scmp.eq.s32.totalorder %s35, 1
      %p142 = scmp.ne.s32.totalorder %s137, %s139
      %p143 = scmp.eq.s32.totalorder %s35, 0
      %p144 = por %p142, %p143
      %p145 = scmp.ne.s32.totalorder %s137, %s139
      %p146 = scmp.eq.s32.totalorder %s40, 1
      %p147 = por %p145, %p146
      %p148 = scmp.ne.s32.totalorder %s139, %s140
      %p149 = scmp.eq.s32.totalorder %s40, 0
      %p150 = por %p148, %p149
      %p151 = scmp.ne.s32.totalorder %s139, %s140
      %p152 = scmp.eq.s32.totalorder %s41, 1
      %p153 = por %p151, %p152
      %p155 = scmp.ne.s32.totalorder %s140, %s154
      %p156 = scmp.eq.s32.totalorder %s41, 0
      %p157 = por %p155, %p156
      %s159 = sadd.s32 %s158, 1
      %p162 = scmp.eq.s32.totalorder %s35, 1
      %p163 = scmp.ne.s32.totalorder %s158, %s160
      %p164 = scmp.eq.s32.totalorder %s35, 0
      %p165 = por %p163, %p164
      %p166 = scmp.ne.s32.totalorder %s158, %s160
      %p167 = scmp.eq.s32.totalorder %s40, 1
      %p168 = por %p166, %p167
      %p169 = scmp.ne.s32.totalorder %s160, %s161
      %p170 = scmp.eq.s32.totalorder %s40, 0
      %p171 = por %p169, %p170
      %p172 = scmp.ne.s32.totalorder %s160, %s161
      %p173 = scmp.eq.s32.totalorder %s41, 1
      %p174 = por %p172, %p173
      %p176 = scmp.ne.s32.totalorder %s161, %s175
      %p177 = scmp.eq.s32.totalorder %s41, 0
      %p178 = por %p176, %p177
      %s180 = sadd.s32 %s179, 1
      %p183 = scmp.eq.s32.totalorder %s35, 1
      %p184 = scmp.ne.s32.totalorder %s179, %s181
      %p185 = scmp.eq.s32.totalorder %s35, 0
      %p186 = por %p184, %p185
      %p187 = scmp.ne.s32.totalorder %s179, %s181
      %p188 = scmp.eq.s32.totalorder %s40, 1
      %p189 = por %p187, %p188
      %p190 = scmp.ne.s32.totalorder %s181, %s182
      %p191 = scmp.eq.s32.totalorder %s40, 0
      %p192 = por %p190, %p191
      %p193 = scmp.ne.s32.totalorder %s181, %s182
      %p194 = scmp.eq.s32.totalorder %s41, 1
      %p195 = por %p193, %p194
      %p197 = scmp.ne.s32.totalorder %s182, %s196
      %p198 = scmp.eq.s32.totalorder %s41, 0
      %p199 = por %p197, %p198
      %s201 = sadd.s32 %s200, 1
      %p204 = scmp.eq.s32.totalorder %s35, 1
      %p205 = scmp.ne.s32.totalorder %s200, %s202
      %p206 = scmp.eq.s32.totalorder %s35, 0
      %p207 = por %p205, %p206
      %p208 = scmp.ne.s32.totalorder %s200, %s202
      %p209 = scmp.eq.s32.totalorder %s40, 1
      %p210 = por %p208, %p209
      %p211 = scmp.ne.s32.totalorder %s202, %s203
      %p212 = scmp.eq.s32.totalorder %s40, 0
      %p213 = por %p211, %p212
      %p214 = scmp.ne.s32.totalorder %s202, %s203
      %p215 = scmp.eq.s32.totalorder %s41, 1
      %p216 = por %p214, %p215
      %p218 = scmp.ne.s32.totalorder %s203, %s217
      %p219 = scmp.eq.s32.totalorder %s41, 0
      %p220 = por %p218, %p219
      %s222 = sadd.s32 %s221, 1
      %p225 = scmp.eq.s32.totalorder %s35, 1
      %p226 = scmp.ne.s32.totalorder %s221, %s223
      %p227 = scmp.eq.s32.totalorder %s35, 0
      %p228 = por %p226, %p227
      %p229 = scmp.ne.s32.totalorder %s221, %s223
      %p230 = scmp.eq.s32.totalorder %s40, 1
      %p231 = por %p229, %p230
      %p232 = scmp.ne.s32.totalorder %s223, %s224
      %p233 = scmp.eq.s32.totalorder %s40, 0
      %p234 = por %p232, %p233
      %p235 = scmp.ne.s32.totalorder %s223, %s224
      %p236 = scmp.eq.s32.totalorder %s41, 1
      %p237 = por %p235, %p236
      %p239 = scmp.ne.s32.totalorder %s224, %s238
      %p240 = scmp.eq.s32.totalorder %s41, 0
      %p241 = por %p239, %p240
      %s243 = sadd.s32 %s242, 1
      %p246 = scmp.eq.s32.totalorder %s35, 1
      %p247 = scmp.ne.s32.totalorder %s242, %s244
      %p248 = scmp.eq.s32.totalorder %s35, 0
      %p249 = por %p247, %p248
      %p250 = scmp.ne.s32.totalorder %s242, %s244
      %p251 = scmp.eq.s32.totalorder %s40, 1
      %p252 = por %p250, %p251
      %p253 = scmp.ne.s32.totalorder %s244, %s245
      %p254 = scmp.eq.s32.totalorder %s40, 0
      %p255 = por %p253, %p254
      %p256 = scmp.ne.s32.totalorder %s244, %s245
      %p257 = scmp.eq.s32.totalorder %s41, 1
      %p258 = por %p256, %p257
      %p260 = scmp.ne.s32.totalorder %s245, %s259
      %p261 = scmp.eq.s32.totalorder %s41, 0
      %p262 = por %p260, %p261
      %s264 = sadd.s32 %s263, 1
      %p267 = scmp.eq.s32.totalorder %s35, 1
      %p268 = scmp.ne.s32.totalorder %s263, %s265
      %p269 = scmp.eq.s32.totalorder %s35, 0
      %p270 = por %p268, %p269
      %p271 = scmp.ne.s32.totalorder %s263, %s265
      %p272 = scmp.eq.s32.totalorder %s40, 1
      %p273 = por %p271, %p272
      %p274 = scmp.ne.s32.totalorder %s265, %s266
      %p275 = scmp.eq.s32.totalorder %s40, 0
      %p276 = por %p274, %p275
      %p277 = scmp.ne.s32.totalorder %s265, %s266
      %p278 = scmp.eq.s32.totalorder %s41, 1
      %p279 = por %p277, %p278
      %p281 = scmp.ne.s32.totalorder %s266, %s280
      %p282 = scmp.eq.s32.totalorder %s41, 0
      %p283 = por %p281, %p282
      %s285 = sadd.s32 %s284, 1
      %p288 = scmp.eq.s32.totalorder %s35, 1
      %p289 = scmp.ne.s32.totalorder %s284, %s286
      %p290 = scmp.eq.s32.totalorder %s35, 0
      %p291 = por %p289, %p290
      %p292 = scmp.ne.s32.totalorder %s284, %s286
      %p293 = scmp.eq.s32.totalorder %s40, 1
      %p294 = por %p292, %p293
      %p295 = scmp.ne.s32.totalorder %s286, %s287
      %p296 = scmp.eq.s32.totalorder %s40, 0
      %p297 = por %p295, %p296
      %p298 = scmp.ne.s32.totalorder %s286, %s287
      %p299 = scmp.eq.s32.totalorder %s41, 1
      %p300 = por %p298, %p299
      %p302 = scmp.ne.s32.totalorder %s287, %s301
      %p303 = scmp.eq.s32.totalorder %s41, 0
      %p304 = por %p302, %p303
      %s306 = sadd.s32 %s305, 1
      %p309 = scmp.eq.s32.totalorder %s35, 1
      %p310 = scmp.ne.s32.totalorder %s305, %s307
      %p311 = scmp.eq.s32.totalorder %s35, 0
      %p312 = por %p310, %p311
      %p313 = scmp.ne.s32.totalorder %s305, %s307
      %p314 = scmp.eq.s32.totalorder %s40, 1
      %p315 = por %p313, %p314
      %p316 = scmp.ne.s32.totalorder %s307, %s308
      %p317 = scmp.eq.s32.totalorder %s40, 0
      %p318 = por %p316, %p317
      %p319 = scmp.ne.s32.totalorder %s307, %s308
      %p320 = scmp.eq.s32.totalorder %s41, 1
      %p321 = por %p319, %p320
      %p323 = scmp.ne.s32.totalorder %s308, %s322
      %p324 = scmp.eq.s32.totalorder %s41, 0
      %p325 = por %p323, %p324
      %s327 = sadd.s32 %s326, 1
      %p330 = scmp.eq.s32.totalorder %s35, 1
      %p331 = scmp.ne.s32.totalorder %s326, %s328
      %p332 = scmp.eq.s32.totalorder %s35, 0
      %p333 = por %p331, %p332
      %p334 = scmp.ne.s32.totalorder %s326, %s328
      %p335 = scmp.eq.s32.totalorder %s40, 1
      %p336 = por %p334, %p335
      %p337 = scmp.ne.s32.totalorder %s328, %s329
      %p338 = scmp.eq.s32.totalorder %s40, 0
      %p339 = por %p337, %p338
      %p340 = scmp.ne.s32.totalorder %s328, %s329
      %p341 = scmp.eq.s32.totalorder %s41, 1
      %p342 = por %p340, %p341
      %p344 = scmp.ne.s32.totalorder %s329, %s343
      %p345 = scmp.eq.s32.totalorder %s41, 0
      %p346 = por %p344, %p345
      %s347 = ssub.s32 %s35, %s42
      %p348 = scmp.eq.s32.totalorder %s347, 0
      %s350 = sadd.s32 %s349, 1
      %s351 = scalar_select %p348, %s349, %s350
      %p354 = pneg %p348
      %p355 = scmp.eq.s32.totalorder %s35, 1
      %p356 = por %p354, %p355
      %p357 = scmp.ne.s32.totalorder %s349, %s352
      %p358 = scmp.eq.s32.totalorder %s35, 0
      %p359 = por %p357, %p358
      %p360 = scmp.ne.s32.totalorder %s349, %s352
      %p361 = scmp.eq.s32.totalorder %s40, 1
      %p362 = por %p360, %p361
      %p363 = scmp.ne.s32.totalorder %s352, %s353
      %p364 = scmp.eq.s32.totalorder %s40, 0
      %p365 = por %p363, %p364
      %p366 = scmp.ne.s32.totalorder %s352, %s353
      %p367 = scmp.eq.s32.totalorder %s41, 1
      %p368 = por %p366, %p367
      %p370 = scmp.ne.s32.totalorder %s353, %s369
      %p371 = scmp.eq.s32.totalorder %s41, 0
      %p372 = por %p370, %p371
      %p373 = scmp.le.s32.totalorder 1, %s35
      %p374 = scmp.lt.s32.totalorder %s35, 3
      %p375 = pnand %p373, %p374
      %p376 = pneg %p375
      // Predicated region
      $region9: #{tpu_custom_call.1} parent=5 // pred_check
        _
      $region10: #{tpu_custom_call.1} parent=5 // pred_check_branch
        %378 = sbr.rel (%p375) target = $region12
      $region11: #{tpu_custom_call.1} parent=5 // pred_region
        %s379 = ssub.s32 %s35, 1
        // Predicated region
        $region13: #{tpu_custom_call.1} parent=11 // pred_check
          %p380 = pneg %p108
        $region14: #{tpu_custom_call.1} parent=11 // pred_check_branch
          %382 = sbr.rel (%p380) target = $region16
        $region15: #{tpu_custom_call.1} parent=11 // pred_region
          %s384 = ssub.s32 256, 256
          %385 = vsyncadd [#allocation7], %s384
          %s386 = sshll.u32 [#allocation8], 4
          %s387 = int_to_ptr.vmem [resolvable:$true] %s386
          %392 = dma.hbm_to_vmem [thread:$0]  %s2, 256, %s387, [#allocation7], 64, 64, 4
        $region16: #{tpu_custom_call.1} parent=11 // pred_fallthru
          _
        // Predicated region
        $region17: #{tpu_custom_call.1} parent=11 // pred_check
          %p393 = pneg %p129
        $region18: #{tpu_custom_call.1} parent=11 // pred_check_branch
          %395 = sbr.rel (%p393) target = $region20
        $region19: #{tpu_custom_call.1} parent=11 // pred_region
          %s397 = ssub.s32 16, 16
          %398 = vsyncadd [#allocation10], %s397
          %s400 = sshll.u32 [#allocation9], 4
          %s401 = int_to_ptr.vmem [resolvable:$true] %s400
          %403 = dma.hbm_to_vmem [thread:$0]  %s3, 16, %s401, [#allocation10]
        $region20: #{tpu_custom_call.1} parent=11 // pred_fallthru
          _
        // Predicated region
        $region21: #{tpu_custom_call.1} parent=11 // pred_check
          %p404 = pneg %p150
        $region22: #{tpu_custom_call.1} parent=11 // pred_check_branch
          %406 = sbr.rel (%p404) target = $region24
        $region23: #{tpu_custom_call.1} parent=11 // pred_region
          %s408 = ssub.s32 256, 256
          %409 = vsyncadd [#allocation10], %s408
          %s410 = sshll.u32 [#allocation11], 4
          %s411 = int_to_ptr.vmem [resolvable:$true] %s410
          %416 = dma.hbm_to_vmem [thread:$0]  %s4, 256, %s411, [#allocation10], 64, 64, 4
        $region24: #{tpu_custom_call.1} parent=11 // pred_fallthru
          _
        // Predicated region
        $region25: #{tpu_custom_call.1} parent=11 // pred_check
          %p417 = pneg %p171
        $region26: #{tpu_custom_call.1} parent=11 // pred_check_branch
          %419 = sbr.rel (%p417) target = $region28
        $region27: #{tpu_custom_call.1} parent=11 // pred_region
          %s421 = ssub.s32 16, 16
          %422 = vsyncadd [#allocation13], %s421
          %s424 = sshll.u32 [#allocation12], 4
          %s425 = int_to_ptr.vmem [resolvable:$true] %s424
          %427 = dma.hbm_to_vmem [thread:$0]  %s5, 16, %s425, [#allocation13]
        $region28: #{tpu_custom_call.1} parent=11 // pred_fallthru
          _
        // Predicated region
        $region29: #{tpu_custom_call.1} parent=11 // pred_check
          %p428 = pneg %p192
        $region30: #{tpu_custom_call.1} parent=11 // pred_check_branch
          %430 = sbr.rel (%p428) target = $region32
        $region31: #{tpu_custom_call.1} parent=11 // pred_region
          %s432 = ssub.s32 16, 16
          %433 = vsyncadd [#allocation13], %s432
          %s435 = sshll.u32 [#allocation14], 4
          %s436 = int_to_ptr.vmem [resolvable:$true] %s435
          %438 = dma.hbm_to_vmem [thread:$0]  %s6, 16, %s436, [#allocation13]
        $region32: #{tpu_custom_call.1} parent=11 // pred_fallthru
          _
        // Predicated region
        $region33: #{tpu_custom_call.1} parent=11 // pred_check
          %p439 = pneg %p213
        $region34: #{tpu_custom_call.1} parent=11 // pred_check_branch
          %441 = sbr.rel (%p439) target = $region36
        $region35: #{tpu_custom_call.1} parent=11 // pred_region
          %s443 = ssub.s32 16, 16
          %444 = vsyncadd [#allocation16], %s443
          %s446 = sshll.u32 [#allocation15], 4
          %s447 = int_to_ptr.vmem [resolvable:$true] %s446
          %449 = dma.hbm_to_vmem [thread:$0]  %s7, 16, %s447, [#allocation16]
        $region36: #{tpu_custom_call.1} parent=11 // pred_fallthru
          _
        // Predicated region
        $region37: #{tpu_custom_call.1} parent=11 // pred_check
          %p450 = pneg %p234
        $region38: #{tpu_custom_call.1} parent=11 // pred_check_branch
          %452 = sbr.rel (%p450) target = $region40
        $region39: #{tpu_custom_call.1} parent=11 // pred_region
          %s454 = ssub.s32 256, 256
          %455 = vsyncadd [#allocation16], %s454
          %s456 = sshll.u32 [#allocation17], 4
          %s457 = int_to_ptr.vmem [resolvable:$true] %s456
          %462 = dma.hbm_to_vmem [thread:$0]  %s8, 256, %s457, [#allocation16], 64, 64, 4
        $region40: #{tpu_custom_call.1} parent=11 // pred_fallthru
          _
        // Predicated region
        $region41: #{tpu_custom_call.1} parent=11 // pred_check
          %p463 = pneg %p255
        $region42: #{tpu_custom_call.1} parent=11 // pred_check_branch
          %465 = sbr.rel (%p463) target = $region44
        $region43: #{tpu_custom_call.1} parent=11 // pred_region
          %s467 = ssub.s32 16, 16
          %468 = vsyncadd [#allocation19], %s467
          %s470 = sshll.u32 [#allocation18], 4
          %s471 = int_to_ptr.vmem [resolvable:$true] %s470
          %473 = dma.hbm_to_vmem [thread:$0]  %s9, 16, %s471, [#allocation19]
        $region44: #{tpu_custom_call.1} parent=11 // pred_fallthru
          _
        // Predicated region
        $region45: #{tpu_custom_call.1} parent=11 // pred_check
          %p474 = pneg %p276
        $region46: #{tpu_custom_call.1} parent=11 // pred_check_branch
          %476 = sbr.rel (%p474) target = $region48
        $region47: #{tpu_custom_call.1} parent=11 // pred_region
          %s478 = ssub.s32 1024, 1024
          %479 = vsyncadd [#allocation19], %s478
          %s480 = sshll.u32 [#allocation20], 4
          %s481 = int_to_ptr.vmem [resolvable:$true] %s480
          %486 = dma.hbm_to_vmem [thread:$0]  %s10, 1024, %s481, [#allocation19], 64, 64, 4
        $region48: #{tpu_custom_call.1} parent=11 // pred_fallthru
          _
        // Predicated region
        $region49: #{tpu_custom_call.1} parent=11 // pred_check
          %p487 = pneg %p297
        $region50: #{tpu_custom_call.1} parent=11 // pred_check_branch
          %489 = sbr.rel (%p487) target = $region52
        $region51: #{tpu_custom_call.1} parent=11 // pred_region
          %s491 = ssub.s32 16, 16
          %492 = vsyncadd [#allocation22], %s491
          %s494 = sshll.u32 [#allocation21], 4
          %s495 = int_to_ptr.vmem [resolvable:$true] %s494
          %497 = dma.hbm_to_vmem [thread:$0]  %s11, 16, %s495, [#allocation22]
        $region52: #{tpu_custom_call.1} parent=11 // pred_fallthru
          _
        // Predicated region
        $region53: #{tpu_custom_call.1} parent=11 // pred_check
          %p498 = pneg %p318
        $region54: #{tpu_custom_call.1} parent=11 // pred_check_branch
          %500 = sbr.rel (%p498) target = $region56
        $region55: #{tpu_custom_call.1} parent=11 // pred_region
          %s502 = ssub.s32 16, 16
          %503 = vsyncadd [#allocation22], %s502
          %s505 = sshll.u32 [#allocation23], 4
          %s506 = int_to_ptr.vmem [resolvable:$true] %s505
          %508 = dma.hbm_to_vmem [thread:$0]  %s12, 16, %s506, [#allocation22]
        $region56: #{tpu_custom_call.1} parent=11 // pred_fallthru
          _
        // Predicated region
        $region57: #{tpu_custom_call.1} parent=11 // pred_check
          %p509 = pneg %p339
        $region58: #{tpu_custom_call.1} parent=11 // pred_check_branch
          %511 = sbr.rel (%p509) target = $region60
        $region59: #{tpu_custom_call.1} parent=11 // pred_region
          %s513 = ssub.s32 16, 16
          %514 = vsyncadd [#allocation25], %s513
          %s516 = sshll.u32 [#allocation24], 4
          %s517 = int_to_ptr.vmem [resolvable:$true] %s516
          %519 = dma.hbm_to_vmem [thread:$0]  %s13, 16, %s517, [#allocation25]
        $region60: #{tpu_custom_call.1} parent=11 // pred_fallthru
          _
      $region12: #{tpu_custom_call.1} parent=5 // pred_fallthru
        _
      %p520 = scmp.lt.s32.totalorder %s35, 2
      // Predicated region
      $region61: #{tpu_custom_call.1} parent=5 // pred_check
        %p521 = pneg %p520
      $region62: #{tpu_custom_call.1} parent=5 // pred_check_branch
        %523 = sbr.rel (%p521) target = $region64
      $region63: #{tpu_custom_call.1} parent=5 // pred_region
        // Predicated region
        $region65: #{tpu_custom_call.1} parent=63 // pred_check
          %p524 = pneg %p55
        $region66: #{tpu_custom_call.1} parent=63 // pred_check_branch
          %526 = sbr.rel (%p524) target = $region68
        $region67: #{tpu_custom_call.1} parent=63 // pred_region
          %s527 = sand.u32 %s45, 1
          %s528 = scalar_lea.sflag [#allocation4], %s527
          %s529 = sand.u32 %s45, 1
          %s530 = smul.addr %s529, 8
          %s531 = scalar_lea.vmem [#allocation3], %s530
          %s533 = ssub.s32 128, 128
          %534 = vsyncadd %s528, %s533
          %s535 = smul.addr %s35, 128
          %s536 = scalar_lea.hbm %s0, %s535
          %s538 = sshll.u32 %s531, 4
          %s539 = int_to_ptr.vmem [resolvable:$true] %s538
          %541 = dma.hbm_to_vmem [thread:$0]  %s536, 128, %s539, %s528
        $region68: #{tpu_custom_call.1} parent=63 // pred_fallthru
          _
        // Predicated region
        $region69: #{tpu_custom_call.1} parent=63 // pred_check
          %p542 = pneg %p81
        $region70: #{tpu_custom_call.1} parent=63 // pred_check_branch
          %544 = sbr.rel (%p542) target = $region72
        $region71: #{tpu_custom_call.1} parent=63 // pred_region
          %s545 = sand.u32 %s35, 1
          %s546 = scalar_lea.sflag [#allocation7], %s545
          %s547 = sand.u32 %s71, 1
          %s548 = scalar_lea.vmem [#allocation6], %s547
          %s550 = ssub.s32 16, 16
          %551 = vsyncadd %s546, %s550
          %s552 = smul.addr %s35, 16
          %s553 = scalar_lea.hbm %s1, %s552
          %s555 = sshll.u32 %s548, 4
          %s556 = int_to_ptr.vmem [resolvable:$true] %s555
          %558 = dma.hbm_to_vmem [thread:$0]  %s553, 16, %s556, %s546
        $region72: #{tpu_custom_call.1} parent=63 // pred_fallthru
          _
      $region64: #{tpu_custom_call.1} parent=5 // pred_fallthru
        _
      %p559 = scmp.le.s32.totalorder 1, %s35
      %p560 = scmp.lt.s32.totalorder %s35, 3
      %p561 = pnand %p559, %p560
      %p562 = pneg %p561
      // Predicated region
      $region73: #{tpu_custom_call.1} parent=5 // pred_check
        _
      $region74: #{tpu_custom_call.1} parent=5 // pred_check_branch
        %564 = sbr.rel (%p561) target = $region76
      $region75: #{tpu_custom_call.1} parent=5 // pred_region
        %s565 = ssub.s32 %s35, 1
        %s566 = sand.u32 %s48, 1
        %s567 = scalar_lea.sflag [#allocation4], %s566
        %s568 = sand.u32 %s48, 1
        %s569 = smul.addr %s568, 8
        %s570 = scalar_lea.vmem [#allocation3], %s569
        // Predicated region
        $region77: #{tpu_custom_call.1} parent=75 // pred_check
          %p571 = pneg %p61
        $region78: #{tpu_custom_call.1} parent=75 // pred_check_branch
          %573 = sbr.rel (%p571) target = $region80
        $region79: #{tpu_custom_call.1} parent=75 // pred_region
          %574 = dma.done %s567, 128
        $region80: #{tpu_custom_call.1} parent=75 // pred_fallthru
          _
        %s575 = sand.u32 %s40, 1
        %s576 = scalar_lea.sflag [#allocation7], %s575
        %s577 = sand.u32 %s74, 1
        %s578 = scalar_lea.vmem [#allocation6], %s577
        // Predicated region
        $region81: #{tpu_custom_call.1} parent=75 // pred_check
          %p579 = pneg %p87
        $region82: #{tpu_custom_call.1} parent=75 // pred_check_branch
          %581 = sbr.rel (%p579) target = $region84
        $region83: #{tpu_custom_call.1} parent=75 // pred_region
          %582 = dma.done %s576, 16
        $region84: #{tpu_custom_call.1} parent=75 // pred_fallthru
          _
        // Predicated region
        $region85: #{tpu_custom_call.1} parent=75 // pred_check
          %p583 = pneg %p108
        $region86: #{tpu_custom_call.1} parent=75 // pred_check_branch
          %585 = sbr.rel (%p583) target = $region88
        $region87: #{tpu_custom_call.1} parent=75 // pred_region
          %586 = dma.done [#allocation7], 256
        $region88: #{tpu_custom_call.1} parent=75 // pred_fallthru
          _
        // Predicated region
        $region89: #{tpu_custom_call.1} parent=75 // pred_check
          %p587 = pneg %p129
        $region90: #{tpu_custom_call.1} parent=75 // pred_check_branch
          %589 = sbr.rel (%p587) target = $region92
        $region91: #{tpu_custom_call.1} parent=75 // pred_region
          %590 = dma.done [#allocation10], 16
        $region92: #{tpu_custom_call.1} parent=75 // pred_fallthru
          _
        // Predicated region
        $region93: #{tpu_custom_call.1} parent=75 // pred_check
          %p591 = pneg %p150
        $region94: #{tpu_custom_call.1} parent=75 // pred_check_branch
          %593 = sbr.rel (%p591) target = $region96
        $region95: #{tpu_custom_call.1} parent=75 // pred_region
          %594 = dma.done [#allocation10], 256
        $region96: #{tpu_custom_call.1} parent=75 // pred_fallthru
          _
        // Predicated region
        $region97: #{tpu_custom_call.1} parent=75 // pred_check
          %p595 = pneg %p171
        $region98: #{tpu_custom_call.1} parent=75 // pred_check_branch
          %597 = sbr.rel (%p595) target = $region100
        $region99: #{tpu_custom_call.1} parent=75 // pred_region
          %598 = dma.done [#allocation13], 16
        $region100: #{tpu_custom_call.1} parent=75 // pred_fallthru
          _
        // Predicated region
        $region101: #{tpu_custom_call.1} parent=75 // pred_check
          %p599 = pneg %p192
        $region102: #{tpu_custom_call.1} parent=75 // pred_check_branch
          %601 = sbr.rel (%p599) target = $region104
        $region103: #{tpu_custom_call.1} parent=75 // pred_region
          %602 = dma.done [#allocation13], 16
        $region104: #{tpu_custom_call.1} parent=75 // pred_fallthru
          _
        // Predicated region
        $region105: #{tpu_custom_call.1} parent=75 // pred_check
          %p603 = pneg %p213
        $region106: #{tpu_custom_call.1} parent=75 // pred_check_branch
          %605 = sbr.rel (%p603) target = $region108
        $region107: #{tpu_custom_call.1} parent=75 // pred_region
          %606 = dma.done [#allocation16], 16
        $region108: #{tpu_custom_call.1} parent=75 // pred_fallthru
          _
        // Predicated region
        $region109: #{tpu_custom_call.1} parent=75 // pred_check
          %p607 = pneg %p234
        $region110: #{tpu_custom_call.1} parent=75 // pred_check_branch
          %609 = sbr.rel (%p607) target = $region112
        $region111: #{tpu_custom_call.1} parent=75 // pred_region
          %610 = dma.done [#allocation16], 256
        $region112: #{tpu_custom_call.1} parent=75 // pred_fallthru
          _
        // Predicated region
        $region113: #{tpu_custom_call.1} parent=75 // pred_check
          %p611 = pneg %p255
        $region114: #{tpu_custom_call.1} parent=75 // pred_check_branch
          %613 = sbr.rel (%p611) target = $region116
        $region115: #{tpu_custom_call.1} parent=75 // pred_region
          %614 = dma.done [#allocation19], 16
        $region116: #{tpu_custom_call.1} parent=75 // pred_fallthru
          _
        // Predicated region
        $region117: #{tpu_custom_call.1} parent=75 // pred_check
          %p615 = pneg %p276
        $region118: #{tpu_custom_call.1} parent=75 // pred_check_branch
          %617 = sbr.rel (%p615) target = $region120
        $region119: #{tpu_custom_call.1} parent=75 // pred_region
          %618 = dma.done [#allocation19], 1024
        $region120: #{tpu_custom_call.1} parent=75 // pred_fallthru
          _
        // Predicated region
        $region121: #{tpu_custom_call.1} parent=75 // pred_check
          %p619 = pneg %p297
        $region122: #{tpu_custom_call.1} parent=75 // pred_check_branch
          %621 = sbr.rel (%p619) target = $region124
        $region123: #{tpu_custom_call.1} parent=75 // pred_region
          %622 = dma.done [#allocation22], 16
        $region124: #{tpu_custom_call.1} parent=75 // pred_fallthru
          _
        // Predicated region
        $region125: #{tpu_custom_call.1} parent=75 // pred_check
          %p623 = pneg %p318
        $region126: #{tpu_custom_call.1} parent=75 // pred_check_branch
          %625 = sbr.rel (%p623) target = $region128
        $region127: #{tpu_custom_call.1} parent=75 // pred_region
          %626 = dma.done [#allocation22], 16
        $region128: #{tpu_custom_call.1} parent=75 // pred_fallthru
          _
        // Predicated region
        $region129: #{tpu_custom_call.1} parent=75 // pred_check
          %p627 = pneg %p339
        $region130: #{tpu_custom_call.1} parent=75 // pred_check_branch
          %629 = sbr.rel (%p627) target = $region132
        $region131: #{tpu_custom_call.1} parent=75 // pred_region
          %630 = dma.done [#allocation25], 16
        $region132: #{tpu_custom_call.1} parent=75 // pred_fallthru
          _
        %s631 = sand.u32 %s48, 1
        %s632 = scalar_lea.sflag [#allocation4], %s631
        %s633 = sand.u32 %s48, 1
        %s634 = smul.addr %s633, 8
        %s635 = scalar_lea.vmem [#allocation3], %s634
        %p636 = pneg %p61
        %p637 = pneg %p58
        %s638 = sand.u32 %s40, 1
        %s639 = scalar_lea.sflag [#allocation7], %s638
        %s640 = sand.u32 %s74, 1
        %s641 = scalar_lea.vmem [#allocation6], %s640
        %p642 = pneg %p87
        %p643 = pneg %p84
        %p644 = pneg %p108
        %p645 = pneg %p105
        %p646 = pneg %p129
        %p647 = pneg %p126
        %p648 = pneg %p150
        %p649 = pneg %p147
        %p650 = pneg %p171
        %p651 = pneg %p168
        %p652 = pneg %p192
        %p653 = pneg %p189
        %p654 = pneg %p213
        %p655 = pneg %p210
        %p656 = pneg %p234
        %p657 = pneg %p231
        %p658 = pneg %p255
        %p659 = pneg %p252
        %p660 = pneg %p276
        %p661 = pneg %p273
        %p662 = pneg %p297
        %p663 = pneg %p294
        %p664 = pneg %p318
        %p665 = pneg %p315
        %p666 = pneg %p339
        %p667 = pneg %p336
        %p668 = pneg %p365
        %p669 = pneg %p362
        %s670 = sand.u32 %s352, 1
        %s671 = scalar_lea.sflag [#allocation5], %s670
        %s672 = sand.u32 %s352, 1
        %s673 = smul.addr %s672, 8
        %s674 = scalar_lea.vmem [#allocation26], %s673
        %v676 = vld [vmem:[%s570] sm:$0xff]
        %v677 = vpack.c.bf16 %v676, %v676
        %v678 = vld [vmem:[#allocation8] sm:$0xf]
        %v679 = vld [vmem:[#allocation8 + $0x4] sm:$0xf]
        %v680 = vld [vmem:[#allocation8 + $0x8] sm:$0xf]
        %v681 = vld [vmem:[#allocation8 + $0xc] sm:$0xf]
        %v682 = vld [vmem:[#allocation9] sm:$0x1]
        %v684 = vlaneseq
        %v685 = vshrl.u32 %v684, 7
        %v686 = vsub.s32 0, %v685
        %v687 = vrot.slane %v682, %v686
        %v693 = vunpack.c.l.b16 %v678
        %v694 = vunpack.c.l.b16 %v679
        %v695 = vunpack.c.l.b16 %v680
        %v696 = vunpack.c.l.b16 %v681
        %v697 = vpack.c.b16 %v694, %v693
        %v698 = vpack.c.b16 %v696, %v695
        %vm701 = vcmask 261120
        %v703 = vsel %vm701, %v677, 0
        %705 = vmatprep.subr.bf16.mxu0 0
        %706 = vmatpush1.bf16.msra.mxu0 %v697
        %707 = vmatprep.subr.bf16.mxu0 0
        %708 = vmatpush1.bf16.msra.mxu0 %v698
        %709 = vmatprep.subr.bf16.mxu0 0
        %710 = vmatpush1.bf16.msra.mxu0 0
        %711 = vmatprep.subr.bf16.mxu0 0
        %712 = vmatpush1.bf16.msra.mxu0 0
        %713 = vmatprep.subr.bf16.mxu0 0
        %714 = vmatpush1.bf16.msra.mxu0 0
        %715 = vmatprep.subr.bf16.mxu0 0
        %716 = vmatpush1.bf16.msra.mxu0 0
        %717 = vmatprep.subr.bf16.mxu0 0
        %718 = vmatpush1.bf16.msra.mxu0 0
        %719 = vmatprep.subr.bf16.mxu0 0
        %720 = vmatpush1.bf16.msra.mxu0 0
        %721 = vmatprep.subr.bf16.mxu0 0
        %722 = vmatpush1.bf16.msra.mxu0 0
        %723 = vmatprep.subr.bf16.mxu0 0
        %724 = vmatpush1.bf16.msra.mxu0 0
        %725 = vmatprep.subr.bf16.mxu0 0
        %726 = vmatpush1.bf16.msra.mxu0 0
        %727 = vmatprep.subr.bf16.mxu0 0
        %728 = vmatpush1.bf16.msra.mxu0 0
        %729 = vmatprep.subr.bf16.mxu0 0
        %730 = vmatpush1.bf16.msra.mxu0 0
        %731 = vmatprep.subr.bf16.mxu0 0
        %732 = vmatpush1.bf16.msra.mxu0 0
        %733 = vmatprep.subr.bf16.mxu0 0
        %734 = vmatpush1.bf16.msra.mxu0 0
        %735 = vmatprep.subr.bf16.mxu0 0
        %736 = vmatpush1.bf16.msra.mxu0 0
        %737 = vmatprep.mubr.bf16.mxu0 0
        %738 = vmatmul.mubr.bf16.gmra.mrb[0].mxu0 %v703
        %v739 = vpop.f32.mrb[0].mxu0
        %v740 = vadd.f32 %v687, %v739
        %v741 = vpop.f32.mrb[0].mxu0
        %v742 = vpop.f32.mrb[0].mxu0
        %v743 = vpop.f32.mrb[0].mxu0
        %744 = vdwg.mxu0
        %v745 = vpack.c.bf16 %v740, %v740
        %v746 = vld [vmem:[%s578] sm:$0x1]
        %v748 = vlaneseq
        %v749 = vshrl.u32 %v748, 7
        %v750 = vsub.s32 0, %v749
        %v751 = vrot.slane %v746, %v750
        %754 = vrot.lane.b32.xlu0 %v745, 96
        %v755 = vpop.permute.xlu0 %754
        %vm756 = vcmask 64512
        %v758 = vsel %vm756, %v745, 0
        %v761 = vsel %vm756, %v755, 0
        %763 = vmatprep.subr.bf16.mxu0 0
        %764 = vmatpush1.bf16.xpose.msra.mxu0 %v761
        %765 = vmatprep.subr.bf16.mxu0 0
        %766 = vmatpush1.bf16.xpose.msra.mxu0 0
        %767 = vmatprep.subr.bf16.mxu0 0
        %768 = vmatpush1.bf16.xpose.msra.mxu0 0
        %769 = vmatprep.subr.bf16.mxu0 0
        %770 = vmatpush1.bf16.xpose.msra.mxu0 0
        %771 = vmatprep.subr.bf16.mxu0 0
        %772 = vmatpush1.bf16.xpose.msra.mxu0 0
        %773 = vmatprep.subr.bf16.mxu0 0
        %774 = vmatpush1.bf16.xpose.msra.mxu0 0
        %775 = vmatprep.subr.bf16.mxu0 0
        %776 = vmatpush1.bf16.xpose.msra.mxu0 0
        %777 = vmatprep.subr.bf16.mxu0 0
        %778 = vmatpush1.bf16.xpose.msra.mxu0 0
        %779 = vmatprep.subr.bf16.mxu0 0
        %780 = vmatpush1.bf16.xpose.msra.mxu0 0
        %781 = vmatprep.subr.bf16.mxu0 0
        %782 = vmatpush1.bf16.xpose.msra.mxu0 0
        %783 = vmatprep.subr.bf16.mxu0 0
        %784 = vmatpush1.bf16.xpose.msra.mxu0 0
        %785 = vmatprep.subr.bf16.mxu0 0
        %786 = vmatpush1.bf16.xpose.msra.mxu0 0
        %787 = vmatprep.subr.bf16.mxu0 0
        %788 = vmatpush1.bf16.xpose.msra.mxu0 0
        %789 = vmatprep.subr.bf16.mxu0 0
        %790 = vmatpush1.bf16.xpose.msra.mxu0 0
        %791 = vmatprep.subr.bf16.mxu0 0
        %792 = vmatpush1.bf16.xpose.msra.mxu0 0
        %793 = vmatprep.subr.bf16.mxu0 0
        %794 = vmatpush1.bf16.xpose.msra.mxu0 0
        %795 = vmatprep.mubr.bf16.mxu0 0
        %796 = vmatmul.mubr.bf16.gmra.mrb[0].mxu0 %v758
        %v797 = vpop.f32.mrb[0].mxu0
        %v798 = vadd.f32 %v751, %v797
        %v799 = vpop.f32.mrb[0].mxu0
        %v800 = vpop.f32.mrb[0].mxu0
        %v801 = vpop.f32.mrb[0].mxu0
        %802 = vdwg.mxu0
        %v803 = vsel %vm756, %v798, -inf
        %804 = vmax.xlane.f32.xlu0 %v803
        %v805 = vpop.xlane.xlu0 %804
        %v806 = vsub.f32 %v798, %v805
        %v807 = vmul.f32 %v806, 1.442695
        %v808 = vpow.pop %v807
        %v809 = vsel %vm756, %v808, 0.0
        %810 = vadd.xlane.f32.xlu0 %v809
        %v811 = vpop.xlane.xlu0 %810
        %v812 = vrcp.pop %v811
        %v813 = vmul.f32 %v808, %v812
        %v814 = vpack.c.bf16 %v813, %v813
        %815 = vrot.lane.b32.xlu0 %v745, 64
        %v816 = vpop.permute.xlu0 %815
        %v818 = vsel %vm756, %v814, 0
        %vm820 = vcmask 1043456
        %v822 = vsel %vm820, %v816, 0
        %824 = vmatprep.subr.bf16.mxu0 0
        %825 = vmatpush1.bf16.msra.mxu0 %v822
        %826 = vmatprep.subr.bf16.mxu0 0
        %827 = vmatpush1.bf16.msra.mxu0 0
        %828 = vmatprep.subr.bf16.mxu0 0
        %829 = vmatpush1.bf16.msra.mxu0 0
        %830 = vmatprep.subr.bf16.mxu0 0
        %831 = vmatpush1.bf16.msra.mxu0 0
        %832 = vmatprep.subr.bf16.mxu0 0
        %833 = vmatpush1.bf16.msra.mxu0 0
        %834 = vmatprep.subr.bf16.mxu0 0
        %835 = vmatpush1.bf16.msra.mxu0 0
        %836 = vmatprep.subr.bf16.mxu0 0
        %837 = vmatpush1.bf16.msra.mxu0 0
        %838 = vmatprep.subr.bf16.mxu0 0
        %839 = vmatpush1.bf16.msra.mxu0 0
        %840 = vmatprep.subr.bf16.mxu0 0
        %841 = vmatpush1.bf16.msra.mxu0 0
        %842 = vmatprep.subr.bf16.mxu0 0
        %843 = vmatpush1.bf16.msra.mxu0 0
        %844 = vmatprep.subr.bf16.mxu0 0
        %845 = vmatpush1.bf16.msra.mxu0 0
        %846 = vmatprep.subr.bf16.mxu0 0
        %847 = vmatpush1.bf16.msra.mxu0 0
        %848 = vmatprep.subr.bf16.mxu0 0
        %849 = vmatpush1.bf16.msra.mxu0 0
        %850 = vmatprep.subr.bf16.mxu0 0
        %851 = vmatpush1.bf16.msra.mxu0 0
        %852 = vmatprep.subr.bf16.mxu0 0
        %853 = vmatpush1.bf16.msra.mxu0 0
        %854 = vmatprep.subr.bf16.mxu0 0
        %855 = vmatpush1.bf16.msra.mxu0 0
        %856 = vmatprep.mubr.bf16.mxu0 0
        %857 = vmatmul.mubr.bf16.gmra.mrb[0].mxu0 %v818
        %v858 = vpop.f32.mrb[0].mxu0
        %v859 = vadd.f32 0.0, %v858
        %v860 = vpop.f32.mrb[0].mxu0
        %v861 = vpop.f32.mrb[0].mxu0
        %v862 = vpop.f32.mrb[0].mxu0
        %863 = vdwg.mxu0
        %864 = vst.msk [vmem:[#allocation2] sm:$0xff] %vm756, %v859
        %865 = vrot.lane.b32.xlu0 %v745, 120
        %v866 = vpop.permute.xlu0 %865
        %867 = vrot.lane.b32.xlu0 %v745, 88
        %v868 = vpop.permute.xlu0 %867
        %v870 = vsel %vm756, %v866, 0
        %v873 = vsel %vm756, %v868, 0
        %875 = vmatprep.subr.bf16.mxu0 0
        %876 = vmatpush1.bf16.xpose.msra.mxu0 %v873
        %877 = vmatprep.subr.bf16.mxu0 0
        %878 = vmatpush1.bf16.xpose.msra.mxu0 0
        %879 = vmatprep.subr.bf16.mxu0 0
        %880 = vmatpush1.bf16.xpose.msra.mxu0 0
        %881 = vmatprep.subr.bf16.mxu0 0
        %882 = vmatpush1.bf16.xpose.msra.mxu0 0
        %883 = vmatprep.subr.bf16.mxu0 0
        %884 = vmatpush1.bf16.xpose.msra.mxu0 0
        %885 = vmatprep.subr.bf16.mxu0 0
        %886 = vmatpush1.bf16.xpose.msra.mxu0 0
        %887 = vmatprep.subr.bf16.mxu0 0
        %888 = vmatpush1.bf16.xpose.msra.mxu0 0
        %889 = vmatprep.subr.bf16.mxu0 0
        %890 = vmatpush1.bf16.xpose.msra.mxu0 0
        %891 = vmatprep.subr.bf16.mxu0 0
        %892 = vmatpush1.bf16.xpose.msra.mxu0 0
        %893 = vmatprep.subr.bf16.mxu0 0
        %894 = vmatpush1.bf16.xpose.msra.mxu0 0
        %895 = vmatprep.subr.bf16.mxu0 0
        %896 = vmatpush1.bf16.xpose.msra.mxu0 0
        %897 = vmatprep.subr.bf16.mxu0 0
        %898 = vmatpush1.bf16.xpose.msra.mxu0 0
        %899 = vmatprep.subr.bf16.mxu0 0
        %900 = vmatpush1.bf16.xpose.msra.mxu0 0
        %901 = vmatprep.subr.bf16.mxu0 0
        %902 = vmatpush1.bf16.xpose.msra.mxu0 0
        %903 = vmatprep.subr.bf16.mxu0 0
        %904 = vmatpush1.bf16.xpose.msra.mxu0 0
        %905 = vmatprep.subr.bf16.mxu0 0
        %906 = vmatpush1.bf16.xpose.msra.mxu0 0
        %907 = vmatprep.mubr.bf16.mxu0 0
        %908 = vmatmul.mubr.bf16.gmra.mrb[0].mxu0 %v870
        %v909 = vpop.f32.mrb[0].mxu0
        %v910 = vadd.f32 %v751, %v909
        %v911 = vpop.f32.mrb[0].mxu0
        %v912 = vpop.f32.mrb[0].mxu0
        %v913 = vpop.f32.mrb[0].mxu0
        %914 = vdwg.mxu0
        %v915 = vsel %vm756, %v910, -inf
        %916 = vmax.xlane.f32.xlu0 %v915
        %v917 = vpop.xlane.xlu0 %916
        %v918 = vsub.f32 %v910, %v917
        %v919 = vmul.f32 %v918, 1.442695
        %v920 = vpow.pop %v919
        %v921 = vsel %vm756, %v920, 0.0
        %922 = vadd.xlane.f32.xlu0 %v921
        %v923 = vpop.xlane.xlu0 %922
        %v924 = vrcp.pop %v923
        %v925 = vmul.f32 %v920, %v924
        %v926 = vpack.c.bf16 %v925, %v925
        %927 = vrot.lane.b32.xlu0 %v745, 56
        %v928 = vpop.permute.xlu0 %927
        %v930 = vsel %vm756, %v926, 0
        %v933 = vsel %vm820, %v928, 0
        %935 = vmatprep.subr.bf16.mxu0 0
        %936 = vmatpush1.bf16.msra.mxu0 %v933
        %937 = vmatprep.subr.bf16.mxu0 0
        %938 = vmatpush1.bf16.msra.mxu0 0
        %939 = vmatprep.subr.bf16.mxu0 0
        %940 = vmatpush1.bf16.msra.mxu0 0
        %941 = vmatprep.subr.bf16.mxu0 0
        %942 = vmatpush1.bf16.msra.mxu0 0
        %943 = vmatprep.subr.bf16.mxu0 0
        %944 = vmatpush1.bf16.msra.mxu0 0
        %945 = vmatprep.subr.bf16.mxu0 0
        %946 = vmatpush1.bf16.msra.mxu0 0
        %947 = vmatprep.subr.bf16.mxu0 0
        %948 = vmatpush1.bf16.msra.mxu0 0
        %949 = vmatprep.subr.bf16.mxu0 0
        %950 = vmatpush1.bf16.msra.mxu0 0
        %951 = vmatprep.subr.bf16.mxu0 0
        %952 = vmatpush1.bf16.msra.mxu0 0
        %953 = vmatprep.subr.bf16.mxu0 0
        %954 = vmatpush1.bf16.msra.mxu0 0
        %955 = vmatprep.subr.bf16.mxu0 0
        %956 = vmatpush1.bf16.msra.mxu0 0
        %957 = vmatprep.subr.bf16.mxu0 0
        %958 = vmatpush1.bf16.msra.mxu0 0
        %959 = vmatprep.subr.bf16.mxu0 0
        %960 = vmatpush1.bf16.msra.mxu0 0
        %961 = vmatprep.subr.bf16.mxu0 0
        %962 = vmatpush1.bf16.msra.mxu0 0
        %963 = vmatprep.subr.bf16.mxu0 0
        %964 = vmatpush1.bf16.msra.mxu0 0
        %965 = vmatprep.subr.bf16.mxu0 0
        %966 = vmatpush1.bf16.msra.mxu0 0
        %967 = vmatprep.mubr.bf16.mxu0 0
        %968 = vmatmul.mubr.bf16.gmra.mrb[0].mxu0 %v930
        %v969 = vpop.f32.mrb[0].mxu0
        %v970 = vadd.f32 0.0, %v969
        %v971 = vpop.f32.mrb[0].mxu0
        %v972 = vpop.f32.mrb[0].mxu0
        %v973 = vpop.f32.mrb[0].mxu0
        %974 = vdwg.mxu0
        %976 = vrot.lane.b32.xlu0 %v970, 8
        %v977 = vpop.permute.xlu0 %976
        %vm979 = vcmask 130112
        %980 = vst.msk [vmem:[#allocation2] sm:$0xff] %vm979, %v977
        %981 = vrot.lane.b32.xlu0 %v745, 112
        %v982 = vpop.permute.xlu0 %981
        %983 = vrot.lane.b32.xlu0 %v745, 80
        %v984 = vpop.permute.xlu0 %983
        %v986 = vsel %vm756, %v982, 0
        %v989 = vsel %vm756, %v984, 0
        %991 = vmatprep.subr.bf16.mxu0 0
        %992 = vmatpush1.bf16.xpose.msra.mxu0 %v989
        %993 = vmatprep.subr.bf16.mxu0 0
        %994 = vmatpush1.bf16.xpose.msra.mxu0 0
        %995 = vmatprep.subr.bf16.mxu0 0
        %996 = vmatpush1.bf16.xpose.msra.mxu0 0
        %997 = vmatprep.subr.bf16.mxu0 0
        %998 = vmatpush1.bf16.xpose.msra.mxu0 0
        %999 = vmatprep.subr.bf16.mxu0 0
        %1000 = vmatpush1.bf16.xpose.msra.mxu0 0
        %1001 = vmatprep.subr.bf16.mxu0 0
        %1002 = vmatpush1.bf16.xpose.msra.mxu0 0
        %1003 = vmatprep.subr.bf16.mxu0 0
        %1004 = vmatpush1.bf16.xpose.msra.mxu0 0
        %1005 = vmatprep.subr.bf16.mxu0 0
        %1006 = vmatpush1.bf16.xpose.msra.mxu0 0
        %1007 = vmatprep.subr.bf16.mxu0 0
        %1008 = vmatpush1.bf16.xpose.msra.mxu0 0
        %1009 = vmatprep.subr.bf16.mxu0 0
        %1010 = vmatpush1.bf16.xpose.msra.mxu0 0
        %1011 = vmatprep.subr.bf16.mxu0 0
        %1012 = vmatpush1.bf16.xpose.msra.mxu0 0
        %1013 = vmatprep.subr.bf16.mxu0 0
        %1014 = vmatpush1.bf16.xpose.msra.mxu0 0
        %1015 = vmatprep.subr.bf16.mxu0 0
        %1016 = vmatpush1.bf16.xpose.msra.mxu0 0
        %1017 = vmatprep.subr.bf16.mxu0 0
        %1018 = vmatpush1.bf16.xpose.msra.mxu0 0
        %1019 = vmatprep.subr.bf16.mxu0 0
        %1020 = vmatpush1.bf16.xpose.msra.mxu0 0
        %1021 = vmatprep.subr.bf16.mxu0 0
        %1022 = vmatpush1.bf16.xpose.msra.mxu0 0
        %1023 = vmatprep.mubr.bf16.mxu0 0
        %1024 = vmatmul.mubr.bf16.gmra.mrb[0].mxu0 %v986
        %v1025 = vpop.f32.mrb[0].mxu0
        %v1026 = vadd.f32 %v751, %v1025
        %v1027 = vpop.f32.mrb[0].mxu0
        %v1028 = vpop.f32.mrb[0].mxu0
        %v1029 = vpop.f32.mrb[0].mxu0
        %1030 = vdwg.mxu0
        %v1031 = vsel %vm756, %v1026, -inf
        %1032 = vmax.xlane.f32.xlu0 %v1031
        %v1033 = vpop.xlane.xlu0 %1032
        %v1034 = vsub.f32 %v1026, %v1033
        %v1035 = vmul.f32 %v1034, 1.442695
        %v1036 = vpow.pop %v1035
        %v1037 = vsel %vm756, %v1036, 0.0
        %1038 = vadd.xlane.f32.xlu0 %v1037
        %v1039 = vpop.xlane.xlu0 %1038
        %v1040 = vrcp.pop %v1039
        %v1041 = vmul.f32 %v1036, %v1040
        %v1042 = vpack.c.bf16 %v1041, %v1041
        %1043 = vrot.lane.b32.xlu0 %v745, 48
        %v1044 = vpop.permute.xlu0 %1043
        %v1046 = vsel %vm756, %v1042, 0
        %v1049 = vsel %vm820, %v1044, 0
        %1051 = vmatprep.subr.bf16.mxu0 0
        %1052 = vmatpush1.bf16.msra.mxu0 %v1049
        %1053 = vmatprep.subr.bf16.mxu0 0
        %1054 = vmatpush1.bf16.msra.mxu0 0
        %1055 = vmatprep.subr.bf16.mxu0 0
        %1056 = vmatpush1.bf16.msra.mxu0 0
        %1057 = vmatprep.subr.bf16.mxu0 0
        %1058 = vmatpush1.bf16.msra.mxu0 0
        %1059 = vmatprep.subr.bf16.mxu0 0
        %1060 = vmatpush1.bf16.msra.mxu0 0
        %1061 = vmatprep.subr.bf16.mxu0 0
        %1062 = vmatpush1.bf16.msra.mxu0 0
        %1063 = vmatprep.subr.bf16.mxu0 0
        %1064 = vmatpush1.bf16.msra.mxu0 0
        %1065 = vmatprep.subr.bf16.mxu0 0
        %1066 = vmatpush1.bf16.msra.mxu0 0
        %1067 = vmatprep.subr.bf16.mxu0 0
        %1068 = vmatpush1.bf16.msra.mxu0 0
        %1069 = vmatprep.subr.bf16.mxu0 0
        %1070 = vmatpush1.bf16.msra.mxu0 0
        %1071 = vmatprep.subr.bf16.mxu0 0
        %1072 = vmatpush1.bf16.msra.mxu0 0
        %1073 = vmatprep.subr.bf16.mxu0 0
        %1074 = vmatpush1.bf16.msra.mxu0 0
        %1075 = vmatprep.subr.bf16.mxu0 0
        %1076 = vmatpush1.bf16.msra.mxu0 0
        %1077 = vmatprep.subr.bf16.mxu0 0
        %1078 = vmatpush1.bf16.msra.mxu0 0
        %1079 = vmatprep.subr.bf16.mxu0 0
        %1080 = vmatpush1.bf16.msra.mxu0 0
        %1081 = vmatprep.subr.bf16.mxu0 0
        %1082 = vmatpush1.bf16.msra.mxu0 0
        %1083 = vmatprep.mubr.bf16.mxu0 0
        %1084 = vmatmul.mubr.bf16.gmra.mrb[0].mxu0 %v1046
        %v1085 = vpop.f32.mrb[0].mxu0
        %v1086 = vadd.f32 0.0, %v1085
        %v1087 = vpop.f32.mrb[0].mxu0
        %v1088 = vpop.f32.mrb[0].mxu0
        %v1089 = vpop.f32.mrb[0].mxu0
        %1090 = vdwg.mxu0
        %1092 = vrot.lane.b32.xlu0 %v1086, 16
        %v1093 = vpop.permute.xlu0 %1092
        %vm1095 = vcmask 195712
        %1096 = vst.msk [vmem:[#allocation2] sm:$0xff] %vm1095, %v1093
        %1097 = vrot.lane.b32.xlu0 %v745, 104
        %v1098 = vpop.permute.xlu0 %1097
        %1099 = vrot.lane.b32.xlu0 %v745, 72
        %v1100 = vpop.permute.xlu0 %1099
        %v1102 = vsel %vm756, %v1098, 0
        %v1105 = vsel %vm756, %v1100, 0
        %1107 = vmatprep.subr.bf16.mxu0 0
        %1108 = vmatpush1.bf16.xpose.msra.mxu0 %v1105
        %1109 = vmatprep.subr.bf16.mxu0 0
        %1110 = vmatpush1.bf16.xpose.msra.mxu0 0
        %1111 = vmatprep.subr.bf16.mxu0 0
        %1112 = vmatpush1.bf16.xpose.msra.mxu0 0
        %1113 = vmatprep.subr.bf16.mxu0 0
        %1114 = vmatpush1.bf16.xpose.msra.mxu0 0
        %1115 = vmatprep.subr.bf16.mxu0 0
        %1116 = vmatpush1.bf16.xpose.msra.mxu0 0
        %1117 = vmatprep.subr.bf16.mxu0 0
        %1118 = vmatpush1.bf16.xpose.msra.mxu0 0
        %1119 = vmatprep.subr.bf16.mxu0 0
        %1120 = vmatpush1.bf16.xpose.msra.mxu0 0
        %1121 = vmatprep.subr.bf16.mxu0 0
        %1122 = vmatpush1.bf16.xpose.msra.mxu0 0
        %1123 = vmatprep.subr.bf16.mxu0 0
        %1124 = vmatpush1.bf16.xpose.msra.mxu0 0
        %1125 = vmatprep.subr.bf16.mxu0 0
        %1126 = vmatpush1.bf16.xpose.msra.mxu0 0
        %1127 = vmatprep.subr.bf16.mxu0 0
        %1128 = vmatpush1.bf16.xpose.msra.mxu0 0
        %1129 = vmatprep.subr.bf16.mxu0 0
        %1130 = vmatpush1.bf16.xpose.msra.mxu0 0
        %1131 = vmatprep.subr.bf16.mxu0 0
        %1132 = vmatpush1.bf16.xpose.msra.mxu0 0
        %1133 = vmatprep.subr.bf16.mxu0 0
        %1134 = vmatpush1.bf16.xpose.msra.mxu0 0
        %1135 = vmatprep.subr.bf16.mxu0 0
        %1136 = vmatpush1.bf16.xpose.msra.mxu0 0
        %1137 = vmatprep.subr.bf16.mxu0 0
        %1138 = vmatpush1.bf16.xpose.msra.mxu0 0
        %1139 = vmatprep.mubr.bf16.mxu0 0
        %1140 = vmatmul.mubr.bf16.gmra.mrb[0].mxu0 %v1102
        %v1141 = vpop.f32.mrb[0].mxu0
        %v1142 = vadd.f32 %v751, %v1141
        %v1143 = vpop.f32.mrb[0].mxu0
        %v1144 = vpop.f32.mrb[0].mxu0
        %v1145 = vpop.f32.mrb[0].mxu0
        %1146 = vdwg.mxu0
        %v1147 = vsel %vm756, %v1142, -inf
        %1148 = vmax.xlane.f32.xlu0 %v1147
        %v1149 = vpop.xlane.xlu0 %1148
        %v1150 = vsub.f32 %v1142, %v1149
        %v1151 = vmul.f32 %v1150, 1.442695
        %v1152 = vpow.pop %v1151
        %v1153 = vsel %vm756, %v1152, 0.0
        %1154 = vadd.xlane.f32.xlu0 %v1153
        %v1155 = vpop.xlane.xlu0 %1154
        %v1156 = vrcp.pop %v1155
        %v1157 = vmul.f32 %v1152, %v1156
        %v1158 = vpack.c.bf16 %v1157, %v1157
        %1159 = vrot.lane.b32.xlu0 %v745, 40
        %v1160 = vpop.permute.xlu0 %1159
        %v1162 = vsel %vm756, %v1158, 0
        %v1165 = vsel %vm820, %v1160, 0
        %1167 = vmatprep.subr.bf16.mxu0 0
        %1168 = vmatpush1.bf16.msra.mxu0 %v1165
        %1169 = vmatprep.subr.bf16.mxu0 0
        %1170 = vmatpush1.bf16.msra.mxu0 0
        %1171 = vmatprep.subr.bf16.mxu0 0
        %1172 = vmatpush1.bf16.msra.mxu0 0
        %1173 = vmatprep.subr.bf16.mxu0 0
        %1174 = vmatpush1.bf16.msra.mxu0 0
        %1175 = vmatprep.subr.bf16.mxu0 0
        %1176 = vmatpush1.bf16.msra.mxu0 0
        %1177 = vmatprep.subr.bf16.mxu0 0
        %1178 = vmatpush1.bf16.msra.mxu0 0
        %1179 = vmatprep.subr.bf16.mxu0 0
        %1180 = vmatpush1.bf16.msra.mxu0 0
        %1181 = vmatprep.subr.bf16.mxu0 0
        %1182 = vmatpush1.bf16.msra.mxu0 0
        %1183 = vmatprep.subr.bf16.mxu0 0
        %1184 = vmatpush1.bf16.msra.mxu0 0
        %1185 = vmatprep.subr.bf16.mxu0 0
        %1186 = vmatpush1.bf16.msra.mxu0 0
        %1187 = vmatprep.subr.bf16.mxu0 0
        %1188 = vmatpush1.bf16.msra.mxu0 0
        %1189 = vmatprep.subr.bf16.mxu0 0
        %1190 = vmatpush1.bf16.msra.mxu0 0
        %1191 = vmatprep.subr.bf16.mxu0 0
        %1192 = vmatpush1.bf16.msra.mxu0 0
        %1193 = vmatprep.subr.bf16.mxu0 0
        %1194 = vmatpush1.bf16.msra.mxu0 0
        %1195 = vmatprep.subr.bf16.mxu0 0
        %1196 = vmatpush1.bf16.msra.mxu0 0
        %1197 = vmatprep.subr.bf16.mxu0 0
        %1198 = vmatpush1.bf16.msra.mxu0 0
        %1199 = vmatprep.mubr.bf16.mxu0 0
        %1200 = vmatmul.mubr.bf16.gmra.mrb[0].mxu0 %v1162
        %v1201 = vpop.f32.mrb[0].mxu0
        %v1202 = vadd.f32 0.0, %v1201
        %v1203 = vpop.f32.mrb[0].mxu0
        %v1204 = vpop.f32.mrb[0].mxu0
        %v1205 = vpop.f32.mrb[0].mxu0
        %1206 = vdwg.mxu0
        %1208 = vrot.lane.b32.xlu0 %v1202, 24
        %v1209 = vpop.permute.xlu0 %1208
        %vm1211 = vcmask 261312
        %1212 = vst.msk [vmem:[#allocation2] sm:$0xff] %vm1211, %v1209
        %v1213 = vld [vmem:[#allocation2] sm:$0xff]
        %v1214 = vpack.c.bf16 %v1213, %v1213
        %v1215 = vld [vmem:[#allocation11] sm:$0xf]
        %v1216 = vld [vmem:[#allocation11 + $0x4] sm:$0xf]
        %v1217 = vld [vmem:[#allocation11 + $0x8] sm:$0xf]
        %v1218 = vld [vmem:[#allocation11 + $0xc] sm:$0xf]
        %v1219 = vld [vmem:[#allocation12] sm:$0x1]
        %v1221 = vlaneseq
        %v1222 = vshrl.u32 %v1221, 7
        %v1223 = vsub.s32 0, %v1222
        %v1224 = vrot.slane %v1219, %v1223
        %v1230 = vunpack.c.l.b16 %v1215
        %v1231 = vunpack.c.l.b16 %v1216
        %v1232 = vunpack.c.l.b16 %v1217
        %v1233 = vunpack.c.l.b16 %v1218
        %v1234 = vpack.c.b16 %v1231, %v1230
        %v1235 = vpack.c.b16 %v1233, %v1232
        %v1239 = vsel %vm701, %v1214, 0
        %1241 = vmatprep.subr.bf16.mxu0 0
        %1242 = vmatpush1.bf16.msra.mxu0 %v1234
        %1243 = vmatprep.subr.bf16.mxu0 0
        %1244 = vmatpush1.bf16.msra.mxu0 %v1235
        %1245 = vmatprep.subr.bf16.mxu0 0
        %1246 = vmatpush1.bf16.msra.mxu0 0
        %1247 = vmatprep.subr.bf16.mxu0 0
        %1248 = vmatpush1.bf16.msra.mxu0 0
        %1249 = vmatprep.subr.bf16.mxu0 0
        %1250 = vmatpush1.bf16.msra.mxu0 0
        %1251 = vmatprep.subr.bf16.mxu0 0
        %1252 = vmatpush1.bf16.msra.mxu0 0
        %1253 = vmatprep.subr.bf16.mxu0 0
        %1254 = vmatpush1.bf16.msra.mxu0 0
        %1255 = vmatprep.subr.bf16.mxu0 0
        %1256 = vmatpush1.bf16.msra.mxu0 0
        %1257 = vmatprep.subr.bf16.mxu0 0
        %1258 = vmatpush1.bf16.msra.mxu0 0
        %1259 = vmatprep.subr.bf16.mxu0 0
        %1260 = vmatpush1.bf16.msra.mxu0 0
        %1261 = vmatprep.subr.bf16.mxu0 0
        %1262 = vmatpush1.bf16.msra.mxu0 0
        %1263 = vmatprep.subr.bf16.mxu0 0
        %1264 = vmatpush1.bf16.msra.mxu0 0
        %1265 = vmatprep.subr.bf16.mxu0 0
        %1266 = vmatpush1.bf16.msra.mxu0 0
        %1267 = vmatprep.subr.bf16.mxu0 0
        %1268 = vmatpush1.bf16.msra.mxu0 0
        %1269 = vmatprep.subr.bf16.mxu0 0
        %1270 = vmatpush1.bf16.msra.mxu0 0
        %1271 = vmatprep.subr.bf16.mxu0 0
        %1272 = vmatpush1.bf16.msra.mxu0 0
        %1273 = vmatprep.mubr.bf16.mxu0 0
        %1274 = vmatmul.mubr.bf16.gmra.mrb[0].mxu0 %v1239
        %v1275 = vpop.f32.mrb[0].mxu0
        %v1276 = vadd.f32 %v1224, %v1275
        %v1277 = vpop.f32.mrb[0].mxu0
        %v1278 = vpop.f32.mrb[0].mxu0
        %v1279 = vpop.f32.mrb[0].mxu0
        %1280 = vdwg.mxu0
        %v1281 = vadd.f32 %v1276, %v676
        %v1282 = vld [vmem:[#allocation14] sm:$0x1]
        %v1283 = vld [vmem:[#allocation15] sm:$0x1]
        %v1284 = vsel %vm701, %v1281, 0.0
        %1285 = vadd.xlane.f32.xlu0 %v1284
        %v1286 = vpop.xlane.xlu0 %1285
        %v1287 = vrcp.pop 32.0
        %v1288 = vmul.f32 %v1286, %v1287
        %v1289 = vsub.f32 %v1281, %v1288
        %v1290 = vmul.f32 %v1289, %v1289
        %v1291 = vsel %vm701, %v1290, 0.0
        %1292 = vadd.xlane.f32.xlu0 %v1291
        %v1293 = vpop.xlane.xlu0 %1292
        %v1294 = vmul.f32 %v1293, %v1287
        %v1295 = vadd.f32 %v1294, 1e-05
        %v1296 = vrsqrt.pop %v1295
        %v1297 = vmul.f32 %v1289, %v1296
        %v1299 = vlaneseq
        %v1300 = vshrl.u32 %v1299, 7
        %v1301 = vsub.s32 0, %v1300
        %v1302 = vrot.slane %v1282, %v1301
        %v1304 = vmul.f32 %v1297, %v1302
        %v1306 = vlaneseq
        %v1307 = vshrl.u32 %v1306, 7
        %v1308 = vsub.s32 0, %v1307
        %v1309 = vrot.slane %v1283, %v1308
        %v1311 = vadd.f32 %v1304, %v1309
        %v1312 = vpack.c.bf16 %v1311, %v1311
        %v1313 = vld [vmem:[#allocation17] sm:$0xf]
        %v1314 = vld [vmem:[#allocation17 + $0x4] sm:$0xf]
        %v1315 = vld [vmem:[#allocation17 + $0x8] sm:$0xf]
        %v1316 = vld [vmem:[#allocation17 + $0xc] sm:$0xf]
        %v1317 = vld [vmem:[#allocation18] sm:$0x1]
        %v1319 = vlaneseq
        %v1320 = vshrl.u32 %v1319, 7
        %v1321 = vsub.s32 0, %v1320
        %v1322 = vrot.slane %v1317, %v1321
        %v1328 = vunpack.c.l.b16 %v1313
        %v1329 = vunpack.c.l.b16 %v1314
        %v1330 = vunpack.c.l.b16 %v1315
        %v1331 = vunpack.c.l.b16 %v1316
        %v1332 = vpack.c.b16 %v1329, %v1328
        %v1333 = vpack.c.b16 %v1331, %v1330
        %v1337 = vsel %vm701, %v1312, 0
        %1339 = vmatprep.subr.bf16.mxu0 0
        %1340 = vmatpush1.bf16.msra.mxu0 %v1332
        %1341 = vmatprep.subr.bf16.mxu0 0
        %1342 = vmatpush1.bf16.msra.mxu0 %v1333
        %1343 = vmatprep.subr.bf16.mxu0 0
        %1344 = vmatpush1.bf16.msra.mxu0 0
        %1345 = vmatprep.subr.bf16.mxu0 0
        %1346 = vmatpush1.bf16.msra.mxu0 0
        %1347 = vmatprep.subr.bf16.mxu0 0
        %1348 = vmatpush1.bf16.msra.mxu0 0
        %1349 = vmatprep.subr.bf16.mxu0 0
        %1350 = vmatpush1.bf16.msra.mxu0 0
        %1351 = vmatprep.subr.bf16.mxu0 0
        %1352 = vmatpush1.bf16.msra.mxu0 0
        %1353 = vmatprep.subr.bf16.mxu0 0
        %1354 = vmatpush1.bf16.msra.mxu0 0
        %1355 = vmatprep.subr.bf16.mxu0 0
        %1356 = vmatpush1.bf16.msra.mxu0 0
        %1357 = vmatprep.subr.bf16.mxu0 0
        %1358 = vmatpush1.bf16.msra.mxu0 0
        %1359 = vmatprep.subr.bf16.mxu0 0
        %1360 = vmatpush1.bf16.msra.mxu0 0
        %1361 = vmatprep.subr.bf16.mxu0 0
        %1362 = vmatpush1.bf16.msra.mxu0 0
        %1363 = vmatprep.subr.bf16.mxu0 0
        %1364 = vmatpush1.bf16.msra.mxu0 0
        %1365 = vmatprep.subr.bf16.mxu0 0
        %1366 = vmatpush1.bf16.msra.mxu0 0
        %1367 = vmatprep.subr.bf16.mxu0 0
        %1368 = vmatpush1.bf16.msra.mxu0 0
        %1369 = vmatprep.subr.bf16.mxu0 0
        %1370 = vmatpush1.bf16.msra.mxu0 0
        %1371 = vmatprep.mubr.bf16.mxu0 0
        %1372 = vmatmul.mubr.bf16.gmra.mrb[0].mxu0 %v1337
        %v1373 = vpop.f32.mrb[0].mxu0
        %v1374 = vadd.f32 %v1322, %v1373
        %v1375 = vpop.f32.mrb[0].mxu0
        %v1376 = vpop.f32.mrb[0].mxu0
        %v1377 = vpop.f32.mrb[0].mxu0
        %1378 = vdwg.mxu0
        %v1379 = vmul.f32 %v1374, 0.5
        %v1380 = vmul.f32 %v1374, 0.044715
        %v1381 = vmul.f32 %v1380, %v1374
        %v1382 = vmul.f32 %v1381, %v1374
        %v1383 = vadd.f32 %v1374, %v1382
        %v1384 = vmul.f32 %v1383, 0.7978846
        %v1385 = vtanh.pop %v1384
        %v1386 = vadd.f32 %v1385, 1.0
        %v1387 = vmul.f32 %v1379, %v1386
        %v1388 = vpack.c.bf16 %v1387, %v1387
        %v1389 = vld [vmem:[#allocation20] sm:$0xf]
        %v1390 = vld [vmem:[#allocation20 + $0x4] sm:$0xf]
        %v1391 = vld [vmem:[#allocation20 + $0x8] sm:$0xf]
        %v1392 = vld [vmem:[#allocation20 + $0xc] sm:$0xf]
        %v1393 = vld [vmem:[#allocation20 + $0x10] sm:$0xf]
        %v1394 = vld [vmem:[#allocation20 + $0x14] sm:$0xf]
        %v1395 = vld [vmem:[#allocation20 + $0x18] sm:$0xf]
        %v1396 = vld [vmem:[#allocation20 + $0x1c] sm:$0xf]
        %v1397 = vld [vmem:[#allocation20 + $0x20] sm:$0xf]
        %v1398 = vld [vmem:[#allocation20 + $0x24] sm:$0xf]
        %v1399 = vld [vmem:[#allocation20 + $0x28] sm:$0xf]
        %v1400 = vld [vmem:[#allocation20 + $0x2c] sm:$0xf]
        %v1401 = vld [vmem:[#allocation20 + $0x30] sm:$0xf]
        %v1402 = vld [vmem:[#allocation20 + $0x34] sm:$0xf]
        %v1403 = vld [vmem:[#allocation20 + $0x38] sm:$0xf]
        %v1404 = vld [vmem:[#allocation20 + $0x3c] sm:$0xf]
        %v1405 = vld [vmem:[#allocation21] sm:$0x1]
        %v1407 = vlaneseq
        %v1408 = vshrl.u32 %v1407, 7
        %v1409 = vsub.s32 0, %v1408
        %v1410 = vrot.slane %v1405, %v1409
        %v1428 = vunpack.c.l.b16 %v1389
        %v1429 = vunpack.c.l.b16 %v1390
        %v1430 = vunpack.c.l.b16 %v1391
        %v1431 = vunpack.c.l.b16 %v1392
        %v1432 = vunpack.c.l.b16 %v1393
        %v1433 = vunpack.c.l.b16 %v1394
        %v1434 = vunpack.c.l.b16 %v1395
        %v1435 = vunpack.c.l.b16 %v1396
        %v1436 = vunpack.c.l.b16 %v1397
        %v1437 = vunpack.c.l.b16 %v1398
        %v1438 = vunpack.c.l.b16 %v1399
        %v1439 = vunpack.c.l.b16 %v1400
        %v1440 = vunpack.c.l.b16 %v1401
        %v1441 = vunpack.c.l.b16 %v1402
        %v1442 = vunpack.c.l.b16 %v1403
        %v1443 = vunpack.c.l.b16 %v1404
        %v1444 = vpack.c.b16 %v1429, %v1428
        %v1445 = vpack.c.b16 %v1431, %v1430
        %v1446 = vpack.c.b16 %v1433, %v1432
        %v1447 = vpack.c.b16 %v1435, %v1434
        %v1448 = vpack.c.b16 %v1437, %v1436
        %v1449 = vpack.c.b16 %v1439, %v1438
        %v1450 = vpack.c.b16 %v1441, %v1440
        %v1451 = vpack.c.b16 %v1443, %v1442
        %1460 = vmatprep.subr.bf16.mxu0 0
        %1461 = vmatpush1.bf16.msra.mxu0 %v1444
        %1462 = vmatprep.subr.bf16.mxu0 0
        %1463 = vmatpush1.bf16.msra.mxu0 %v1445
        %1464 = vmatprep.subr.bf16.mxu0 0
        %1465 = vmatpush1.bf16.msra.mxu0 %v1446
        %1466 = vmatprep.subr.bf16.mxu0 0
        %1467 = vmatpush1.bf16.msra.mxu0 %v1447
        %1468 = vmatprep.subr.bf16.mxu0 0
        %1469 = vmatpush1.bf16.msra.mxu0 %v1448
        %1470 = vmatprep.subr.bf16.mxu0 0
        %1471 = vmatpush1.bf16.msra.mxu0 %v1449
        %1472 = vmatprep.subr.bf16.mxu0 0
        %1473 = vmatpush1.bf16.msra.mxu0 %v1450
        %1474 = vmatprep.subr.bf16.mxu0 0
        %1475 = vmatpush1.bf16.msra.mxu0 %v1451
        %1476 = vmatprep.subr.bf16.mxu0 0
        %1477 = vmatpush1.bf16.msra.mxu0 0
        %1478 = vmatprep.subr.bf16.mxu0 0
        %1479 = vmatpush1.bf16.msra.mxu0 0
        %1480 = vmatprep.subr.bf16.mxu0 0
        %1481 = vmatpush1.bf16.msra.mxu0 0
        %1482 = vmatprep.subr.bf16.mxu0 0
        %1483 = vmatpush1.bf16.msra.mxu0 0
        %1484 = vmatprep.subr.bf16.mxu0 0
        %1485 = vmatpush1.bf16.msra.mxu0 0
        %1486 = vmatprep.subr.bf16.mxu0 0
        %1487 = vmatpush1.bf16.msra.mxu0 0
        %1488 = vmatprep.subr.bf16.mxu0 0
        %1489 = vmatpush1.bf16.msra.mxu0 0
        %1490 = vmatprep.subr.bf16.mxu0 0
        %1491 = vmatpush1.bf16.msra.mxu0 0
        %1492 = vmatprep.mubr.bf16.mxu0 0
        %1493 = vmatmul.mubr.bf16.gmra.mrb[0].mxu0 %v1388
        %v1494 = vpop.f32.mrb[0].mxu0
        %v1495 = vadd.f32 %v1410, %v1494
        %v1496 = vpop.f32.mrb[0].mxu0
        %v1497 = vpop.f32.mrb[0].mxu0
        %v1498 = vpop.f32.mrb[0].mxu0
        %1499 = vdwg.mxu0
        %v1500 = vadd.f32 %v1495, %v1311
        %v1501 = vld [vmem:[#allocation23] sm:$0x1]
        %v1502 = vld [vmem:[#allocation24] sm:$0x1]
        %v1503 = vsel %vm701, %v1500, 0.0
        %1504 = vadd.xlane.f32.xlu0 %v1503
        %v1505 = vpop.xlane.xlu0 %1504
        %v1506 = vmul.f32 %v1505, %v1287
        %v1507 = vsub.f32 %v1500, %v1506
        %v1508 = vmul.f32 %v1507, %v1507
        %v1509 = vsel %vm701, %v1508, 0.0
        %1510 = vadd.xlane.f32.xlu0 %v1509
        %v1511 = vpop.xlane.xlu0 %1510
        %v1512 = vmul.f32 %v1511, %v1287
        %v1513 = vadd.f32 %v1512, 1e-05
        %v1514 = vrsqrt.pop %v1513
        %v1515 = vmul.f32 %v1507, %v1514
        %v1517 = vlaneseq
        %v1518 = vshrl.u32 %v1517, 7
        %v1519 = vsub.s32 0, %v1518
        %v1520 = vrot.slane %v1501, %v1519
        %v1522 = vmul.f32 %v1515, %v1520
        %v1524 = vlaneseq
        %v1525 = vshrl.u32 %v1524, 7
        %v1526 = vsub.s32 0, %v1525
        %v1527 = vrot.slane %v1502, %v1526
        %v1529 = vadd.f32 %v1522, %v1527
        %1530 = vst.msk [vmem:[%s674] sm:$0xff] %vm701, %v1529
        %s1531 = sand.u32 %s352, 1
        %s1532 = scalar_lea.sflag [#allocation5], %s1531
        %s1533 = sand.u32 %s352, 1
        %s1534 = smul.addr %s1533, 8
        %s1535 = scalar_lea.vmem [#allocation26], %s1534
        // Predicated region
        $region133: #{tpu_custom_call.1} parent=75 // pred_check
          %p1536 = pneg %p362
        $region134: #{tpu_custom_call.1} parent=75 // pred_check_branch
          %1538 = sbr.rel (%p1536) target = $region136
        $region135: #{tpu_custom_call.1} parent=75 // pred_region
          %s1540 = ssub.s32 128, 128
          %1541 = vsyncadd %s1532, %s1540
          %s1542 = smul.addr %s40, 128
          %s1543 = scalar_lea.hbm %s14, %s1542
          %s1545 = sshll.u32 %s1535, 4
          %s1546 = int_to_ptr.vmem [resolvable:$true] %s1545
          %1548 = dma.vmem_to_hbm [thread:$0]  %s1546, 128, %s1543, %s1532
        $region136: #{tpu_custom_call.1} parent=75 // pred_fallthru
          _
      $region76: #{tpu_custom_call.1} parent=5 // pred_fallthru
        _
      %p1549 = scmp.le.s32.totalorder 2, %s35
      // Predicated region
      $region137: #{tpu_custom_call.1} parent=5 // pred_check
        %p1550 = pneg %p1549
      $region138: #{tpu_custom_call.1} parent=5 // pred_check_branch
        %1552 = sbr.rel (%p1550) target = $region140
      $region139: #{tpu_custom_call.1} parent=5 // pred_region
        %s1553 = ssub.s32 %s35, 2
        // Predicated region
        $region141: #{tpu_custom_call.1} parent=139 // pred_check
          %p1554 = pneg %p368
        $region142: #{tpu_custom_call.1} parent=139 // pred_check_branch
          %1556 = sbr.rel (%p1554) target = $region144
        $region143: #{tpu_custom_call.1} parent=139 // pred_region
          %s1557 = sand.u32 %s353, 1
          %s1558 = scalar_lea.sflag [#allocation5], %s1557
          %s1559 = sand.u32 %s353, 1
          %s1560 = smul.addr %s1559, 8
          %s1561 = scalar_lea.vmem [#allocation26], %s1560
          %1562 = dma.done %s1558, 128
        $region144: #{tpu_custom_call.1} parent=139 // pred_fallthru
          _
      $region140: #{tpu_custom_call.1} parent=5 // pred_fallthru
        _
    $region6: #{tpu_custom_call.1} parent=1 // loop_footer
      %s39 = sadd.s32 1, %s35
    $region7: #{tpu_custom_call.1} parent=1 // loop_footer_branch
      %34 = sbr.rel target = $region3
    $region8: #{tpu_custom_call.1} parent=1 // loop_exit
      _
    %1563 = vsyncpa [#allocation4], 1
    %s1564 = scalar_lea.sflag [#allocation4], 1
    %1565 = vsyncpa %s1564, 1
    %1566 = vsyncpa [#allocation7], 1
    %s1567 = scalar_lea.sflag [#allocation7], 1
    %1568 = vsyncpa %s1567, 1
    %1569 = vsyncpa [#allocation10], 1
    %1570 = vsyncpa [#allocation13], 1
    %1571 = vsyncpa [#allocation16], 1
    %1572 = vsyncpa [#allocation19], 1
    %1573 = vsyncpa [#allocation22], 1
    %1574 = vsyncpa [#allocation25], 1
    %1575 = vsyncpa [#allocation5], 1
    %s1576 = scalar_lea.sflag [#allocation5], 1
    %1577 = vsyncpa %s1576, 1

</llo_original>
